<compile_context>
chip_gen: v5e
topology: v5e:2x2
jax: 0.10.0
libtpu: 0.0.40
codegen_flags: <defaults>
</compile_context>

<pallas_src>
import jax
import jax.numpy as jnp
from jax import lax
from jax.experimental import pallas as pl
from jax.experimental.pallas import tpu as pltpu

# ---- "params" module constants (small synthetic config) ----
N_LAYERS = 2            # params.n_layers
HIDDEN_UNITS = 32       # params.hidden_units
EMBEDDING_QA_SIZE = 32  # params.embedding_qa_size
L_DICT_QA = 64          # vocab size
SEQ_LEN = 8             # number of encoder hidden states
LANES = 128             # lane-dense slab width
SUBLANES = 8

_HIGHEST = lax.Precision.HIGHEST


def _align8(n):
    return (n + 7) // 8 * 8


# --------------------------------------------------------------------------
# Weight packing: one contiguous f32 (rows, 128) slab, every entry 8-row
# aligned.  GRU gate weights/biases are laid out GATE-MAJOR (rows stacked
# r, z, n) so each per-gate matmul result lands at lanes 0:H in the kernel.
# Done ONCE outside the decode call.
# --------------------------------------------------------------------------
def pack_weights(params, L, H, E, V):
    entries = [("attn_wT", params["attn_wT"].astype(jnp.float32))]       # (L*H, H)
    for l in range(L):
        in_dim = (H + E) if l == 0 else H
        w_ih = params[f"w_ih{l}T"].astype(jnp.float32)                   # (in_dim, 3H) cols [r|z|n]
        w_hh = params[f"w_hh{l}T"].astype(jnp.float32)                   # (H, 3H)
        entries.append((f"w_ih{l}", jnp.concatenate(
            [w_ih[:, g * H:(g + 1) * H] for g in range(3)], axis=0)))    # (3*in_dim, H)
        entries.append((f"w_hh{l}", jnp.concatenate(
            [w_hh[:, g * H:(g + 1) * H] for g in range(3)], axis=0)))    # (3*H, H)
        b_ih = params[f"b_ih{l}"].astype(jnp.float32).reshape(3, H)
        b_hh = params[f"b_hh{l}"].astype(jnp.float32).reshape(3, H)
        for g in range(3):
            entries.append((f"b_ih{l}_{g}", b_ih[g:g + 1, :]))           # (1, H)
            entries.append((f"b_hh{l}_{g}", b_hh[g:g + 1, :]))           # (1, H)
    entries.append(("proj_wT", params["proj_wT"].astype(jnp.float32)))   # (H, V)
    entries.append(("proj_b", params["proj_b"].astype(jnp.float32)))     # (1, V)

    offsets, row = {}, 0
    for name, arr in entries:
        r, c = arr.shape
        offsets[name] = (row, r, c)
        row = _align8(row + r)
    slab = jnp.zeros((row, LANES), jnp.float32)
    for name, arr in entries:
        r0, r, c = offsets[name]
        slab = slab.at[r0:r0 + r, 0:c].set(arr)
    return slab, offsets


# --------------------------------------------------------------------------
# Fused multi-step decode kernel.  grid=(T,): weights / embedding / encoder
# hiddens resident in VMEM (constant index_maps), hidden carried in scratch.
# --------------------------------------------------------------------------
def make_decode_kernel(L, H, E, S, V, offs):
    a0 = offs["attn_wT"][0]
    p0 = offs["proj_wT"][0]
    pb0 = offs["proj_b"][0]

    def dot(a, b):
        return jnp.dot(a, b, preferred_element_type=jnp.float32, precision=_HIGHEST)

    def kernel(tok_ref, w_ref, emb_tbl_ref, enc_ref, h0_ref,
               logits_ref, hid_out_ref, hid):
        t = pl.program_id(0)

        # ---- step 0: load the initial hidden state into the VMEM carry ----
        @pl.when(t == 0)
        def _():
            hid[...] = h0_ref[...]          # zero-padded (8, 128)

        enc = enc_ref[...]                  # (S, H)

        # ---- attention: ei = flat(hidden) @ attn_wT, done as a per-layer sum
        #      (avoids a sublane->lane reshape of the carried hidden rows) ----
        ei = dot(hid[0:1, 0:H], w_ref[a0:a0 + H, 0:H])
        for l in range(1, L):
            ei = ei + dot(hid[l:l + 1, 0:H], w_ref[a0 + l * H:a0 + (l + 1) * H, 0:H])

        # scores over encoder positions; contract on H directly (no enc.T)
        scores = lax.dot_general(ei, enc, (((1,), (1,)), ((), ())),
                                 preferred_element_type=jnp.float32,
                                 precision=_HIGHEST)                       # (1, S)
        scores = scores - jnp.max(scores, axis=1, keepdims=True)
        p = jnp.exp(scores)
        denom = jnp.sum(p, axis=1, keepdims=True)
        # exact reciprocal: approx=True compounded error into the new hidden
        ci = dot(p, enc) / denom                                           # (1, H)

        # ---- embedding lookup in-kernel: one-hot x resident table (MXU) ----
        tok = tok_ref[t]                                                   # SMEM scalar
        onehot = (lax.broadcasted_iota(jnp.int32, (1, V), 1) == tok).astype(jnp.float32)
        emb = dot(onehot, emb_tbl_ref[...])                                # (1, E)

        # ---- stacked GRU (torch gate order r, z, n), gate-major weights ----
        x = ci
        for l in range(L):
            in_dim = (H + E) if l == 0 else H
            wi0 = offs[f"w_ih{l}"][0]
            wh0 = offs[f"w_hh{l}"][0]
            h_prev = hid[l:l + 1, 0:H]                                     # (1, H)

            def gi(g):
                base = wi0 + g * in_dim
                b0 = offs[f"b_ih{l}_{g}"][0]
                bias = w_ref[b0:b0 + 1, 0:H]
                if l == 0:
                    # layer-0 input is concat([ci, emb]); split the gate's
                    # weight rows instead of materializing the concat.
                    return (dot(ci, w_ref[base:base + H, 0:H])
                            + dot(emb, w_ref[base + H:base + in_dim, 0:H])
                            + bias)
                return dot(x, w_ref[base:base + in_dim, 0:H]) + bias

            def gh(g):
                base = wh0 + g * H
                b0 = offs[f"b_hh{l}_{g}"][0]
                return dot(h_prev, w_ref[base:base + H, 0:H]) + w_ref[b0:b0 + 1, 0:H]

            r = jax.nn.sigmoid(gi(0) + gh(0))
            z = jax.nn.sigmoid(gi(1) + gh(1))
            n = jnp.tanh(gi(2) + r * gh(2))
            h_new = (1.0 - z) * n + z * h_prev
            hid[l:l + 1, 0:H] = h_new
            x = h_new

        # ---- output projection: lane-dense (weights/bias padded to 128) ----
        logits = dot(x, w_ref[p0:p0 + H, :]) + w_ref[pb0:pb0 + 1, :]       # (1, 128)
        logits_ref[0, :, :] = jnp.broadcast_to(logits, (SUBLANES, LANES))  # full-lane store

        # copy the carried hidden into the resident hidden-output block
        hid_out_ref[...] = hid[...]

    return kernel


# --------------------------------------------------------------------------
# Wrappers
# --------------------------------------------------------------------------
def attn_decoder_decode(tokens, hidden, encoder_hiddens, w_slab, w_offs, embedding,
                        L=N_LAYERS, H=HIDDEN_UNITS, E=EMBEDDING_QA_SIZE,
                        S=SEQ_LEN, V=L_DICT_QA):
    """Fused teacher-forced decode: one pallas_call, grid over decode steps.

    tokens: (T,) int32, hidden: (L, 1, H), encoder_hiddens: (1, S, H).
    Returns (per-step logits (T, V), final hidden (L, 1, H)).  T == 1 is
    exactly the torch module's single-step forward."""
    T = int(tokens.shape[0])
    enc2d = jnp.squeeze(encoder_hiddens, 0).astype(jnp.float32)            # (S, H)
    h0 = jnp.zeros((SUBLANES, LANES), jnp.float32)
    h0 = h0.at[0:L, 0:H].set(hidden.reshape(L, H).astype(jnp.float32))     # once per decode

    R = int(w_slab.shape[0])
    kernel = make_decode_kernel(L, H, E, S, V, w_offs)

    grid_spec = pltpu.PrefetchScalarGridSpec(
        num_scalar_prefetch=1,                       # tokens -> SMEM
        grid=(T,),
        in_specs=[
            pl.BlockSpec((R, LANES), lambda t, tok: (0, 0)),            # weight slab: resident
            pl.BlockSpec((V, E), lambda t, tok: (0, 0)),                # embedding table: resident
            pl.BlockSpec((S, H), lambda t, tok: (0, 0)),                # encoder hiddens: resident
            pl.BlockSpec((SUBLANES, LANES), lambda t, tok: (0, 0)),     # initial hidden
        ],
        out_specs=[
            pl.BlockSpec((1, SUBLANES, LANES), lambda t, tok: (t, 0, 0)),  # per-step logits
            pl.BlockSpec((SUBLANES, LANES), lambda t, tok: (0, 0)),        # final hidden
        ],
        scratch_shapes=[pltpu.VMEM((SUBLANES, LANES), jnp.float32)],       # hidden carry
    )

    logits_slab, hid_slab = pl.pallas_call(
        kernel,
        out_shape=(jax.ShapeDtypeStruct((T, SUBLANES, LANES), jnp.float32),
                   jax.ShapeDtypeStruct((SUBLANES, LANES), jnp.float32)),
        grid_spec=grid_spec,
        compiler_params=pltpu.CompilerParams(dimension_semantics=("arbitrary",)),
    )(tokens.astype(jnp.int32), w_slab, embedding.astype(jnp.float32), enc2d, h0)

    logits = logits_slab[:, 0, 0:V]                                        # (T, V)
    final_hidden = hid_slab[0:L, 0:H].reshape(L, 1, H)
    return logits, final_hidden


def attn_decoder_forward(token, hidden, encoder_hiddens, w_slab, w_offs, embedding,
                         **kw):
    """Single-step module forward (torch semantics): token (1,1) int32.
    Returns output (1, 1, V) and new hidden (L, 1, H)."""
    logits, new_hidden = attn_decoder_decode(token.reshape(1), hidden, encoder_hiddens,
                                             w_slab, w_offs, embedding, **kw)
    return logits.reshape(1, 1, -1), new_hidden


# --------------------------------------------------------------------------
# Params / reference
# --------------------------------------------------------------------------
def init_params(key, L, H, E, S, V):
    ks = jax.random.split(key, 4 + 4 * L)
    p = {
        "embedding": jax.random.normal(ks[0], (V, E), jnp.float32) * 0.1,
        "attn_wT": jax.random.normal(ks[1], (L * H, H), jnp.float32) * 0.1,
        "proj_wT": jax.random.normal(ks[2], (H, V), jnp.float32) * 0.1,
        "proj_b": jax.random.normal(ks[3], (1, V), jnp.float32) * 0.1,
    }
    for l in range(L):
        in_dim = (H + E) if l == 0 else H
        k0, k1, k2, k3 = jax.random.split(ks[4 + l], 4)
        p[f"w_ih{l}T"] = jax.random.normal(k0, (in_dim, 3 * H), jnp.float32) * 0.1
        p[f"w_hh{l}T"] = jax.random.normal(k1, (H, 3 * H), jnp.float32) * 0.1
        p[f"b_ih{l}"] = jax.random.normal(k2, (1, 3 * H), jnp.float32) * 0.1
        p[f"b_hh{l}"] = jax.random.normal(k3, (1, 3 * H), jnp.float32) * 0.1
    return p


def _rdot(a, b):
    return jnp.dot(a, b, precision=_HIGHEST)


def reference_forward(token_id, hidden, encoder_hiddens, params,
                      L=N_LAYERS, H=HIDDEN_UNITS, E=EMBEDDING_QA_SIZE,
                      S=SEQ_LEN, V=L_DICT_QA):
    """Pure-JAX mirror of the torch forward (eval mode), HIGHEST precision."""
    enc = jnp.squeeze(encoder_hiddens, 0)                                  # (S, H)
    h_flat = hidden.transpose(1, 0, 2).reshape(1, L * H)
    ei = _rdot(h_flat, params["attn_wT"])
    eij = jax.nn.softmax(_rdot(ei, enc.T), axis=1)
    ci = _rdot(eij, enc)
    emb = params["embedding"][token_id].reshape(1, E)
    x = jnp.concatenate([ci, emb], axis=1)
    new_h = []
    for l in range(L):
        h_prev = hidden[l, 0:1, :]
        gi = _rdot(x, params[f"w_ih{l}T"]) + params[f"b_ih{l}"]
        gh = _rdot(h_prev, params[f"w_hh{l}T"]) + params[f"b_hh{l}"]
        r = jax.nn.sigmoid(gi[:, :H] + gh[:, :H])
        z = jax.nn.sigmoid(gi[:, H:2 * H] + gh[:, H:2 * H])
        n = jnp.tanh(gi[:, 2 * H:] + r * gh[:, 2 * H:])
        h_new = (1.0 - z) * n + z * h_prev
        new_h.append(h_new)
        x = h_new
    out = _rdot(new_h[-1], params["proj_wT"]) + params["proj_b"]
    return out.reshape(1, 1, V), jnp.stack(new_h, 0).reshape(L, 1, H)


def reference_decode(tokens, hidden, encoder_hiddens, params, **kw):
    outs, h = [], hidden
    for t in range(int(tokens.shape[0])):
        out, h = reference_forward(tokens[t], h, encoder_hiddens, params, **kw)
        outs.append(out.reshape(1, -1))
    return jnp.concatenate(outs, axis=0), h


# --------------------------------------------------------------------------
if __name__ == "__main__":
    key = jax.random.PRNGKey(0)
    k_p, k_h, k_e, k_t = jax.random.split(key, 4)

    params = init_params(k_p, N_LAYERS, HIDDEN_UNITS, EMBEDDING_QA_SIZE, SEQ_LEN, L_DICT_QA)
    # Pack weights once (not per token): one resident slab + static offsets.
    w_slab, w_offs = pack_weights(params, N_LAYERS, HIDDEN_UNITS, EMBEDDING_QA_SIZE, L_DICT_QA)

    hidden = jax.random.normal(k_h, (N_LAYERS, 1, HIDDEN_UNITS), jnp.float32)          # (L, 1, H)
    encoder_hiddens = jax.random.normal(k_e, (1, SEQ_LEN, HIDDEN_UNITS), jnp.float32)  # (1, S, H)

    # ---- single-step forward (exact module semantics) ----
    token = jnp.array([[3]], dtype=jnp.int32)                                          # (1, 1)
    out, new_hidden = attn_decoder_forward(token, hidden, encoder_hiddens,
                                           w_slab, w_offs, params["embedding"])
    jax.block_until_ready((out, new_hidden))

    ref_out, ref_hidden = reference_forward(token.reshape(()), hidden, encoder_hiddens, params)
    assert out.shape == (1, 1, L_DICT_QA) and new_hidden.shape == (N_LAYERS, 1, HIDDEN_UNITS)
    assert jnp.allclose(out, ref_out, atol=1e-3, rtol=1e-3)
    assert jnp.allclose(new_hidden, ref_hidden, atol=1e-3, rtol=1e-3)

    # ---- fused multi-step decode: one pallas_call, weights resident, hidden
    #      carried in VMEM scratch across the step grid ----
    T = 6
    tokens = jax.random.randint(k_t, (T,), 0, L_DICT_QA, dtype=jnp.int32)
    logits, final_hidden = attn_decoder_decode(tokens, hidden, encoder_hiddens,
                                               w_slab, w_offs, params["embedding"])
    jax.block_until_ready((logits, final_hidden))

    ref_logits, ref_final = reference_decode(tokens, hidden, encoder_hiddens, params)
    assert logits.shape == (T, L_DICT_QA) and final_hidden.shape == (N_LAYERS, 1, HIDDEN_UNITS)
    assert jnp.allclose(logits, ref_logits, atol=1e-3, rtol=1e-3)
    assert jnp.allclose(final_hidden, ref_final, atol=1e-3, rtol=1e-3)

    print("KERNEL_OK")
</pallas_src>

<mosaic_0001>
module attributes {stable_mosaic.version = 11 : i64} {
  func.func @kernel(%arg0: i32, %arg1: memref<1xi32, #tpu.memory_space<smem>>, %arg2: memref<680x128xf32, #tpu.memory_space<vmem>>, %arg3: memref<64x32xf32, #tpu.memory_space<vmem>>, %arg4: memref<8x32xf32, #tpu.memory_space<vmem>>, %arg5: memref<8x128xf32, #tpu.memory_space<vmem>>, %arg6: memref<1x8x128xf32, #tpu.memory_space<vmem>>, %arg7: memref<8x128xf32, #tpu.memory_space<vmem>>, %arg8: memref<8x128xf32, #tpu.memory_space<vmem>>) attributes {dimension_semantics = [#tpu.dimension_semantics<arbitrary>], iteration_bounds = array<i64: 1>, scalar_prefetch = 1 : i64, scratch_operands = 1 : i64, tpu.core_type = #tpu.core_type<tc>, window_params = [{pipeline_mode = #tpu.pipeline_mode<synchronous>, transform_indices = @transform_0, window_bounds = array<i64: 680, 128>}, {pipeline_mode = #tpu.pipeline_mode<synchronous>, transform_indices = @transform_1, window_bounds = array<i64: 64, 32>}, {pipeline_mode = #tpu.pipeline_mode<synchronous>, transform_indices = @transform_2, window_bounds = array<i64: 8, 32>}, {pipeline_mode = #tpu.pipeline_mode<synchronous>, transform_indices = @transform_3, window_bounds = array<i64: 8, 128>}, {transform_indices = @transform_4, window_bounds = array<i64: 1, 8, 128>}, {pipeline_mode = #tpu.pipeline_mode<synchronous>, transform_indices = @transform_5, window_bounds = array<i64: 8, 128>}]} {
    %c0_i32 = arith.constant 0 : i32
    %0 = arith.cmpi eq, %arg0, %c0_i32 : i32
    %1 = arith.extui %0 : i1 to i32
    %c0_i32_0 = arith.constant 0 : i32
    %2 = arith.cmpi ne, %1, %c0_i32_0 : i32
    scf.if %2 {
      %c0_82 = arith.constant 0 : index
      %c0_83 = arith.constant 0 : index
      %143 = vector.load %arg5[%c0_82, %c0_83] : memref<8x128xf32, #tpu.memory_space<vmem>>, vector<8x128xf32>
      %c0_84 = arith.constant 0 : index
      %c0_85 = arith.constant 0 : index
      %144 = vector.load %arg8[%c0_84, %c0_85] : memref<8x128xf32, #tpu.memory_space<vmem>>, vector<8x128xf32>
      tpu.vector_store %arg8[%c0_84, %c0_85], %143 {strides = array<i32>} : memref<8x128xf32, #tpu.memory_space<vmem>>, vector<8x128xf32>,
    } else {
    }
    %c0 = arith.constant 0 : index
    %c0_1 = arith.constant 0 : index
    %3 = vector.load %arg4[%c0, %c0_1] : memref<8x32xf32, #tpu.memory_space<vmem>>, vector<8x32xf32>
    %c0_2 = arith.constant 0 : index
    %c0_3 = arith.constant 0 : index
    %4 = vector.load %arg8[%c0_2, %c0_3] : memref<8x128xf32, #tpu.memory_space<vmem>>, vector<1x32xf32>
    %c0_4 = arith.constant 0 : index
    %c0_5 = arith.constant 0 : index
    %5 = vector.load %arg2[%c0_4, %c0_5] : memref<680x128xf32, #tpu.memory_space<vmem>>, vector<32x32xf32>
    %cst = arith.constant dense<0.000000e+00> : vector<1x32xf32>
    %6 = tpu.matmul %4, %5, %cst {dimension_numbers = #tpu.dot_dimension_numbers<[1], [0], [0], [1], [0, 0, 1, 1], [], []>, precision = #tpu.contract_precision<fp32>} : vector<1x32xf32>, vector<32x32xf32>, vector<1x32xf32> -> vector<1x32xf32>
    %c1 = arith.constant 1 : index
    %c0_6 = arith.constant 0 : index
    %7 = vector.load %arg8[%c1, %c0_6] : memref<8x128xf32, #tpu.memory_space<vmem>>, vector<1x32xf32>
    %c32 = arith.constant 32 : index
    %c0_7 = arith.constant 0 : index
    %8 = vector.load %arg2[%c32, %c0_7] : memref<680x128xf32, #tpu.memory_space<vmem>>, vector<32x32xf32>
    %cst_8 = arith.constant dense<0.000000e+00> : vector<1x32xf32>
    %9 = tpu.matmul %7, %8, %cst_8 {dimension_numbers = #tpu.dot_dimension_numbers<[1], [0], [0], [1], [0, 0, 1, 1], [], []>, precision = #tpu.contract_precision<fp32>} : vector<1x32xf32>, vector<32x32xf32>, vector<1x32xf32> -> vector<1x32xf32>
    %10 = arith.addf %6, %9 : vector<1x32xf32>
    %cst_9 = arith.constant dense<0.000000e+00> : vector<1x8xf32>
    %11 = tpu.matmul %10, %3, %cst_9 {dimension_numbers = #tpu.dot_dimension_numbers<[1], [1], [0], [0], [0, 0, 1, 0], [], []>, precision = #tpu.contract_precision<fp32>} : vector<1x32xf32>, vector<8x32xf32>, vector<1x8xf32> -> vector<1x8xf32>
    %cst_10 = arith.constant dense<0xFF800000> : vector<1xf32>
    %12 = vector.multi_reduction <maximumf>, %11, %cst_10 [1] : vector<1x8xf32> to vector<1xf32>
    %13 = vector.shape_cast %12 : vector<1xf32> to vector<1x1xf32>
    %14 = vector.broadcast %13 : vector<1x1xf32> to vector<1x8xf32>
    %15 = arith.subf %11, %14 : vector<1x8xf32>
    %16 = math.exp %15 : vector<1x8xf32>
    %cst_11 = arith.constant dense<0.000000e+00> : vector<1xf32>
    %17 = vector.multi_reduction <add>, %16, %cst_11 [1] : vector<1x8xf32> to vector<1xf32>
    %18 = vector.shape_cast %17 : vector<1xf32> to vector<1x1xf32>
    %cst_12 = arith.constant dense<0.000000e+00> : vector<1x32xf32>
    %19 = tpu.matmul %16, %3, %cst_12 {dimension_numbers = #tpu.dot_dimension_numbers<[1], [0], [0], [1], [0, 0, 1, 1], [], []>, precision = #tpu.contract_precision<fp32>} : vector<1x8xf32>, vector<8x32xf32>, vector<1x32xf32> -> vector<1x32xf32>
    %20 = vector.broadcast %18 : vector<1x1xf32> to vector<1x32xf32>
    %21 = arith.divf %19, %20 : vector<1x32xf32>
    %22 = arith.index_cast %arg0 : i32 to index
    %23 = memref.load %arg1[%22] : memref<1xi32, #tpu.memory_space<smem>>
    %24 = tpu.iota {dimensions = array<i32: 1>} : vector<1x64xi32>
    %25 = vector.broadcast %23 : i32 to vector<1x64xi32>
    %26 = arith.cmpi eq, %24, %25 : vector<1x64xi32>
    %27 = arith.extui %26 : vector<1x64xi1> to vector<1x64xi32>
    %28 = arith.sitofp %27 : vector<1x64xi32> to vector<1x64xf32>
    %c0_13 = arith.constant 0 : index
    %c0_14 = arith.constant 0 : index
    %29 = vector.load %arg3[%c0_13, %c0_14] : memref<64x32xf32, #tpu.memory_space<vmem>>, vector<64x32xf32>
    %cst_15 = arith.constant dense<0.000000e+00> : vector<1x32xf32>
    %30 = tpu.matmul %28, %29, %cst_15 {dimension_numbers = #tpu.dot_dimension_numbers<[1], [0], [0], [1], [0, 0, 1, 1], [], []>, precision = #tpu.contract_precision<fp32>} : vector<1x64xf32>, vector<64x32xf32>, vector<1x32xf32> -> vector<1x32xf32>
    %c0_16 = arith.constant 0 : index
    %c0_17 = arith.constant 0 : index
    %31 = vector.load %arg8[%c0_16, %c0_17] : memref<8x128xf32, #tpu.memory_space<vmem>>, vector<1x32xf32>
    %c352 = arith.constant 352 : index
    %c0_18 = arith.constant 0 : index
    %32 = vector.load %arg2[%c352, %c0_18] : memref<680x128xf32, #tpu.memory_space<vmem>>, vector<1x32xf32>
    %c64 = arith.constant 64 : index
    %c0_19 = arith.constant 0 : index
    %33 = vector.load %arg2[%c64, %c0_19] : memref<680x128xf32, #tpu.memory_space<vmem>>, vector<32x32xf32>
    %cst_20 = arith.constant dense<0.000000e+00> : vector<1x32xf32>
    %34 = tpu.matmul %21, %33, %cst_20 {dimension_numbers = #tpu.dot_dimension_numbers<[1], [0], [0], [1], [0, 0, 1, 1], [], []>, precision = #tpu.contract_precision<fp32>} : vector<1x32xf32>, vector<32x32xf32>, vector<1x32xf32> -> vector<1x32xf32>
    %c96 = arith.constant 96 : index
    %c0_21 = arith.constant 0 : index
    %35 = vector.load %arg2[%c96, %c0_21] : memref<680x128xf32, #tpu.memory_space<vmem>>, vector<32x32xf32>
    %cst_22 = arith.constant dense<0.000000e+00> : vector<1x32xf32>
    %36 = tpu.matmul %30, %35, %cst_22 {dimension_numbers = #tpu.dot_dimension_numbers<[1], [0], [0], [1], [0, 0, 1, 1], [], []>, precision = #tpu.contract_precision<fp32>} : vector<1x32xf32>, vector<32x32xf32>, vector<1x32xf32> -> vector<1x32xf32>
    %37 = arith.addf %34, %36 : vector<1x32xf32>
    %38 = arith.addf %37, %32 : vector<1x32xf32>
    %c256 = arith.constant 256 : index
    %c0_23 = arith.constant 0 : index
    %39 = vector.load %arg2[%c256, %c0_23] : memref<680x128xf32, #tpu.memory_space<vmem>>, vector<32x32xf32>
    %cst_24 = arith.constant dense<0.000000e+00> : vector<1x32xf32>
    %40 = tpu.matmul %31, %39, %cst_24 {dimension_numbers = #tpu.dot_dimension_numbers<[1], [0], [0], [1], [0, 0, 1, 1], [], []>, precision = #tpu.contract_precision<fp32>} : vector<1x32xf32>, vector<32x32xf32>, vector<1x32xf32> -> vector<1x32xf32>
    %c360 = arith.constant 360 : index
    %c0_25 = arith.constant 0 : index
    %41 = vector.load %arg2[%c360, %c0_25] : memref<680x128xf32, #tpu.memory_space<vmem>>, vector<1x32xf32>
    %42 = arith.addf %40, %41 : vector<1x32xf32>
    %43 = arith.addf %38, %42 : vector<1x32xf32>
    %44 = arith.negf %43 : vector<1x32xf32>
    %45 = math.exp %44 : vector<1x32xf32>
    %cst_26 = arith.constant 1.000000e+00 : f32
    %46 = vector.broadcast %cst_26 : f32 to vector<1x32xf32>
    %47 = arith.addf %46, %45 : vector<1x32xf32>
    %48 = arith.divf %46, %47 : vector<1x32xf32>
    %c368 = arith.constant 368 : index
    %c0_27 = arith.constant 0 : index
    %49 = vector.load %arg2[%c368, %c0_27] : memref<680x128xf32, #tpu.memory_space<vmem>>, vector<1x32xf32>
    %c128 = arith.constant 128 : index
    %c0_28 = arith.constant 0 : index
    %50 = vector.load %arg2[%c128, %c0_28] : memref<680x128xf32, #tpu.memory_space<vmem>>, vector<32x32xf32>
    %cst_29 = arith.constant dense<0.000000e+00> : vector<1x32xf32>
    %51 = tpu.matmul %21, %50, %cst_29 {dimension_numbers = #tpu.dot_dimension_numbers<[1], [0], [0], [1], [0, 0, 1, 1], [], []>, precision = #tpu.contract_precision<fp32>} : vector<1x32xf32>, vector<32x32xf32>, vector<1x32xf32> -> vector<1x32xf32>
    %c160 = arith.constant 160 : index
    %c0_30 = arith.constant 0 : index
    %52 = vector.load %arg2[%c160, %c0_30] : memref<680x128xf32, #tpu.memory_space<vmem>>, vector<32x32xf32>
    %cst_31 = arith.constant dense<0.000000e+00> : vector<1x32xf32>
    %53 = tpu.matmul %30, %52, %cst_31 {dimension_numbers = #tpu.dot_dimension_numbers<[1], [0], [0], [1], [0, 0, 1, 1], [], []>, precision = #tpu.contract_precision<fp32>} : vector<1x32xf32>, vector<32x32xf32>, vector<1x32xf32> -> vector<1x32xf32>
    %54 = arith.addf %51, %53 : vector<1x32xf32>
    %55 = arith.addf %54, %49 : vector<1x32xf32>
    %c288 = arith.constant 288 : index
    %c0_32 = arith.constant 0 : index
    %56 = vector.load %arg2[%c288, %c0_32] : memref<680x128xf32, #tpu.memory_space<vmem>>, vector<32x32xf32>
    %cst_33 = arith.constant dense<0.000000e+00> : vector<1x32xf32>
    %57 = tpu.matmul %31, %56, %cst_33 {dimension_numbers = #tpu.dot_dimension_numbers<[1], [0], [0], [1], [0, 0, 1, 1], [], []>, precision = #tpu.contract_precision<fp32>} : vector<1x32xf32>, vector<32x32xf32>, vector<1x32xf32> -> vector<1x32xf32>
    %c376 = arith.constant 376 : index
    %c0_34 = arith.constant 0 : index
    %58 = vector.load %arg2[%c376, %c0_34] : memref<680x128xf32, #tpu.memory_space<vmem>>, vector<1x32xf32>
    %59 = arith.addf %57, %58 : vector<1x32xf32>
    %60 = arith.addf %55, %59 : vector<1x32xf32>
    %61 = arith.negf %60 : vector<1x32xf32>
    %62 = math.exp %61 : vector<1x32xf32>
    %cst_35 = arith.constant 1.000000e+00 : f32
    %63 = vector.broadcast %cst_35 : f32 to vector<1x32xf32>
    %64 = arith.addf %63, %62 : vector<1x32xf32>
    %65 = arith.divf %63, %64 : vector<1x32xf32>
    %c384 = arith.constant 384 : index
    %c0_36 = arith.constant 0 : index
    %66 = vector.load %arg2[%c384, %c0_36] : memref<680x128xf32, #tpu.memory_space<vmem>>, vector<1x32xf32>
    %c192 = arith.constant 192 : index
    %c0_37 = arith.constant 0 : index
    %67 = vector.load %arg2[%c192, %c0_37] : memref<680x128xf32, #tpu.memory_space<vmem>>, vector<32x32xf32>
    %cst_38 = arith.constant dense<0.000000e+00> : vector<1x32xf32>
    %68 = tpu.matmul %21, %67, %cst_38 {dimension_numbers = #tpu.dot_dimension_numbers<[1], [0], [0], [1], [0, 0, 1, 1], [], []>, precision = #tpu.contract_precision<fp32>} : vector<1x32xf32>, vector<32x32xf32>, vector<1x32xf32> -> vector<1x32xf32>
    %c224 = arith.constant 224 : index
    %c0_39 = arith.constant 0 : index
    %69 = vector.load %arg2[%c224, %c0_39] : memref<680x128xf32, #tpu.memory_space<vmem>>, vector<32x32xf32>
    %cst_40 = arith.constant dense<0.000000e+00> : vector<1x32xf32>
    %70 = tpu.matmul %30, %69, %cst_40 {dimension_numbers = #tpu.dot_dimension_numbers<[1], [0], [0], [1], [0, 0, 1, 1], [], []>, precision = #tpu.contract_precision<fp32>} : vector<1x32xf32>, vector<32x32xf32>, vector<1x32xf32> -> vector<1x32xf32>
    %71 = arith.addf %68, %70 : vector<1x32xf32>
    %72 = arith.addf %71, %66 : vector<1x32xf32>
    %c320 = arith.constant 320 : index
    %c0_41 = arith.constant 0 : index
    %73 = vector.load %arg2[%c320, %c0_41] : memref<680x128xf32, #tpu.memory_space<vmem>>, vector<32x32xf32>
    %cst_42 = arith.constant dense<0.000000e+00> : vector<1x32xf32>
    %74 = tpu.matmul %31, %73, %cst_42 {dimension_numbers = #tpu.dot_dimension_numbers<[1], [0], [0], [1], [0, 0, 1, 1], [], []>, precision = #tpu.contract_precision<fp32>} : vector<1x32xf32>, vector<32x32xf32>, vector<1x32xf32> -> vector<1x32xf32>
    %c392 = arith.constant 392 : index
    %c0_43 = arith.constant 0 : index
    %75 = vector.load %arg2[%c392, %c0_43] : memref<680x128xf32, #tpu.memory_space<vmem>>, vector<1x32xf32>
    %76 = arith.addf %74, %75 : vector<1x32xf32>
    %77 = arith.mulf %48, %76 : vector<1x32xf32>
    %78 = arith.addf %72, %77 : vector<1x32xf32>
    %79 = math.tanh %78 : vector<1x32xf32>
    %cst_44 = arith.constant 1.000000e+00 : f32
    %80 = vector.broadcast %cst_44 : f32 to vector<1x32xf32>
    %81 = arith.subf %80, %65 : vector<1x32xf32>
    %82 = arith.mulf %81, %79 : vector<1x32xf32>
    %83 = arith.mulf %65, %31 : vector<1x32xf32>
    %84 = arith.addf %82, %83 : vector<1x32xf32>
    %c0_45 = arith.constant 0 : index
    %c0_46 = arith.constant 0 : index
    %85 = vector.load %arg8[%c0_45, %c0_46] : memref<8x128xf32, #tpu.memory_space<vmem>>, vector<1x32xf32>
    tpu.vector_store %arg8[%c0_45, %c0_46], %84 {strides = array<i32>} : memref<8x128xf32, #tpu.memory_space<vmem>>, vector<1x32xf32>,
    %c1_47 = arith.constant 1 : index
    %c0_48 = arith.constant 0 : index
    %86 = vector.load %arg8[%c1_47, %c0_48] : memref<8x128xf32, #tpu.memory_space<vmem>>, vector<1x32xf32>
    %c592 = arith.constant 592 : index
    %c0_49 = arith.constant 0 : index
    %87 = vector.load %arg2[%c592, %c0_49] : memref<680x128xf32, #tpu.memory_space<vmem>>, vector<1x32xf32>
    %c400 = arith.constant 400 : index
    %c0_50 = arith.constant 0 : index
    %88 = vector.load %arg2[%c400, %c0_50] : memref<680x128xf32, #tpu.memory_space<vmem>>, vector<32x32xf32>
    %cst_51 = arith.constant dense<0.000000e+00> : vector<1x32xf32>
    %89 = tpu.matmul %84, %88, %cst_51 {dimension_numbers = #tpu.dot_dimension_numbers<[1], [0], [0], [1], [0, 0, 1, 1], [], []>, precision = #tpu.contract_precision<fp32>} : vector<1x32xf32>, vector<32x32xf32>, vector<1x32xf32> -> vector<1x32xf32>
    %90 = arith.addf %89, %87 : vector<1x32xf32>
    %c496 = arith.constant 496 : index
    %c0_52 = arith.constant 0 : index
    %91 = vector.load %arg2[%c496, %c0_52] : memref<680x128xf32, #tpu.memory_space<vmem>>, vector<32x32xf32>
    %cst_53 = arith.constant dense<0.000000e+00> : vector<1x32xf32>
    %92 = tpu.matmul %86, %91, %cst_53 {dimension_numbers = #tpu.dot_dimension_numbers<[1], [0], [0], [1], [0, 0, 1, 1], [], []>, precision = #tpu.contract_precision<fp32>} : vector<1x32xf32>, vector<32x32xf32>, vector<1x32xf32> -> vector<1x32xf32>
    %c600 = arith.constant 600 : index
    %c0_54 = arith.constant 0 : index
    %93 = vector.load %arg2[%c600, %c0_54] : memref<680x128xf32, #tpu.memory_space<vmem>>, vector<1x32xf32>
    %94 = arith.addf %92, %93 : vector<1x32xf32>
    %95 = arith.addf %90, %94 : vector<1x32xf32>
    %96 = arith.negf %95 : vector<1x32xf32>
    %97 = math.exp %96 : vector<1x32xf32>
    %cst_55 = arith.constant 1.000000e+00 : f32
    %98 = vector.broadcast %cst_55 : f32 to vector<1x32xf32>
    %99 = arith.addf %98, %97 : vector<1x32xf32>
    %100 = arith.divf %98, %99 : vector<1x32xf32>
    %c608 = arith.constant 608 : index
    %c0_56 = arith.constant 0 : index
    %101 = vector.load %arg2[%c608, %c0_56] : memref<680x128xf32, #tpu.memory_space<vmem>>, vector<1x32xf32>
    %c432 = arith.constant 432 : index
    %c0_57 = arith.constant 0 : index
    %102 = vector.load %arg2[%c432, %c0_57] : memref<680x128xf32, #tpu.memory_space<vmem>>, vector<32x32xf32>
    %cst_58 = arith.constant dense<0.000000e+00> : vector<1x32xf32>
    %103 = tpu.matmul %84, %102, %cst_58 {dimension_numbers = #tpu.dot_dimension_numbers<[1], [0], [0], [1], [0, 0, 1, 1], [], []>, precision = #tpu.contract_precision<fp32>} : vector<1x32xf32>, vector<32x32xf32>, vector<1x32xf32> -> vector<1x32xf32>
    %104 = arith.addf %103, %101 : vector<1x32xf32>
    %c528 = arith.constant 528 : index
    %c0_59 = arith.constant 0 : index
    %105 = vector.load %arg2[%c528, %c0_59] : memref<680x128xf32, #tpu.memory_space<vmem>>, vector<32x32xf32>
    %cst_60 = arith.constant dense<0.000000e+00> : vector<1x32xf32>
    %106 = tpu.matmul %86, %105, %cst_60 {dimension_numbers = #tpu.dot_dimension_numbers<[1], [0], [0], [1], [0, 0, 1, 1], [], []>, precision = #tpu.contract_precision<fp32>} : vector<1x32xf32>, vector<32x32xf32>, vector<1x32xf32> -> vector<1x32xf32>
    %c616 = arith.constant 616 : index
    %c0_61 = arith.constant 0 : index
    %107 = vector.load %arg2[%c616, %c0_61] : memref<680x128xf32, #tpu.memory_space<vmem>>, vector<1x32xf32>
    %108 = arith.addf %106, %107 : vector<1x32xf32>
    %109 = arith.addf %104, %108 : vector<1x32xf32>
    %110 = arith.negf %109 : vector<1x32xf32>
    %111 = math.exp %110 : vector<1x32xf32>
    %cst_62 = arith.constant 1.000000e+00 : f32
    %112 = vector.broadcast %cst_62 : f32 to vector<1x32xf32>
    %113 = arith.addf %112, %111 : vector<1x32xf32>
    %114 = arith.divf %112, %113 : vector<1x32xf32>
    %c624 = arith.constant 624 : index
    %c0_63 = arith.constant 0 : index
    %115 = vector.load %arg2[%c624, %c0_63] : memref<680x128xf32, #tpu.memory_space<vmem>>, vector<1x32xf32>
    %c464 = arith.constant 464 : index
    %c0_64 = arith.constant 0 : index
    %116 = vector.load %arg2[%c464, %c0_64] : memref<680x128xf32, #tpu.memory_space<vmem>>, vector<32x32xf32>
    %cst_65 = arith.constant dense<0.000000e+00> : vector<1x32xf32>
    %117 = tpu.matmul %84, %116, %cst_65 {dimension_numbers = #tpu.dot_dimension_numbers<[1], [0], [0], [1], [0, 0, 1, 1], [], []>, precision = #tpu.contract_precision<fp32>} : vector<1x32xf32>, vector<32x32xf32>, vector<1x32xf32> -> vector<1x32xf32>
    %118 = arith.addf %117, %115 : vector<1x32xf32>
    %c560 = arith.constant 560 : index
    %c0_66 = arith.constant 0 : index
    %119 = vector.load %arg2[%c560, %c0_66] : memref<680x128xf32, #tpu.memory_space<vmem>>, vector<32x32xf32>
    %cst_67 = arith.constant dense<0.000000e+00> : vector<1x32xf32>
    %120 = tpu.matmul %86, %119, %cst_67 {dimension_numbers = #tpu.dot_dimension_numbers<[1], [0], [0], [1], [0, 0, 1, 1], [], []>, precision = #tpu.contract_precision<fp32>} : vector<1x32xf32>, vector<32x32xf32>, vector<1x32xf32> -> vector<1x32xf32>
    %c632 = arith.constant 632 : index
    %c0_68 = arith.constant 0 : index
    %121 = vector.load %arg2[%c632, %c0_68] : memref<680x128xf32, #tpu.memory_space<vmem>>, vector<1x32xf32>
    %122 = arith.addf %120, %121 : vector<1x32xf32>
    %123 = arith.mulf %100, %122 : vector<1x32xf32>
    %124 = arith.addf %118, %123 : vector<1x32xf32>
    %125 = math.tanh %124 : vector<1x32xf32>
    %cst_69 = arith.constant 1.000000e+00 : f32
    %126 = vector.broadcast %cst_69 : f32 to vector<1x32xf32>
    %127 = arith.subf %126, %114 : vector<1x32xf32>
    %128 = arith.mulf %127, %125 : vector<1x32xf32>
    %129 = arith.mulf %114, %86 : vector<1x32xf32>
    %130 = arith.addf %128, %129 : vector<1x32xf32>
    %c1_70 = arith.constant 1 : index
    %c0_71 = arith.constant 0 : index
    %131 = vector.load %arg8[%c1_70, %c0_71] : memref<8x128xf32, #tpu.memory_space<vmem>>, vector<1x32xf32>
    tpu.vector_store %arg8[%c1_70, %c0_71], %130 {strides = array<i32>} : memref<8x128xf32, #tpu.memory_space<vmem>>, vector<1x32xf32>,
    %c640 = arith.constant 640 : index
    %c0_72 = arith.constant 0 : index
    %132 = vector.load %arg2[%c640, %c0_72] : memref<680x128xf32, #tpu.memory_space<vmem>>, vector<32x128xf32>
    %cst_73 = arith.constant dense<0.000000e+00> : vector<1x128xf32>
    %133 = tpu.matmul %130, %132, %cst_73 {dimension_numbers = #tpu.dot_dimension_numbers<[1], [0], [0], [1], [0, 0, 1, 1], [], []>, precision = #tpu.contract_precision<fp32>} : vector<1x32xf32>, vector<32x128xf32>, vector<1x128xf32> -> vector<1x128xf32>
    %c672 = arith.constant 672 : index
    %c0_74 = arith.constant 0 : index
    %134 = vector.load %arg2[%c672, %c0_74] : memref<680x128xf32, #tpu.memory_space<vmem>>, vector<1x128xf32>
    %135 = arith.addf %133, %134 : vector<1x128xf32>
    %136 = vector.shape_cast %135 : vector<1x128xf32> to vector<1x128xf32>
    %137 = vector.broadcast %136 : vector<1x128xf32> to vector<8x128xf32>
    %c0_75 = arith.constant 0 : index
    %c0_76 = arith.constant 0 : index
    %c0_77 = arith.constant 0 : index
    %138 = vector.load %arg6[%c0_75, %c0_76, %c0_77] : memref<1x8x128xf32, #tpu.memory_space<vmem>>, vector<1x8x128xf32>
    %139 = vector.shape_cast %138 : vector<1x8x128xf32> to vector<8x128xf32>
    %140 = vector.shape_cast %137 : vector<8x128xf32> to vector<1x8x128xf32>
    tpu.vector_store %arg6[%c0_75, %c0_76, %c0_77], %140 {strides = array<i32>} : memref<1x8x128xf32, #tpu.memory_space<vmem>>, vector<1x8x128xf32>,
    %c0_78 = arith.constant 0 : index
    %c0_79 = arith.constant 0 : index
    %141 = vector.load %arg8[%c0_78, %c0_79] : memref<8x128xf32, #tpu.memory_space<vmem>>, vector<8x128xf32>
    %c0_80 = arith.constant 0 : index
    %c0_81 = arith.constant 0 : index
    %142 = vector.load %arg7[%c0_80, %c0_81] : memref<8x128xf32, #tpu.memory_space<vmem>>, vector<8x128xf32>
    tpu.vector_store %arg7[%c0_80, %c0_81], %141 {strides = array<i32>} : memref<8x128xf32, #tpu.memory_space<vmem>>, vector<8x128xf32>,
    return
  }
  func.func @transform_0(%arg0: i32, %arg1: memref<1xi32, #tpu.memory_space<smem>>) -> (i32, i32) {
    %c0_i32 = arith.constant 0 : i32
    %c0_i32_0 = arith.constant 0 : i32
    %c0_i32_1 = arith.constant 0 : i32
    return %c0_i32, %c0_i32_0 : i32, i32
  }
  func.func @transform_1(%arg0: i32, %arg1: memref<1xi32, #tpu.memory_space<smem>>) -> (i32, i32) {
    %c0_i32 = arith.constant 0 : i32
    %c0_i32_0 = arith.constant 0 : i32
    %c0_i32_1 = arith.constant 0 : i32
    return %c0_i32, %c0_i32_0 : i32, i32
  }
  func.func @transform_2(%arg0: i32, %arg1: memref<1xi32, #tpu.memory_space<smem>>) -> (i32, i32) {
    %c0_i32 = arith.constant 0 : i32
    %c0_i32_0 = arith.constant 0 : i32
    %c0_i32_1 = arith.constant 0 : i32
    return %c0_i32, %c0_i32_0 : i32, i32
  }
  func.func @transform_3(%arg0: i32, %arg1: memref<1xi32, #tpu.memory_space<smem>>) -> (i32, i32) {
    %c0_i32 = arith.constant 0 : i32
    %c0_i32_0 = arith.constant 0 : i32
    %c0_i32_1 = arith.constant 0 : i32
    return %c0_i32, %c0_i32_0 : i32, i32
  }
  func.func @transform_4(%arg0: i32, %arg1: memref<1xi32, #tpu.memory_space<smem>>) -> (i32, i32, i32) {
    %c0_i32 = arith.constant 0 : i32
    %c0_i32_0 = arith.constant 0 : i32
    %c0_i32_1 = arith.constant 0 : i32
    return %arg0, %c0_i32, %c0_i32_0 : i32, i32, i32
  }
  func.func @transform_5(%arg0: i32, %arg1: memref<1xi32, #tpu.memory_space<smem>>) -> (i32, i32) {
    %c0_i32 = arith.constant 0 : i32
    %c0_i32_0 = arith.constant 0 : i32
    %c0_i32_1 = arith.constant 0 : i32
    return %c0_i32, %c0_i32_0 : i32, i32
  }
}

</mosaic_0001>

<llo_original>
// kernel: tpu_custom_call.1
$region0: #{tpu_custom_call.1}
  #allocation0 [shape = 'u32[]', space=smem, size = 0x4, offset = 0x4, fixed_abs, tag = 'smem constant byte address 0x4 - core index']
  #allocation1 [shape = 'u32[72,128]{1,0:T(1,128)}', space=vmem, size = 0x9000, scoped, tag = 'internal scratch']
  #allocation2 [shape = 'f32[8,128]{1,0:T(8,128)}', space=vmem, size = 0x1000, scoped, tag = 'scratch operand']
  #allocation3 [shape = 's32[1]{0}', space=sflag, size = 0x4, scoped, tag = 'scoped memory for tpu_custom_call.1']
  #allocation4 [shape = 's32[1]{0:T(128)S(6)}', space=smem, size = 0x200, scoped, tag = 'prefetched SMEM operand 0']
  %s0 = inlined_call_operand.<no memory space> [shape: s32[1], index: 0, kind: input, shape index: {}]
  %s1 = inlined_call_operand.hbm [shape: f32[680,128], index: 1, kind: input, shape index: {}]
  %s2 = inlined_call_operand.vmem [shape: f32[64,32], index: 2, kind: input, shape index: {}]
  %s3 = inlined_call_operand.vmem [shape: f32[8,32], index: 3, kind: input, shape index: {}]
  %s4 = inlined_call_operand.vmem [shape: f32[8,128], index: 4, kind: input, shape index: {}]
  %s5 = inlined_call_operand.hbm [shape: f32[1,8,128], index: 5, kind: output, shape index: {0}]
  %s6 = inlined_call_operand.hbm [shape: f32[8,128], index: 6, kind: output, shape index: {1}]
  %7 = xla_tuple %s5, %s6
  %s8 = sld [smem:[#allocation0]]
  $region42: #{tpu_custom_call.1} parent=0
    _
  %s10 = ssub.s32 1, %s8
  %s11 = scalar_select 0, %s10, %s8
  %12 = sst [smem:[#allocation4]] %s0
  $region1: #{tpu_custom_call.1} parent=0
    #allocation5 [shape = 'u8[348160]{0}', space=vmem, size = 0x55000, scoped, tag = 'input window, operand 1, single buffered']
    #allocation6 [shape = 's32[1]{0}', space=sflag, size = 0x4, scoped, tag = 'scoped memory for tpu_custom_call.1']
    #allocation7 [shape = 's32[1]{0}', space=sflag, size = 0x4, scoped, tag = 'scoped memory for tpu_custom_call.1']
    #allocation8 [shape = 'u8[4096]{0}', space=vmem, size = 0x1000, scoped, tag = 'output window, operand 0, single buffered']
    #allocation9 [shape = 'u8[4096]{0}', space=vmem, size = 0x1000, scoped, tag = 'output window, operand 1, single buffered']
    #allocation10 [shape = 's32[1]{0}', space=sflag, size = 0x4, scoped, tag = 'scoped memory for tpu_custom_call.1']
    %13 = vsyncpa [#allocation6], 0
    %14 = vsyncpa [#allocation7], 0
    %15 = vsyncpa [#allocation10], 0
    // Predicated region
    $region2: #{tpu_custom_call.1} parent=1 // pred_check
      _
    $region3: #{tpu_custom_call.1} parent=1 // pred_check_branch
      %17 = sbr.rel (0) target = $region5
    $region4: #{tpu_custom_call.1} parent=1 // pred_region
      %19 = vsyncadd [#allocation6], 0
      %s20 = sshll.u32 %s1, 4
      %s21 = int_to_ptr.hbm [resolvable:$true] %s20
      %s22 = sshll.u32 [#allocation5], 4
      %s23 = int_to_ptr.vmem [resolvable:$true] %s22
      %28 = dma.hbm_to_vmem [thread:$0]  %s21, 10880, %s23, [#allocation6], 128, 128, 8
    $region5: #{tpu_custom_call.1} parent=1 // pred_fallthru
      _
    // Predicated region
    $region6: #{tpu_custom_call.1} parent=1 // pred_check
      _
    $region7: #{tpu_custom_call.1} parent=1 // pred_check_branch
      %30 = sbr.rel (0) target = $region9
    $region8: #{tpu_custom_call.1} parent=1 // pred_region
      _
    $region9: #{tpu_custom_call.1} parent=1 // pred_fallthru
      _
    // Predicated region
    $region10: #{tpu_custom_call.1} parent=1 // pred_check
      _
    $region11: #{tpu_custom_call.1} parent=1 // pred_check_branch
      %32 = sbr.rel (0) target = $region13
    $region12: #{tpu_custom_call.1} parent=1 // pred_region
      _
    $region13: #{tpu_custom_call.1} parent=1 // pred_fallthru
      _
    // Predicated region
    $region14: #{tpu_custom_call.1} parent=1 // pred_check
      _
    $region15: #{tpu_custom_call.1} parent=1 // pred_check_branch
      %34 = sbr.rel (0) target = $region17
    $region16: #{tpu_custom_call.1} parent=1 // pred_region
      _
    $region17: #{tpu_custom_call.1} parent=1 // pred_fallthru
      _
    // Predicated region
    $region18: #{tpu_custom_call.1} parent=1 // pred_check
      _
    $region19: #{tpu_custom_call.1} parent=1 // pred_check_branch
      %36 = sbr.rel (0) target = $region21
    $region20: #{tpu_custom_call.1} parent=1 // pred_region
      %38 = dma.done [#allocation6], 10880
    $region21: #{tpu_custom_call.1} parent=1 // pred_fallthru
      _
    %p39 = scmp.eq.s32.totalorder 0, 0
    // Predicated region
    $region22: #{tpu_custom_call.1} parent=1 // pred_check
      %p40 = pneg %p39
    $region23: #{tpu_custom_call.1} parent=1 // pred_check_branch
      %42 = sbr.rel (%p40) target = $region25
    $region24: #{tpu_custom_call.1} parent=1 // pred_region
      %v43 = vld [vmem:[%s4] sm:$0xff]
      %44 = vst [vmem:[#allocation2] sm:$0xff] %v43
    $region25: #{tpu_custom_call.1} parent=1 // pred_fallthru
      _
    %v45 = vld [vmem:[%s3] sm:$0xff]
    %v46 = vld [vmem:[#allocation2] sm:$0x1]
    %v47 = vld [vmem:[#allocation5] sm:$0xff]
    %v48 = vld [vmem:[#allocation5 + $0x8] sm:$0xff]
    %v49 = vld [vmem:[#allocation5 + $0x10] sm:$0xff]
    %v50 = vld [vmem:[#allocation5 + $0x18] sm:$0xff]
    %v51 = vld [vmem:[#allocation2 + $0x1] sm:$0x1]
    %v52 = vld [vmem:[#allocation5 + $0x20] sm:$0xff]
    %v53 = vld [vmem:[#allocation5 + $0x28] sm:$0xff]
    %v54 = vld [vmem:[#allocation5 + $0x30] sm:$0xff]
    %v55 = vld [vmem:[#allocation5 + $0x38] sm:$0xff]
    %vm56 = vcmask 261120
    %v58 = vsel %vm56, %v51, 0
    %60 = vmatpush.msra.mxu0 0.0
    %61 = vmatpush.msra.mxu0 0.0
    %62 = vmatpush.msra.mxu0 0.0
    %63 = vmatpush.msra.mxu0 0.0
    %64 = vmatpush.msra.mxu0 0.0
    %65 = vmatpush.msra.mxu0 0.0
    %66 = vmatpush.msra.mxu0 0.0
    %67 = vmatpush.msra.mxu0 0.0
    %68 = vmatpush.msra.mxu0 0.0
    %69 = vmatpush.msra.mxu0 0.0
    %70 = vmatpush.msra.mxu0 0.0
    %71 = vmatpush.msra.mxu0 0.0
    %v72 = vand.u32 %v55, 4294901760
    %73 = vmatpush.msra.mxu0 %v72
    %v74 = vand.u32 %v54, 4294901760
    %75 = vmatpush.msra.mxu0 %v74
    %v76 = vand.u32 %v53, 4294901760
    %77 = vmatpush.msra.mxu0 %v76
    %v78 = vand.u32 %v52, 4294901760
    %79 = vmatpush.msra.mxu0 %v78
    %v80 = vand.u32 %v58, 4294901760
    %v81 = vsub.f32 %v58, %v80
    %v82 = vand.u32 %v81, 4294901760
    %v83 = vsub.f32 %v81, %v82
    %v84 = vand.u32 %v83, 4294901760
    %85 = vmatmul.f32.gmra.mxu0 %v84
    %v86 = vpop.f32.mrf.mxu0
    %v87 = vadd.f32 0.0, %v86
    %88 = vdwg.mxu0
    %89 = vmatpush.msra.mxu0 0.0
    %90 = vmatpush.msra.mxu0 0.0
    %91 = vmatpush.msra.mxu0 0.0
    %92 = vmatpush.msra.mxu0 0.0
    %93 = vmatpush.msra.mxu0 0.0
    %94 = vmatpush.msra.mxu0 0.0
    %95 = vmatpush.msra.mxu0 0.0
    %96 = vmatpush.msra.mxu0 0.0
    %97 = vmatpush.msra.mxu0 0.0
    %98 = vmatpush.msra.mxu0 0.0
    %99 = vmatpush.msra.mxu0 0.0
    %100 = vmatpush.msra.mxu0 0.0
    %v101 = vand.u32 %v55, 4294901760
    %v102 = vsub.f32 %v55, %v101
    %v103 = vand.u32 %v102, 4294901760
    %v104 = vsub.f32 %v102, %v103
    %v105 = vand.u32 %v104, 4294901760
    %106 = vmatpush.msra.mxu0 %v105
    %v107 = vand.u32 %v54, 4294901760
    %v108 = vsub.f32 %v54, %v107
    %v109 = vand.u32 %v108, 4294901760
    %v110 = vsub.f32 %v108, %v109
    %v111 = vand.u32 %v110, 4294901760
    %112 = vmatpush.msra.mxu0 %v111
    %v113 = vand.u32 %v53, 4294901760
    %v114 = vsub.f32 %v53, %v113
    %v115 = vand.u32 %v114, 4294901760
    %v116 = vsub.f32 %v114, %v115
    %v117 = vand.u32 %v116, 4294901760
    %118 = vmatpush.msra.mxu0 %v117
    %v119 = vand.u32 %v52, 4294901760
    %v120 = vsub.f32 %v52, %v119
    %v121 = vand.u32 %v120, 4294901760
    %v122 = vsub.f32 %v120, %v121
    %v123 = vand.u32 %v122, 4294901760
    %124 = vmatpush.msra.mxu0 %v123
    %v125 = vand.u32 %v58, 4294901760
    %126 = vmatmul.f32.gmra.mxu0 %v125
    %v127 = vpop.f32.mrf.mxu0
    %v128 = vadd.f32 %v87, %v127
    %129 = vdwg.mxu0
    %130 = vmatpush.msra.mxu0 0.0
    %131 = vmatpush.msra.mxu0 0.0
    %132 = vmatpush.msra.mxu0 0.0
    %133 = vmatpush.msra.mxu0 0.0
    %134 = vmatpush.msra.mxu0 0.0
    %135 = vmatpush.msra.mxu0 0.0
    %136 = vmatpush.msra.mxu0 0.0
    %137 = vmatpush.msra.mxu0 0.0
    %138 = vmatpush.msra.mxu0 0.0
    %139 = vmatpush.msra.mxu0 0.0
    %140 = vmatpush.msra.mxu0 0.0
    %141 = vmatpush.msra.mxu0 0.0
    %v142 = vand.u32 %v55, 4294901760
    %v143 = vsub.f32 %v55, %v142
    %144 = vmatpush.msra.mxu0 %v143
    %v145 = vand.u32 %v54, 4294901760
    %v146 = vsub.f32 %v54, %v145
    %147 = vmatpush.msra.mxu0 %v146
    %v148 = vand.u32 %v53, 4294901760
    %v149 = vsub.f32 %v53, %v148
    %150 = vmatpush.msra.mxu0 %v149
    %v151 = vand.u32 %v52, 4294901760
    %v152 = vsub.f32 %v52, %v151
    %153 = vmatpush.msra.mxu0 %v152
    %v154 = vand.u32 %v58, 4294901760
    %v155 = vsub.f32 %v58, %v154
    %156 = vmatmul.f32.gmra.mxu0 %v155
    %v157 = vpop.f32.mrf.mxu0
    %v158 = vadd.f32 %v128, %v157
    %159 = vdwg.mxu0
    %160 = vmatpush.msra.mxu0 0.0
    %161 = vmatpush.msra.mxu0 0.0
    %162 = vmatpush.msra.mxu0 0.0
    %163 = vmatpush.msra.mxu0 0.0
    %164 = vmatpush.msra.mxu0 0.0
    %165 = vmatpush.msra.mxu0 0.0
    %166 = vmatpush.msra.mxu0 0.0
    %167 = vmatpush.msra.mxu0 0.0
    %168 = vmatpush.msra.mxu0 0.0
    %169 = vmatpush.msra.mxu0 0.0
    %170 = vmatpush.msra.mxu0 0.0
    %171 = vmatpush.msra.mxu0 0.0
    %v172 = vand.u32 %v55, 4294901760
    %173 = vmatpush.msra.mxu0 %v172
    %v174 = vand.u32 %v54, 4294901760
    %175 = vmatpush.msra.mxu0 %v174
    %v176 = vand.u32 %v53, 4294901760
    %177 = vmatpush.msra.mxu0 %v176
    %v178 = vand.u32 %v52, 4294901760
    %179 = vmatpush.msra.mxu0 %v178
    %v180 = vand.u32 %v58, 4294901760
    %v181 = vsub.f32 %v58, %v180
    %v182 = vand.u32 %v181, 4294901760
    %183 = vmatmul.f32.gmra.mxu0 %v182
    %v184 = vpop.f32.mrf.mxu0
    %v185 = vadd.f32 %v158, %v184
    %186 = vdwg.mxu0
    %187 = vmatpush.msra.mxu0 0.0
    %188 = vmatpush.msra.mxu0 0.0
    %189 = vmatpush.msra.mxu0 0.0
    %190 = vmatpush.msra.mxu0 0.0
    %191 = vmatpush.msra.mxu0 0.0
    %192 = vmatpush.msra.mxu0 0.0
    %193 = vmatpush.msra.mxu0 0.0
    %194 = vmatpush.msra.mxu0 0.0
    %195 = vmatpush.msra.mxu0 0.0
    %196 = vmatpush.msra.mxu0 0.0
    %197 = vmatpush.msra.mxu0 0.0
    %198 = vmatpush.msra.mxu0 0.0
    %v199 = vand.u32 %v55, 4294901760
    %v200 = vsub.f32 %v55, %v199
    %v201 = vand.u32 %v200, 4294901760
    %202 = vmatpush.msra.mxu0 %v201
    %v203 = vand.u32 %v54, 4294901760
    %v204 = vsub.f32 %v54, %v203
    %v205 = vand.u32 %v204, 4294901760
    %206 = vmatpush.msra.mxu0 %v205
    %v207 = vand.u32 %v53, 4294901760
    %v208 = vsub.f32 %v53, %v207
    %v209 = vand.u32 %v208, 4294901760
    %210 = vmatpush.msra.mxu0 %v209
    %v211 = vand.u32 %v52, 4294901760
    %v212 = vsub.f32 %v52, %v211
    %v213 = vand.u32 %v212, 4294901760
    %214 = vmatpush.msra.mxu0 %v213
    %v215 = vand.u32 %v58, 4294901760
    %216 = vmatmul.f32.gmra.mxu0 %v215
    %v217 = vpop.f32.mrf.mxu0
    %v218 = vadd.f32 %v185, %v217
    %219 = vdwg.mxu0
    %220 = vmatpush.msra.mxu0 0.0
    %221 = vmatpush.msra.mxu0 0.0
    %222 = vmatpush.msra.mxu0 0.0
    %223 = vmatpush.msra.mxu0 0.0
    %224 = vmatpush.msra.mxu0 0.0
    %225 = vmatpush.msra.mxu0 0.0
    %226 = vmatpush.msra.mxu0 0.0
    %227 = vmatpush.msra.mxu0 0.0
    %228 = vmatpush.msra.mxu0 0.0
    %229 = vmatpush.msra.mxu0 0.0
    %230 = vmatpush.msra.mxu0 0.0
    %231 = vmatpush.msra.mxu0 0.0
    %v232 = vand.u32 %v55, 4294901760
    %233 = vmatpush.msra.mxu0 %v232
    %v234 = vand.u32 %v54, 4294901760
    %235 = vmatpush.msra.mxu0 %v234
    %v236 = vand.u32 %v53, 4294901760
    %237 = vmatpush.msra.mxu0 %v236
    %v238 = vand.u32 %v52, 4294901760
    %239 = vmatpush.msra.mxu0 %v238
    %v240 = vand.u32 %v58, 4294901760
    %241 = vmatmul.f32.gmra.mxu0 %v240
    %v242 = vpop.f32.mrf.mxu0
    %v243 = vadd.f32 %v218, %v242
    %244 = vdwg.mxu0
    %v246 = vsel %vm56, %v46, 0
    %248 = vmatpush.msra.mxu0 0.0
    %249 = vmatpush.msra.mxu0 0.0
    %250 = vmatpush.msra.mxu0 0.0
    %251 = vmatpush.msra.mxu0 0.0
    %252 = vmatpush.msra.mxu0 0.0
    %253 = vmatpush.msra.mxu0 0.0
    %254 = vmatpush.msra.mxu0 0.0
    %255 = vmatpush.msra.mxu0 0.0
    %256 = vmatpush.msra.mxu0 0.0
    %257 = vmatpush.msra.mxu0 0.0
    %258 = vmatpush.msra.mxu0 0.0
    %259 = vmatpush.msra.mxu0 0.0
    %v260 = vand.u32 %v50, 4294901760
    %261 = vmatpush.msra.mxu0 %v260
    %v262 = vand.u32 %v49, 4294901760
    %263 = vmatpush.msra.mxu0 %v262
    %v264 = vand.u32 %v48, 4294901760
    %265 = vmatpush.msra.mxu0 %v264
    %v266 = vand.u32 %v47, 4294901760
    %267 = vmatpush.msra.mxu0 %v266
    %v268 = vand.u32 %v246, 4294901760
    %v269 = vsub.f32 %v246, %v268
    %v270 = vand.u32 %v269, 4294901760
    %v271 = vsub.f32 %v269, %v270
    %v272 = vand.u32 %v271, 4294901760
    %273 = vmatmul.f32.gmra.mxu0 %v272
    %v274 = vpop.f32.mrf.mxu0
    %v275 = vadd.f32 %v243, %v274
    %276 = vdwg.mxu0
    %277 = vmatpush.msra.mxu0 0.0
    %278 = vmatpush.msra.mxu0 0.0
    %279 = vmatpush.msra.mxu0 0.0
    %280 = vmatpush.msra.mxu0 0.0
    %281 = vmatpush.msra.mxu0 0.0
    %282 = vmatpush.msra.mxu0 0.0
    %283 = vmatpush.msra.mxu0 0.0
    %284 = vmatpush.msra.mxu0 0.0
    %285 = vmatpush.msra.mxu0 0.0
    %286 = vmatpush.msra.mxu0 0.0
    %287 = vmatpush.msra.mxu0 0.0
    %288 = vmatpush.msra.mxu0 0.0
    %v289 = vand.u32 %v50, 4294901760
    %v290 = vsub.f32 %v50, %v289
    %v291 = vand.u32 %v290, 4294901760
    %v292 = vsub.f32 %v290, %v291
    %v293 = vand.u32 %v292, 4294901760
    %294 = vmatpush.msra.mxu0 %v293
    %v295 = vand.u32 %v49, 4294901760
    %v296 = vsub.f32 %v49, %v295
    %v297 = vand.u32 %v296, 4294901760
    %v298 = vsub.f32 %v296, %v297
    %v299 = vand.u32 %v298, 4294901760
    %300 = vmatpush.msra.mxu0 %v299
    %v301 = vand.u32 %v48, 4294901760
    %v302 = vsub.f32 %v48, %v301
    %v303 = vand.u32 %v302, 4294901760
    %v304 = vsub.f32 %v302, %v303
    %v305 = vand.u32 %v304, 4294901760
    %306 = vmatpush.msra.mxu0 %v305
    %v307 = vand.u32 %v47, 4294901760
    %v308 = vsub.f32 %v47, %v307
    %v309 = vand.u32 %v308, 4294901760
    %v310 = vsub.f32 %v308, %v309
    %v311 = vand.u32 %v310, 4294901760
    %312 = vmatpush.msra.mxu0 %v311
    %v313 = vand.u32 %v246, 4294901760
    %314 = vmatmul.f32.gmra.mxu0 %v313
    %v315 = vpop.f32.mrf.mxu0
    %v316 = vadd.f32 %v275, %v315
    %317 = vdwg.mxu0
    %318 = vmatpush.msra.mxu0 0.0
    %319 = vmatpush.msra.mxu0 0.0
    %320 = vmatpush.msra.mxu0 0.0
    %321 = vmatpush.msra.mxu0 0.0
    %322 = vmatpush.msra.mxu0 0.0
    %323 = vmatpush.msra.mxu0 0.0
    %324 = vmatpush.msra.mxu0 0.0
    %325 = vmatpush.msra.mxu0 0.0
    %326 = vmatpush.msra.mxu0 0.0
    %327 = vmatpush.msra.mxu0 0.0
    %328 = vmatpush.msra.mxu0 0.0
    %329 = vmatpush.msra.mxu0 0.0
    %v330 = vand.u32 %v50, 4294901760
    %v331 = vsub.f32 %v50, %v330
    %332 = vmatpush.msra.mxu0 %v331
    %v333 = vand.u32 %v49, 4294901760
    %v334 = vsub.f32 %v49, %v333
    %335 = vmatpush.msra.mxu0 %v334
    %v336 = vand.u32 %v48, 4294901760
    %v337 = vsub.f32 %v48, %v336
    %338 = vmatpush.msra.mxu0 %v337
    %v339 = vand.u32 %v47, 4294901760
    %v340 = vsub.f32 %v47, %v339
    %341 = vmatpush.msra.mxu0 %v340
    %v342 = vand.u32 %v246, 4294901760
    %v343 = vsub.f32 %v246, %v342
    %344 = vmatmul.f32.gmra.mxu0 %v343
    %v345 = vpop.f32.mrf.mxu0
    %v346 = vadd.f32 %v316, %v345
    %347 = vdwg.mxu0
    %348 = vmatpush.msra.mxu0 0.0
    %349 = vmatpush.msra.mxu0 0.0
    %350 = vmatpush.msra.mxu0 0.0
    %351 = vmatpush.msra.mxu0 0.0
    %352 = vmatpush.msra.mxu0 0.0
    %353 = vmatpush.msra.mxu0 0.0
    %354 = vmatpush.msra.mxu0 0.0
    %355 = vmatpush.msra.mxu0 0.0
    %356 = vmatpush.msra.mxu0 0.0
    %357 = vmatpush.msra.mxu0 0.0
    %358 = vmatpush.msra.mxu0 0.0
    %359 = vmatpush.msra.mxu0 0.0
    %v360 = vand.u32 %v50, 4294901760
    %361 = vmatpush.msra.mxu0 %v360
    %v362 = vand.u32 %v49, 4294901760
    %363 = vmatpush.msra.mxu0 %v362
    %v364 = vand.u32 %v48, 4294901760
    %365 = vmatpush.msra.mxu0 %v364
    %v366 = vand.u32 %v47, 4294901760
    %367 = vmatpush.msra.mxu0 %v366
    %v368 = vand.u32 %v246, 4294901760
    %v369 = vsub.f32 %v246, %v368
    %v370 = vand.u32 %v369, 4294901760
    %371 = vmatmul.f32.gmra.mxu0 %v370
    %v372 = vpop.f32.mrf.mxu0
    %v373 = vadd.f32 %v346, %v372
    %374 = vdwg.mxu0
    %375 = vmatpush.msra.mxu0 0.0
    %376 = vmatpush.msra.mxu0 0.0
    %377 = vmatpush.msra.mxu0 0.0
    %378 = vmatpush.msra.mxu0 0.0
    %379 = vmatpush.msra.mxu0 0.0
    %380 = vmatpush.msra.mxu0 0.0
    %381 = vmatpush.msra.mxu0 0.0
    %382 = vmatpush.msra.mxu0 0.0
    %383 = vmatpush.msra.mxu0 0.0
    %384 = vmatpush.msra.mxu0 0.0
    %385 = vmatpush.msra.mxu0 0.0
    %386 = vmatpush.msra.mxu0 0.0
    %v387 = vand.u32 %v50, 4294901760
    %v388 = vsub.f32 %v50, %v387
    %v389 = vand.u32 %v388, 4294901760
    %390 = vmatpush.msra.mxu0 %v389
    %v391 = vand.u32 %v49, 4294901760
    %v392 = vsub.f32 %v49, %v391
    %v393 = vand.u32 %v392, 4294901760
    %394 = vmatpush.msra.mxu0 %v393
    %v395 = vand.u32 %v48, 4294901760
    %v396 = vsub.f32 %v48, %v395
    %v397 = vand.u32 %v396, 4294901760
    %398 = vmatpush.msra.mxu0 %v397
    %v399 = vand.u32 %v47, 4294901760
    %v400 = vsub.f32 %v47, %v399
    %v401 = vand.u32 %v400, 4294901760
    %402 = vmatpush.msra.mxu0 %v401
    %v403 = vand.u32 %v246, 4294901760
    %404 = vmatmul.f32.gmra.mxu0 %v403
    %v405 = vpop.f32.mrf.mxu0
    %v406 = vadd.f32 %v373, %v405
    %407 = vdwg.mxu0
    %408 = vmatpush.msra.mxu0 0.0
    %409 = vmatpush.msra.mxu0 0.0
    %410 = vmatpush.msra.mxu0 0.0
    %411 = vmatpush.msra.mxu0 0.0
    %412 = vmatpush.msra.mxu0 0.0
    %413 = vmatpush.msra.mxu0 0.0
    %414 = vmatpush.msra.mxu0 0.0
    %415 = vmatpush.msra.mxu0 0.0
    %416 = vmatpush.msra.mxu0 0.0
    %417 = vmatpush.msra.mxu0 0.0
    %418 = vmatpush.msra.mxu0 0.0
    %419 = vmatpush.msra.mxu0 0.0
    %v420 = vand.u32 %v50, 4294901760
    %421 = vmatpush.msra.mxu0 %v420
    %v422 = vand.u32 %v49, 4294901760
    %423 = vmatpush.msra.mxu0 %v422
    %v424 = vand.u32 %v48, 4294901760
    %425 = vmatpush.msra.mxu0 %v424
    %v426 = vand.u32 %v47, 4294901760
    %427 = vmatpush.msra.mxu0 %v426
    %v428 = vand.u32 %v246, 4294901760
    %429 = vmatmul.f32.gmra.mxu0 %v428
    %v430 = vpop.f32.mrf.mxu0
    %v431 = vadd.f32 %v406, %v430
    %432 = vdwg.mxu0
    %v434 = vsel %vm56, %v431, 0
    %v437 = vsel %vm56, %v45, 0
    %439 = vmatpush.xpose.msra.mxu0 0.0
    %440 = vmatpush.xpose.msra.mxu0 0.0
    %441 = vmatpush.xpose.msra.mxu0 0.0
    %442 = vmatpush.xpose.msra.mxu0 0.0
    %443 = vmatpush.xpose.msra.mxu0 0.0
    %444 = vmatpush.xpose.msra.mxu0 0.0
    %445 = vmatpush.xpose.msra.mxu0 0.0
    %446 = vmatpush.xpose.msra.mxu0 0.0
    %447 = vmatpush.xpose.msra.mxu0 0.0
    %448 = vmatpush.xpose.msra.mxu0 0.0
    %449 = vmatpush.xpose.msra.mxu0 0.0
    %450 = vmatpush.xpose.msra.mxu0 0.0
    %451 = vmatpush.xpose.msra.mxu0 0.0
    %452 = vmatpush.xpose.msra.mxu0 0.0
    %453 = vmatpush.xpose.msra.mxu0 0.0
    %v454 = vand.u32 %v437, 4294901760
    %455 = vmatpush.xpose.msra.mxu0 %v454
    %v456 = vand.u32 %v434, 4294901760
    %v457 = vsub.f32 %v434, %v456
    %v458 = vand.u32 %v457, 4294901760
    %v459 = vsub.f32 %v457, %v458
    %v460 = vand.u32 %v459, 4294901760
    %461 = vmatmul.f32.gmra.mxu0 %v460
    %v462 = vpop.f32.mrf.mxu0
    %v463 = vadd.f32 0.0, %v462
    %464 = vdwg.mxu0
    %465 = vmatpush.xpose.msra.mxu0 0.0
    %466 = vmatpush.xpose.msra.mxu0 0.0
    %467 = vmatpush.xpose.msra.mxu0 0.0
    %468 = vmatpush.xpose.msra.mxu0 0.0
    %469 = vmatpush.xpose.msra.mxu0 0.0
    %470 = vmatpush.xpose.msra.mxu0 0.0
    %471 = vmatpush.xpose.msra.mxu0 0.0
    %472 = vmatpush.xpose.msra.mxu0 0.0
    %473 = vmatpush.xpose.msra.mxu0 0.0
    %474 = vmatpush.xpose.msra.mxu0 0.0
    %475 = vmatpush.xpose.msra.mxu0 0.0
    %476 = vmatpush.xpose.msra.mxu0 0.0
    %477 = vmatpush.xpose.msra.mxu0 0.0
    %478 = vmatpush.xpose.msra.mxu0 0.0
    %479 = vmatpush.xpose.msra.mxu0 0.0
    %v480 = vand.u32 %v437, 4294901760
    %v481 = vsub.f32 %v437, %v480
    %v482 = vand.u32 %v481, 4294901760
    %v483 = vsub.f32 %v481, %v482
    %v484 = vand.u32 %v483, 4294901760
    %485 = vmatpush.xpose.msra.mxu0 %v484
    %v486 = vand.u32 %v434, 4294901760
    %487 = vmatmul.f32.gmra.mxu0 %v486
    %v488 = vpop.f32.mrf.mxu0
    %v489 = vadd.f32 %v463, %v488
    %490 = vdwg.mxu0
    %491 = vmatpush.xpose.msra.mxu0 0.0
    %492 = vmatpush.xpose.msra.mxu0 0.0
    %493 = vmatpush.xpose.msra.mxu0 0.0
    %494 = vmatpush.xpose.msra.mxu0 0.0
    %495 = vmatpush.xpose.msra.mxu0 0.0
    %496 = vmatpush.xpose.msra.mxu0 0.0
    %497 = vmatpush.xpose.msra.mxu0 0.0
    %498 = vmatpush.xpose.msra.mxu0 0.0
    %499 = vmatpush.xpose.msra.mxu0 0.0
    %500 = vmatpush.xpose.msra.mxu0 0.0
    %501 = vmatpush.xpose.msra.mxu0 0.0
    %502 = vmatpush.xpose.msra.mxu0 0.0
    %503 = vmatpush.xpose.msra.mxu0 0.0
    %504 = vmatpush.xpose.msra.mxu0 0.0
    %505 = vmatpush.xpose.msra.mxu0 0.0
    %v506 = vand.u32 %v437, 4294901760
    %v507 = vsub.f32 %v437, %v506
    %508 = vmatpush.xpose.msra.mxu0 %v507
    %v509 = vand.u32 %v434, 4294901760
    %v510 = vsub.f32 %v434, %v509
    %511 = vmatmul.f32.gmra.mxu0 %v510
    %v512 = vpop.f32.mrf.mxu0
    %v513 = vadd.f32 %v489, %v512
    %514 = vdwg.mxu0
    %515 = vmatpush.xpose.msra.mxu0 0.0
    %516 = vmatpush.xpose.msra.mxu0 0.0
    %517 = vmatpush.xpose.msra.mxu0 0.0
    %518 = vmatpush.xpose.msra.mxu0 0.0
    %519 = vmatpush.xpose.msra.mxu0 0.0
    %520 = vmatpush.xpose.msra.mxu0 0.0
    %521 = vmatpush.xpose.msra.mxu0 0.0
    %522 = vmatpush.xpose.msra.mxu0 0.0
    %523 = vmatpush.xpose.msra.mxu0 0.0
    %524 = vmatpush.xpose.msra.mxu0 0.0
    %525 = vmatpush.xpose.msra.mxu0 0.0
    %526 = vmatpush.xpose.msra.mxu0 0.0
    %527 = vmatpush.xpose.msra.mxu0 0.0
    %528 = vmatpush.xpose.msra.mxu0 0.0
    %529 = vmatpush.xpose.msra.mxu0 0.0
    %v530 = vand.u32 %v437, 4294901760
    %531 = vmatpush.xpose.msra.mxu0 %v530
    %v532 = vand.u32 %v434, 4294901760
    %v533 = vsub.f32 %v434, %v532
    %v534 = vand.u32 %v533, 4294901760
    %535 = vmatmul.f32.gmra.mxu0 %v534
    %v536 = vpop.f32.mrf.mxu0
    %v537 = vadd.f32 %v513, %v536
    %538 = vdwg.mxu0
    %539 = vmatpush.xpose.msra.mxu0 0.0
    %540 = vmatpush.xpose.msra.mxu0 0.0
    %541 = vmatpush.xpose.msra.mxu0 0.0
    %542 = vmatpush.xpose.msra.mxu0 0.0
    %543 = vmatpush.xpose.msra.mxu0 0.0
    %544 = vmatpush.xpose.msra.mxu0 0.0
    %545 = vmatpush.xpose.msra.mxu0 0.0
    %546 = vmatpush.xpose.msra.mxu0 0.0
    %547 = vmatpush.xpose.msra.mxu0 0.0
    %548 = vmatpush.xpose.msra.mxu0 0.0
    %549 = vmatpush.xpose.msra.mxu0 0.0
    %550 = vmatpush.xpose.msra.mxu0 0.0
    %551 = vmatpush.xpose.msra.mxu0 0.0
    %552 = vmatpush.xpose.msra.mxu0 0.0
    %553 = vmatpush.xpose.msra.mxu0 0.0
    %v554 = vand.u32 %v437, 4294901760
    %v555 = vsub.f32 %v437, %v554
    %v556 = vand.u32 %v555, 4294901760
    %557 = vmatpush.xpose.msra.mxu0 %v556
    %v558 = vand.u32 %v434, 4294901760
    %559 = vmatmul.f32.gmra.mxu0 %v558
    %v560 = vpop.f32.mrf.mxu0
    %v561 = vadd.f32 %v537, %v560
    %562 = vdwg.mxu0
    %563 = vmatpush.xpose.msra.mxu0 0.0
    %564 = vmatpush.xpose.msra.mxu0 0.0
    %565 = vmatpush.xpose.msra.mxu0 0.0
    %566 = vmatpush.xpose.msra.mxu0 0.0
    %567 = vmatpush.xpose.msra.mxu0 0.0
    %568 = vmatpush.xpose.msra.mxu0 0.0
    %569 = vmatpush.xpose.msra.mxu0 0.0
    %570 = vmatpush.xpose.msra.mxu0 0.0
    %571 = vmatpush.xpose.msra.mxu0 0.0
    %572 = vmatpush.xpose.msra.mxu0 0.0
    %573 = vmatpush.xpose.msra.mxu0 0.0
    %574 = vmatpush.xpose.msra.mxu0 0.0
    %575 = vmatpush.xpose.msra.mxu0 0.0
    %576 = vmatpush.xpose.msra.mxu0 0.0
    %577 = vmatpush.xpose.msra.mxu0 0.0
    %v578 = vand.u32 %v437, 4294901760
    %579 = vmatpush.xpose.msra.mxu0 %v578
    %v580 = vand.u32 %v434, 4294901760
    %581 = vmatmul.f32.gmra.mxu0 %v580
    %v582 = vpop.f32.mrf.mxu0
    %v583 = vadd.f32 %v561, %v582
    %584 = vdwg.mxu0
    %vm585 = vcmask 57344
    %v586 = vsel %vm585, %v583, -inf
    %587 = vmax.xlane.f32.xlu0 %v586
    %v588 = vpop.xlane.xlu0 %587
    %v589 = vsub.f32 %v583, %v588
    %v590 = vmul.f32 %v589, 1.442695
    %v591 = vpow.pop %v590
    %v592 = vsel %vm585, %v591, 0.0
    %593 = vadd.xlane.f32.xlu0 %v592
    %v594 = vpop.xlane.xlu0 %593
    %vm595 = vcmask 64512
    %v597 = vsel %vm595, %v591, 0
    %599 = vmatpush.msra.mxu0 0.0
    %600 = vmatpush.msra.mxu0 0.0
    %601 = vmatpush.msra.mxu0 0.0
    %602 = vmatpush.msra.mxu0 0.0
    %603 = vmatpush.msra.mxu0 0.0
    %604 = vmatpush.msra.mxu0 0.0
    %605 = vmatpush.msra.mxu0 0.0
    %606 = vmatpush.msra.mxu0 0.0
    %607 = vmatpush.msra.mxu0 0.0
    %608 = vmatpush.msra.mxu0 0.0
    %609 = vmatpush.msra.mxu0 0.0
    %610 = vmatpush.msra.mxu0 0.0
    %611 = vmatpush.msra.mxu0 0.0
    %612 = vmatpush.msra.mxu0 0.0
    %613 = vmatpush.msra.mxu0 0.0
    %v614 = vand.u32 %v45, 4294901760
    %615 = vmatpush.msra.mxu0 %v614
    %v616 = vand.u32 %v597, 4294901760
    %v617 = vsub.f32 %v597, %v616
    %v618 = vand.u32 %v617, 4294901760
    %v619 = vsub.f32 %v617, %v618
    %v620 = vand.u32 %v619, 4294901760
    %621 = vmatmul.f32.gmra.mxu0 %v620
    %v622 = vpop.f32.mrf.mxu0
    %v623 = vadd.f32 0.0, %v622
    %624 = vdwg.mxu0
    %625 = vmatpush.msra.mxu0 0.0
    %626 = vmatpush.msra.mxu0 0.0
    %627 = vmatpush.msra.mxu0 0.0
    %628 = vmatpush.msra.mxu0 0.0
    %629 = vmatpush.msra.mxu0 0.0
    %630 = vmatpush.msra.mxu0 0.0
    %631 = vmatpush.msra.mxu0 0.0
    %632 = vmatpush.msra.mxu0 0.0
    %633 = vmatpush.msra.mxu0 0.0
    %634 = vmatpush.msra.mxu0 0.0
    %635 = vmatpush.msra.mxu0 0.0
    %636 = vmatpush.msra.mxu0 0.0
    %637 = vmatpush.msra.mxu0 0.0
    %638 = vmatpush.msra.mxu0 0.0
    %639 = vmatpush.msra.mxu0 0.0
    %v640 = vand.u32 %v45, 4294901760
    %v641 = vsub.f32 %v45, %v640
    %v642 = vand.u32 %v641, 4294901760
    %v643 = vsub.f32 %v641, %v642
    %v644 = vand.u32 %v643, 4294901760
    %645 = vmatpush.msra.mxu0 %v644
    %v646 = vand.u32 %v597, 4294901760
    %647 = vmatmul.f32.gmra.mxu0 %v646
    %v648 = vpop.f32.mrf.mxu0
    %v649 = vadd.f32 %v623, %v648
    %650 = vdwg.mxu0
    %651 = vmatpush.msra.mxu0 0.0
    %652 = vmatpush.msra.mxu0 0.0
    %653 = vmatpush.msra.mxu0 0.0
    %654 = vmatpush.msra.mxu0 0.0
    %655 = vmatpush.msra.mxu0 0.0
    %656 = vmatpush.msra.mxu0 0.0
    %657 = vmatpush.msra.mxu0 0.0
    %658 = vmatpush.msra.mxu0 0.0
    %659 = vmatpush.msra.mxu0 0.0
    %660 = vmatpush.msra.mxu0 0.0
    %661 = vmatpush.msra.mxu0 0.0
    %662 = vmatpush.msra.mxu0 0.0
    %663 = vmatpush.msra.mxu0 0.0
    %664 = vmatpush.msra.mxu0 0.0
    %665 = vmatpush.msra.mxu0 0.0
    %v666 = vand.u32 %v45, 4294901760
    %v667 = vsub.f32 %v45, %v666
    %668 = vmatpush.msra.mxu0 %v667
    %v669 = vand.u32 %v597, 4294901760
    %v670 = vsub.f32 %v597, %v669
    %671 = vmatmul.f32.gmra.mxu0 %v670
    %v672 = vpop.f32.mrf.mxu0
    %v673 = vadd.f32 %v649, %v672
    %674 = vdwg.mxu0
    %675 = vmatpush.msra.mxu0 0.0
    %676 = vmatpush.msra.mxu0 0.0
    %677 = vmatpush.msra.mxu0 0.0
    %678 = vmatpush.msra.mxu0 0.0
    %679 = vmatpush.msra.mxu0 0.0
    %680 = vmatpush.msra.mxu0 0.0
    %681 = vmatpush.msra.mxu0 0.0
    %682 = vmatpush.msra.mxu0 0.0
    %683 = vmatpush.msra.mxu0 0.0
    %684 = vmatpush.msra.mxu0 0.0
    %685 = vmatpush.msra.mxu0 0.0
    %686 = vmatpush.msra.mxu0 0.0
    %687 = vmatpush.msra.mxu0 0.0
    %688 = vmatpush.msra.mxu0 0.0
    %689 = vmatpush.msra.mxu0 0.0
    %v690 = vand.u32 %v45, 4294901760
    %691 = vmatpush.msra.mxu0 %v690
    %v692 = vand.u32 %v597, 4294901760
    %v693 = vsub.f32 %v597, %v692
    %v694 = vand.u32 %v693, 4294901760
    %695 = vmatmul.f32.gmra.mxu0 %v694
    %v696 = vpop.f32.mrf.mxu0
    %v697 = vadd.f32 %v673, %v696
    %698 = vdwg.mxu0
    %699 = vmatpush.msra.mxu0 0.0
    %700 = vmatpush.msra.mxu0 0.0
    %701 = vmatpush.msra.mxu0 0.0
    %702 = vmatpush.msra.mxu0 0.0
    %703 = vmatpush.msra.mxu0 0.0
    %704 = vmatpush.msra.mxu0 0.0
    %705 = vmatpush.msra.mxu0 0.0
    %706 = vmatpush.msra.mxu0 0.0
    %707 = vmatpush.msra.mxu0 0.0
    %708 = vmatpush.msra.mxu0 0.0
    %709 = vmatpush.msra.mxu0 0.0
    %710 = vmatpush.msra.mxu0 0.0
    %711 = vmatpush.msra.mxu0 0.0
    %712 = vmatpush.msra.mxu0 0.0
    %713 = vmatpush.msra.mxu0 0.0
    %v714 = vand.u32 %v45, 4294901760
    %v715 = vsub.f32 %v45, %v714
    %v716 = vand.u32 %v715, 4294901760
    %717 = vmatpush.msra.mxu0 %v716
    %v718 = vand.u32 %v597, 4294901760
    %719 = vmatmul.f32.gmra.mxu0 %v718
    %v720 = vpop.f32.mrf.mxu0
    %v721 = vadd.f32 %v697, %v720
    %722 = vdwg.mxu0
    %723 = vmatpush.msra.mxu0 0.0
    %724 = vmatpush.msra.mxu0 0.0
    %725 = vmatpush.msra.mxu0 0.0
    %726 = vmatpush.msra.mxu0 0.0
    %727 = vmatpush.msra.mxu0 0.0
    %728 = vmatpush.msra.mxu0 0.0
    %729 = vmatpush.msra.mxu0 0.0
    %730 = vmatpush.msra.mxu0 0.0
    %731 = vmatpush.msra.mxu0 0.0
    %732 = vmatpush.msra.mxu0 0.0
    %733 = vmatpush.msra.mxu0 0.0
    %734 = vmatpush.msra.mxu0 0.0
    %735 = vmatpush.msra.mxu0 0.0
    %736 = vmatpush.msra.mxu0 0.0
    %737 = vmatpush.msra.mxu0 0.0
    %v738 = vand.u32 %v45, 4294901760
    %739 = vmatpush.msra.mxu0 %v738
    %v740 = vand.u32 %v597, 4294901760
    %741 = vmatmul.f32.gmra.mxu0 %v740
    %v742 = vpop.f32.mrf.mxu0
    %v743 = vadd.f32 %v721, %v742
    %744 = vdwg.mxu0
    %v745 = vrcp.pop %v594
    %v746 = vmul.f32 %v594, %v745
    %v747 = vsub.f32 1.0, %v746
    %v748 = vmul.f32 %v745, %v747
    %v749 = vadd.f32 %v745, %v748
    %vm750 = vweird.f32 %v594
    %vm751 = vweird.f32 %v745
    %vm752 = vmor %vm750, %vm751
    %v753 = vsel %vm752, %v745, %v749
    %v754 = vand.u32 2147483647, %v594
    %vm755 = vcmp.eq.f32.partialorder %v754, 8.507059e+37
    %v756 = vand.u32 %v594, 2147483648
    %v757 = vor.u32 1.1754944e-38, %v756
    %v758 = vsel %vm755, %v757, %v753
    %v759 = vmul.f32 %v743, %v758
    %s760 = sld [smem:[#allocation4]]
    %v761 = vlaneseq
    %v762 = vand.u32 %v761, 127
    %v763 = vstv %s760
    %vm764 = vcmp.eq.s32.totalorder %v762, %v763
    %v765 = vsel %vm764, 1, 0
    %v766 = vcvt.s32.f32 %v765
    %v767 = vld [vmem:[%s2] sm:$0xff]
    %v768 = vld [vmem:[%s2 + $0x8] sm:$0xff]
    %v769 = vld [vmem:[%s2 + $0x10] sm:$0xff]
    %v770 = vld [vmem:[%s2 + $0x18] sm:$0xff]
    %v771 = vld [vmem:[%s2 + $0x20] sm:$0xff]
    %v772 = vld [vmem:[%s2 + $0x28] sm:$0xff]
    %v773 = vld [vmem:[%s2 + $0x30] sm:$0xff]
    %v774 = vld [vmem:[%s2 + $0x38] sm:$0xff]
    %vm775 = vcmask 523264
    %v777 = vsel %vm775, %v766, 0
    %779 = vmatpush.msra.mxu0 0.0
    %780 = vmatpush.msra.mxu0 0.0
    %781 = vmatpush.msra.mxu0 0.0
    %782 = vmatpush.msra.mxu0 0.0
    %783 = vmatpush.msra.mxu0 0.0
    %784 = vmatpush.msra.mxu0 0.0
    %785 = vmatpush.msra.mxu0 0.0
    %786 = vmatpush.msra.mxu0 0.0
    %v787 = vand.u32 %v774, 4294901760
    %788 = vmatpush.msra.mxu0 %v787
    %v789 = vand.u32 %v773, 4294901760
    %790 = vmatpush.msra.mxu0 %v789
    %v791 = vand.u32 %v772, 4294901760
    %792 = vmatpush.msra.mxu0 %v791
    %v793 = vand.u32 %v771, 4294901760
    %794 = vmatpush.msra.mxu0 %v793
    %v795 = vand.u32 %v770, 4294901760
    %796 = vmatpush.msra.mxu0 %v795
    %v797 = vand.u32 %v769, 4294901760
    %798 = vmatpush.msra.mxu0 %v797
    %v799 = vand.u32 %v768, 4294901760
    %800 = vmatpush.msra.mxu0 %v799
    %v801 = vand.u32 %v767, 4294901760
    %802 = vmatpush.msra.mxu0 %v801
    %v803 = vand.u32 %v777, 4294901760
    %v804 = vsub.f32 %v777, %v803
    %v805 = vand.u32 %v804, 4294901760
    %v806 = vsub.f32 %v804, %v805
    %v807 = vand.u32 %v806, 4294901760
    %808 = vmatmul.f32.gmra.mxu0 %v807
    %v809 = vpop.f32.mrf.mxu0
    %v810 = vadd.f32 0.0, %v809
    %811 = vdwg.mxu0
    %812 = vmatpush.msra.mxu0 0.0
    %813 = vmatpush.msra.mxu0 0.0
    %814 = vmatpush.msra.mxu0 0.0
    %815 = vmatpush.msra.mxu0 0.0
    %816 = vmatpush.msra.mxu0 0.0
    %817 = vmatpush.msra.mxu0 0.0
    %818 = vmatpush.msra.mxu0 0.0
    %819 = vmatpush.msra.mxu0 0.0
    %v820 = vand.u32 %v774, 4294901760
    %v821 = vsub.f32 %v774, %v820
    %v822 = vand.u32 %v821, 4294901760
    %v823 = vsub.f32 %v821, %v822
    %v824 = vand.u32 %v823, 4294901760
    %825 = vmatpush.msra.mxu0 %v824
    %v826 = vand.u32 %v773, 4294901760
    %v827 = vsub.f32 %v773, %v826
    %v828 = vand.u32 %v827, 4294901760
    %v829 = vsub.f32 %v827, %v828
    %v830 = vand.u32 %v829, 4294901760
    %831 = vmatpush.msra.mxu0 %v830
    %v832 = vand.u32 %v772, 4294901760
    %v833 = vsub.f32 %v772, %v832
    %v834 = vand.u32 %v833, 4294901760
    %v835 = vsub.f32 %v833, %v834
    %v836 = vand.u32 %v835, 4294901760
    %837 = vmatpush.msra.mxu0 %v836
    %v838 = vand.u32 %v771, 4294901760
    %v839 = vsub.f32 %v771, %v838
    %v840 = vand.u32 %v839, 4294901760
    %v841 = vsub.f32 %v839, %v840
    %v842 = vand.u32 %v841, 4294901760
    %843 = vmatpush.msra.mxu0 %v842
    %v844 = vand.u32 %v770, 4294901760
    %v845 = vsub.f32 %v770, %v844
    %v846 = vand.u32 %v845, 4294901760
    %v847 = vsub.f32 %v845, %v846
    %v848 = vand.u32 %v847, 4294901760
    %849 = vmatpush.msra.mxu0 %v848
    %v850 = vand.u32 %v769, 4294901760
    %v851 = vsub.f32 %v769, %v850
    %v852 = vand.u32 %v851, 4294901760
    %v853 = vsub.f32 %v851, %v852
    %v854 = vand.u32 %v853, 4294901760
    %855 = vmatpush.msra.mxu0 %v854
    %v856 = vand.u32 %v768, 4294901760
    %v857 = vsub.f32 %v768, %v856
    %v858 = vand.u32 %v857, 4294901760
    %v859 = vsub.f32 %v857, %v858
    %v860 = vand.u32 %v859, 4294901760
    %861 = vmatpush.msra.mxu0 %v860
    %v862 = vand.u32 %v767, 4294901760
    %v863 = vsub.f32 %v767, %v862
    %v864 = vand.u32 %v863, 4294901760
    %v865 = vsub.f32 %v863, %v864
    %v866 = vand.u32 %v865, 4294901760
    %867 = vmatpush.msra.mxu0 %v866
    %v868 = vand.u32 %v777, 4294901760
    %869 = vmatmul.f32.gmra.mxu0 %v868
    %v870 = vpop.f32.mrf.mxu0
    %v871 = vadd.f32 %v810, %v870
    %872 = vdwg.mxu0
    %873 = vmatpush.msra.mxu0 0.0
    %874 = vmatpush.msra.mxu0 0.0
    %875 = vmatpush.msra.mxu0 0.0
    %876 = vmatpush.msra.mxu0 0.0
    %877 = vmatpush.msra.mxu0 0.0
    %878 = vmatpush.msra.mxu0 0.0
    %879 = vmatpush.msra.mxu0 0.0
    %880 = vmatpush.msra.mxu0 0.0
    %v881 = vand.u32 %v774, 4294901760
    %v882 = vsub.f32 %v774, %v881
    %883 = vmatpush.msra.mxu0 %v882
    %v884 = vand.u32 %v773, 4294901760
    %v885 = vsub.f32 %v773, %v884
    %886 = vmatpush.msra.mxu0 %v885
    %v887 = vand.u32 %v772, 4294901760
    %v888 = vsub.f32 %v772, %v887
    %889 = vmatpush.msra.mxu0 %v888
    %v890 = vand.u32 %v771, 4294901760
    %v891 = vsub.f32 %v771, %v890
    %892 = vmatpush.msra.mxu0 %v891
    %v893 = vand.u32 %v770, 4294901760
    %v894 = vsub.f32 %v770, %v893
    %895 = vmatpush.msra.mxu0 %v894
    %v896 = vand.u32 %v769, 4294901760
    %v897 = vsub.f32 %v769, %v896
    %898 = vmatpush.msra.mxu0 %v897
    %v899 = vand.u32 %v768, 4294901760
    %v900 = vsub.f32 %v768, %v899
    %901 = vmatpush.msra.mxu0 %v900
    %v902 = vand.u32 %v767, 4294901760
    %v903 = vsub.f32 %v767, %v902
    %904 = vmatpush.msra.mxu0 %v903
    %v905 = vand.u32 %v777, 4294901760
    %v906 = vsub.f32 %v777, %v905
    %907 = vmatmul.f32.gmra.mxu0 %v906
    %v908 = vpop.f32.mrf.mxu0
    %v909 = vadd.f32 %v871, %v908
    %910 = vdwg.mxu0
    %911 = vmatpush.msra.mxu0 0.0
    %912 = vmatpush.msra.mxu0 0.0
    %913 = vmatpush.msra.mxu0 0.0
    %914 = vmatpush.msra.mxu0 0.0
    %915 = vmatpush.msra.mxu0 0.0
    %916 = vmatpush.msra.mxu0 0.0
    %917 = vmatpush.msra.mxu0 0.0
    %918 = vmatpush.msra.mxu0 0.0
    %v919 = vand.u32 %v774, 4294901760
    %920 = vmatpush.msra.mxu0 %v919
    %v921 = vand.u32 %v773, 4294901760
    %922 = vmatpush.msra.mxu0 %v921
    %v923 = vand.u32 %v772, 4294901760
    %924 = vmatpush.msra.mxu0 %v923
    %v925 = vand.u32 %v771, 4294901760
    %926 = vmatpush.msra.mxu0 %v925
    %v927 = vand.u32 %v770, 4294901760
    %928 = vmatpush.msra.mxu0 %v927
    %v929 = vand.u32 %v769, 4294901760
    %930 = vmatpush.msra.mxu0 %v929
    %v931 = vand.u32 %v768, 4294901760
    %932 = vmatpush.msra.mxu0 %v931
    %v933 = vand.u32 %v767, 4294901760
    %934 = vmatpush.msra.mxu0 %v933
    %v935 = vand.u32 %v777, 4294901760
    %v936 = vsub.f32 %v777, %v935
    %v937 = vand.u32 %v936, 4294901760
    %938 = vmatmul.f32.gmra.mxu0 %v937
    %v939 = vpop.f32.mrf.mxu0
    %v940 = vadd.f32 %v909, %v939
    %941 = vdwg.mxu0
    %942 = vmatpush.msra.mxu0 0.0
    %943 = vmatpush.msra.mxu0 0.0
    %944 = vmatpush.msra.mxu0 0.0
    %945 = vmatpush.msra.mxu0 0.0
    %946 = vmatpush.msra.mxu0 0.0
    %947 = vmatpush.msra.mxu0 0.0
    %948 = vmatpush.msra.mxu0 0.0
    %949 = vmatpush.msra.mxu0 0.0
    %v950 = vand.u32 %v774, 4294901760
    %v951 = vsub.f32 %v774, %v950
    %v952 = vand.u32 %v951, 4294901760
    %953 = vmatpush.msra.mxu0 %v952
    %v954 = vand.u32 %v773, 4294901760
    %v955 = vsub.f32 %v773, %v954
    %v956 = vand.u32 %v955, 4294901760
    %957 = vmatpush.msra.mxu0 %v956
    %v958 = vand.u32 %v772, 4294901760
    %v959 = vsub.f32 %v772, %v958
    %v960 = vand.u32 %v959, 4294901760
    %961 = vmatpush.msra.mxu0 %v960
    %v962 = vand.u32 %v771, 4294901760
    %v963 = vsub.f32 %v771, %v962
    %v964 = vand.u32 %v963, 4294901760
    %965 = vmatpush.msra.mxu0 %v964
    %v966 = vand.u32 %v770, 4294901760
    %v967 = vsub.f32 %v770, %v966
    %v968 = vand.u32 %v967, 4294901760
    %969 = vmatpush.msra.mxu0 %v968
    %v970 = vand.u32 %v769, 4294901760
    %v971 = vsub.f32 %v769, %v970
    %v972 = vand.u32 %v971, 4294901760
    %973 = vmatpush.msra.mxu0 %v972
    %v974 = vand.u32 %v768, 4294901760
    %v975 = vsub.f32 %v768, %v974
    %v976 = vand.u32 %v975, 4294901760
    %977 = vmatpush.msra.mxu0 %v976
    %v978 = vand.u32 %v767, 4294901760
    %v979 = vsub.f32 %v767, %v978
    %v980 = vand.u32 %v979, 4294901760
    %981 = vmatpush.msra.mxu0 %v980
    %v982 = vand.u32 %v777, 4294901760
    %983 = vmatmul.f32.gmra.mxu0 %v982
    %v984 = vpop.f32.mrf.mxu0
    %v985 = vadd.f32 %v940, %v984
    %986 = vdwg.mxu0
    %987 = vmatpush.msra.mxu0 0.0
    %988 = vmatpush.msra.mxu0 0.0
    %989 = vmatpush.msra.mxu0 0.0
    %990 = vmatpush.msra.mxu0 0.0
    %991 = vmatpush.msra.mxu0 0.0
    %992 = vmatpush.msra.mxu0 0.0
    %993 = vmatpush.msra.mxu0 0.0
    %994 = vmatpush.msra.mxu0 0.0
    %v995 = vand.u32 %v774, 4294901760
    %996 = vmatpush.msra.mxu0 %v995
    %v997 = vand.u32 %v773, 4294901760
    %998 = vmatpush.msra.mxu0 %v997
    %v999 = vand.u32 %v772, 4294901760
    %1000 = vmatpush.msra.mxu0 %v999
    %v1001 = vand.u32 %v771, 4294901760
    %1002 = vmatpush.msra.mxu0 %v1001
    %v1003 = vand.u32 %v770, 4294901760
    %1004 = vmatpush.msra.mxu0 %v1003
    %v1005 = vand.u32 %v769, 4294901760
    %1006 = vmatpush.msra.mxu0 %v1005
    %v1007 = vand.u32 %v768, 4294901760
    %1008 = vmatpush.msra.mxu0 %v1007
    %v1009 = vand.u32 %v767, 4294901760
    %1010 = vmatpush.msra.mxu0 %v1009
    %v1011 = vand.u32 %v777, 4294901760
    %1012 = vmatmul.f32.gmra.mxu0 %v1011
    %v1013 = vpop.f32.mrf.mxu0
    %v1014 = vadd.f32 %v985, %v1013
    %1015 = vdwg.mxu0
    %v1016 = vld [vmem:[#allocation5 + $0x160] sm:$0x1]
    %v1017 = vld [vmem:[#allocation5 + $0x40] sm:$0xff]
    %v1018 = vld [vmem:[#allocation5 + $0x48] sm:$0xff]
    %v1019 = vld [vmem:[#allocation5 + $0x50] sm:$0xff]
    %v1020 = vld [vmem:[#allocation5 + $0x58] sm:$0xff]
    %v1021 = vld [vmem:[#allocation5 + $0x60] sm:$0xff]
    %v1022 = vld [vmem:[#allocation5 + $0x68] sm:$0xff]
    %v1023 = vld [vmem:[#allocation5 + $0x70] sm:$0xff]
    %v1024 = vld [vmem:[#allocation5 + $0x78] sm:$0xff]
    %v1026 = vsel %vm56, %v1014, 0
    %1028 = vmatpush.msra.mxu0 0.0
    %1029 = vmatpush.msra.mxu0 0.0
    %1030 = vmatpush.msra.mxu0 0.0
    %1031 = vmatpush.msra.mxu0 0.0
    %1032 = vmatpush.msra.mxu0 0.0
    %1033 = vmatpush.msra.mxu0 0.0
    %1034 = vmatpush.msra.mxu0 0.0
    %1035 = vmatpush.msra.mxu0 0.0
    %1036 = vmatpush.msra.mxu0 0.0
    %1037 = vmatpush.msra.mxu0 0.0
    %1038 = vmatpush.msra.mxu0 0.0
    %1039 = vmatpush.msra.mxu0 0.0
    %v1040 = vand.u32 %v1024, 4294901760
    %1041 = vmatpush.msra.mxu0 %v1040
    %v1042 = vand.u32 %v1023, 4294901760
    %1043 = vmatpush.msra.mxu0 %v1042
    %v1044 = vand.u32 %v1022, 4294901760
    %1045 = vmatpush.msra.mxu0 %v1044
    %v1046 = vand.u32 %v1021, 4294901760
    %1047 = vmatpush.msra.mxu0 %v1046
    %v1048 = vand.u32 %v1026, 4294901760
    %v1049 = vsub.f32 %v1026, %v1048
    %v1050 = vand.u32 %v1049, 4294901760
    %v1051 = vsub.f32 %v1049, %v1050
    %v1052 = vand.u32 %v1051, 4294901760
    %1053 = vmatmul.f32.gmra.mxu0 %v1052
    %v1054 = vpop.f32.mrf.mxu0
    %v1055 = vadd.f32 0.0, %v1054
    %1056 = vdwg.mxu0
    %1057 = vmatpush.msra.mxu0 0.0
    %1058 = vmatpush.msra.mxu0 0.0
    %1059 = vmatpush.msra.mxu0 0.0
    %1060 = vmatpush.msra.mxu0 0.0
    %1061 = vmatpush.msra.mxu0 0.0
    %1062 = vmatpush.msra.mxu0 0.0
    %1063 = vmatpush.msra.mxu0 0.0
    %1064 = vmatpush.msra.mxu0 0.0
    %1065 = vmatpush.msra.mxu0 0.0
    %1066 = vmatpush.msra.mxu0 0.0
    %1067 = vmatpush.msra.mxu0 0.0
    %1068 = vmatpush.msra.mxu0 0.0
    %v1069 = vand.u32 %v1024, 4294901760
    %v1070 = vsub.f32 %v1024, %v1069
    %v1071 = vand.u32 %v1070, 4294901760
    %v1072 = vsub.f32 %v1070, %v1071
    %v1073 = vand.u32 %v1072, 4294901760
    %1074 = vmatpush.msra.mxu0 %v1073
    %v1075 = vand.u32 %v1023, 4294901760
    %v1076 = vsub.f32 %v1023, %v1075
    %v1077 = vand.u32 %v1076, 4294901760
    %v1078 = vsub.f32 %v1076, %v1077
    %v1079 = vand.u32 %v1078, 4294901760
    %1080 = vmatpush.msra.mxu0 %v1079
    %v1081 = vand.u32 %v1022, 4294901760
    %v1082 = vsub.f32 %v1022, %v1081
    %v1083 = vand.u32 %v1082, 4294901760
    %v1084 = vsub.f32 %v1082, %v1083
    %v1085 = vand.u32 %v1084, 4294901760
    %1086 = vmatpush.msra.mxu0 %v1085
    %v1087 = vand.u32 %v1021, 4294901760
    %v1088 = vsub.f32 %v1021, %v1087
    %v1089 = vand.u32 %v1088, 4294901760
    %v1090 = vsub.f32 %v1088, %v1089
    %v1091 = vand.u32 %v1090, 4294901760
    %1092 = vmatpush.msra.mxu0 %v1091
    %v1093 = vand.u32 %v1026, 4294901760
    %1094 = vmatmul.f32.gmra.mxu0 %v1093
    %v1095 = vpop.f32.mrf.mxu0
    %v1096 = vadd.f32 %v1055, %v1095
    %1097 = vdwg.mxu0
    %1098 = vmatpush.msra.mxu0 0.0
    %1099 = vmatpush.msra.mxu0 0.0
    %1100 = vmatpush.msra.mxu0 0.0
    %1101 = vmatpush.msra.mxu0 0.0
    %1102 = vmatpush.msra.mxu0 0.0
    %1103 = vmatpush.msra.mxu0 0.0
    %1104 = vmatpush.msra.mxu0 0.0
    %1105 = vmatpush.msra.mxu0 0.0
    %1106 = vmatpush.msra.mxu0 0.0
    %1107 = vmatpush.msra.mxu0 0.0
    %1108 = vmatpush.msra.mxu0 0.0
    %1109 = vmatpush.msra.mxu0 0.0
    %v1110 = vand.u32 %v1024, 4294901760
    %v1111 = vsub.f32 %v1024, %v1110
    %1112 = vmatpush.msra.mxu0 %v1111
    %v1113 = vand.u32 %v1023, 4294901760
    %v1114 = vsub.f32 %v1023, %v1113
    %1115 = vmatpush.msra.mxu0 %v1114
    %v1116 = vand.u32 %v1022, 4294901760
    %v1117 = vsub.f32 %v1022, %v1116
    %1118 = vmatpush.msra.mxu0 %v1117
    %v1119 = vand.u32 %v1021, 4294901760
    %v1120 = vsub.f32 %v1021, %v1119
    %1121 = vmatpush.msra.mxu0 %v1120
    %v1122 = vand.u32 %v1026, 4294901760
    %v1123 = vsub.f32 %v1026, %v1122
    %1124 = vmatmul.f32.gmra.mxu0 %v1123
    %v1125 = vpop.f32.mrf.mxu0
    %v1126 = vadd.f32 %v1096, %v1125
    %1127 = vdwg.mxu0
    %1128 = vmatpush.msra.mxu0 0.0
    %1129 = vmatpush.msra.mxu0 0.0
    %1130 = vmatpush.msra.mxu0 0.0
    %1131 = vmatpush.msra.mxu0 0.0
    %1132 = vmatpush.msra.mxu0 0.0
    %1133 = vmatpush.msra.mxu0 0.0
    %1134 = vmatpush.msra.mxu0 0.0
    %1135 = vmatpush.msra.mxu0 0.0
    %1136 = vmatpush.msra.mxu0 0.0
    %1137 = vmatpush.msra.mxu0 0.0
    %1138 = vmatpush.msra.mxu0 0.0
    %1139 = vmatpush.msra.mxu0 0.0
    %v1140 = vand.u32 %v1024, 4294901760
    %1141 = vmatpush.msra.mxu0 %v1140
    %v1142 = vand.u32 %v1023, 4294901760
    %1143 = vmatpush.msra.mxu0 %v1142
    %v1144 = vand.u32 %v1022, 4294901760
    %1145 = vmatpush.msra.mxu0 %v1144
    %v1146 = vand.u32 %v1021, 4294901760
    %1147 = vmatpush.msra.mxu0 %v1146
    %v1148 = vand.u32 %v1026, 4294901760
    %v1149 = vsub.f32 %v1026, %v1148
    %v1150 = vand.u32 %v1149, 4294901760
    %1151 = vmatmul.f32.gmra.mxu0 %v1150
    %v1152 = vpop.f32.mrf.mxu0
    %v1153 = vadd.f32 %v1126, %v1152
    %1154 = vdwg.mxu0
    %1155 = vmatpush.msra.mxu0 0.0
    %1156 = vmatpush.msra.mxu0 0.0
    %1157 = vmatpush.msra.mxu0 0.0
    %1158 = vmatpush.msra.mxu0 0.0
    %1159 = vmatpush.msra.mxu0 0.0
    %1160 = vmatpush.msra.mxu0 0.0
    %1161 = vmatpush.msra.mxu0 0.0
    %1162 = vmatpush.msra.mxu0 0.0
    %1163 = vmatpush.msra.mxu0 0.0
    %1164 = vmatpush.msra.mxu0 0.0
    %1165 = vmatpush.msra.mxu0 0.0
    %1166 = vmatpush.msra.mxu0 0.0
    %v1167 = vand.u32 %v1024, 4294901760
    %v1168 = vsub.f32 %v1024, %v1167
    %v1169 = vand.u32 %v1168, 4294901760
    %1170 = vmatpush.msra.mxu0 %v1169
    %v1171 = vand.u32 %v1023, 4294901760
    %v1172 = vsub.f32 %v1023, %v1171
    %v1173 = vand.u32 %v1172, 4294901760
    %1174 = vmatpush.msra.mxu0 %v1173
    %v1175 = vand.u32 %v1022, 4294901760
    %v1176 = vsub.f32 %v1022, %v1175
    %v1177 = vand.u32 %v1176, 4294901760
    %1178 = vmatpush.msra.mxu0 %v1177
    %v1179 = vand.u32 %v1021, 4294901760
    %v1180 = vsub.f32 %v1021, %v1179
    %v1181 = vand.u32 %v1180, 4294901760
    %1182 = vmatpush.msra.mxu0 %v1181
    %v1183 = vand.u32 %v1026, 4294901760
    %1184 = vmatmul.f32.gmra.mxu0 %v1183
    %v1185 = vpop.f32.mrf.mxu0
    %v1186 = vadd.f32 %v1153, %v1185
    %1187 = vdwg.mxu0
    %1188 = vmatpush.msra.mxu0 0.0
    %1189 = vmatpush.msra.mxu0 0.0
    %1190 = vmatpush.msra.mxu0 0.0
    %1191 = vmatpush.msra.mxu0 0.0
    %1192 = vmatpush.msra.mxu0 0.0
    %1193 = vmatpush.msra.mxu0 0.0
    %1194 = vmatpush.msra.mxu0 0.0
    %1195 = vmatpush.msra.mxu0 0.0
    %1196 = vmatpush.msra.mxu0 0.0
    %1197 = vmatpush.msra.mxu0 0.0
    %1198 = vmatpush.msra.mxu0 0.0
    %1199 = vmatpush.msra.mxu0 0.0
    %v1200 = vand.u32 %v1024, 4294901760
    %1201 = vmatpush.msra.mxu0 %v1200
    %v1202 = vand.u32 %v1023, 4294901760
    %1203 = vmatpush.msra.mxu0 %v1202
    %v1204 = vand.u32 %v1022, 4294901760
    %1205 = vmatpush.msra.mxu0 %v1204
    %v1206 = vand.u32 %v1021, 4294901760
    %1207 = vmatpush.msra.mxu0 %v1206
    %v1208 = vand.u32 %v1026, 4294901760
    %1209 = vmatmul.f32.gmra.mxu0 %v1208
    %v1210 = vpop.f32.mrf.mxu0
    %v1211 = vadd.f32 %v1186, %v1210
    %1212 = vdwg.mxu0
    %v1214 = vsel %vm56, %v759, 0
    %1216 = vmatpush.msra.mxu0 0.0
    %1217 = vmatpush.msra.mxu0 0.0
    %1218 = vmatpush.msra.mxu0 0.0
    %1219 = vmatpush.msra.mxu0 0.0
    %1220 = vmatpush.msra.mxu0 0.0
    %1221 = vmatpush.msra.mxu0 0.0
    %1222 = vmatpush.msra.mxu0 0.0
    %1223 = vmatpush.msra.mxu0 0.0
    %1224 = vmatpush.msra.mxu0 0.0
    %1225 = vmatpush.msra.mxu0 0.0
    %1226 = vmatpush.msra.mxu0 0.0
    %1227 = vmatpush.msra.mxu0 0.0
    %v1228 = vand.u32 %v1020, 4294901760
    %1229 = vmatpush.msra.mxu0 %v1228
    %v1230 = vand.u32 %v1019, 4294901760
    %1231 = vmatpush.msra.mxu0 %v1230
    %v1232 = vand.u32 %v1018, 4294901760
    %1233 = vmatpush.msra.mxu0 %v1232
    %v1234 = vand.u32 %v1017, 4294901760
    %1235 = vmatpush.msra.mxu0 %v1234
    %v1236 = vand.u32 %v1214, 4294901760
    %v1237 = vsub.f32 %v1214, %v1236
    %v1238 = vand.u32 %v1237, 4294901760
    %v1239 = vsub.f32 %v1237, %v1238
    %v1240 = vand.u32 %v1239, 4294901760
    %1241 = vmatmul.f32.gmra.mxu0 %v1240
    %v1242 = vpop.f32.mrf.mxu0
    %v1243 = vadd.f32 %v1211, %v1242
    %1244 = vdwg.mxu0
    %1245 = vmatpush.msra.mxu0 0.0
    %1246 = vmatpush.msra.mxu0 0.0
    %1247 = vmatpush.msra.mxu0 0.0
    %1248 = vmatpush.msra.mxu0 0.0
    %1249 = vmatpush.msra.mxu0 0.0
    %1250 = vmatpush.msra.mxu0 0.0
    %1251 = vmatpush.msra.mxu0 0.0
    %1252 = vmatpush.msra.mxu0 0.0
    %1253 = vmatpush.msra.mxu0 0.0
    %1254 = vmatpush.msra.mxu0 0.0
    %1255 = vmatpush.msra.mxu0 0.0
    %1256 = vmatpush.msra.mxu0 0.0
    %v1257 = vand.u32 %v1020, 4294901760
    %v1258 = vsub.f32 %v1020, %v1257
    %v1259 = vand.u32 %v1258, 4294901760
    %v1260 = vsub.f32 %v1258, %v1259
    %v1261 = vand.u32 %v1260, 4294901760
    %1262 = vmatpush.msra.mxu0 %v1261
    %v1263 = vand.u32 %v1019, 4294901760
    %v1264 = vsub.f32 %v1019, %v1263
    %v1265 = vand.u32 %v1264, 4294901760
    %v1266 = vsub.f32 %v1264, %v1265
    %v1267 = vand.u32 %v1266, 4294901760
    %1268 = vmatpush.msra.mxu0 %v1267
    %v1269 = vand.u32 %v1018, 4294901760
    %v1270 = vsub.f32 %v1018, %v1269
    %v1271 = vand.u32 %v1270, 4294901760
    %v1272 = vsub.f32 %v1270, %v1271
    %v1273 = vand.u32 %v1272, 4294901760
    %1274 = vmatpush.msra.mxu0 %v1273
    %v1275 = vand.u32 %v1017, 4294901760
    %v1276 = vsub.f32 %v1017, %v1275
    %v1277 = vand.u32 %v1276, 4294901760
    %v1278 = vsub.f32 %v1276, %v1277
    %v1279 = vand.u32 %v1278, 4294901760
    %1280 = vmatpush.msra.mxu0 %v1279
    %v1281 = vand.u32 %v1214, 4294901760
    %1282 = vmatmul.f32.gmra.mxu0 %v1281
    %v1283 = vpop.f32.mrf.mxu0
    %v1284 = vadd.f32 %v1243, %v1283
    %1285 = vdwg.mxu0
    %1286 = vmatpush.msra.mxu0 0.0
    %1287 = vmatpush.msra.mxu0 0.0
    %1288 = vmatpush.msra.mxu0 0.0
    %1289 = vmatpush.msra.mxu0 0.0
    %1290 = vmatpush.msra.mxu0 0.0
    %1291 = vmatpush.msra.mxu0 0.0
    %1292 = vmatpush.msra.mxu0 0.0
    %1293 = vmatpush.msra.mxu0 0.0
    %1294 = vmatpush.msra.mxu0 0.0
    %1295 = vmatpush.msra.mxu0 0.0
    %1296 = vmatpush.msra.mxu0 0.0
    %1297 = vmatpush.msra.mxu0 0.0
    %v1298 = vand.u32 %v1020, 4294901760
    %v1299 = vsub.f32 %v1020, %v1298
    %1300 = vmatpush.msra.mxu0 %v1299
    %v1301 = vand.u32 %v1019, 4294901760
    %v1302 = vsub.f32 %v1019, %v1301
    %1303 = vmatpush.msra.mxu0 %v1302
    %v1304 = vand.u32 %v1018, 4294901760
    %v1305 = vsub.f32 %v1018, %v1304
    %1306 = vmatpush.msra.mxu0 %v1305
    %v1307 = vand.u32 %v1017, 4294901760
    %v1308 = vsub.f32 %v1017, %v1307
    %1309 = vmatpush.msra.mxu0 %v1308
    %v1310 = vand.u32 %v1214, 4294901760
    %v1311 = vsub.f32 %v1214, %v1310
    %1312 = vmatmul.f32.gmra.mxu0 %v1311
    %v1313 = vpop.f32.mrf.mxu0
    %v1314 = vadd.f32 %v1284, %v1313
    %1315 = vdwg.mxu0
    %1316 = vmatpush.msra.mxu0 0.0
    %1317 = vmatpush.msra.mxu0 0.0
    %1318 = vmatpush.msra.mxu0 0.0
    %1319 = vmatpush.msra.mxu0 0.0
    %1320 = vmatpush.msra.mxu0 0.0
    %1321 = vmatpush.msra.mxu0 0.0
    %1322 = vmatpush.msra.mxu0 0.0
    %1323 = vmatpush.msra.mxu0 0.0
    %1324 = vmatpush.msra.mxu0 0.0
    %1325 = vmatpush.msra.mxu0 0.0
    %1326 = vmatpush.msra.mxu0 0.0
    %1327 = vmatpush.msra.mxu0 0.0
    %v1328 = vand.u32 %v1020, 4294901760
    %1329 = vmatpush.msra.mxu0 %v1328
    %v1330 = vand.u32 %v1019, 4294901760
    %1331 = vmatpush.msra.mxu0 %v1330
    %v1332 = vand.u32 %v1018, 4294901760
    %1333 = vmatpush.msra.mxu0 %v1332
    %v1334 = vand.u32 %v1017, 4294901760
    %1335 = vmatpush.msra.mxu0 %v1334
    %v1336 = vand.u32 %v1214, 4294901760
    %v1337 = vsub.f32 %v1214, %v1336
    %v1338 = vand.u32 %v1337, 4294901760
    %1339 = vmatmul.f32.gmra.mxu0 %v1338
    %v1340 = vpop.f32.mrf.mxu0
    %v1341 = vadd.f32 %v1314, %v1340
    %1342 = vdwg.mxu0
    %1343 = vmatpush.msra.mxu0 0.0
    %1344 = vmatpush.msra.mxu0 0.0
    %1345 = vmatpush.msra.mxu0 0.0
    %1346 = vmatpush.msra.mxu0 0.0
    %1347 = vmatpush.msra.mxu0 0.0
    %1348 = vmatpush.msra.mxu0 0.0
    %1349 = vmatpush.msra.mxu0 0.0
    %1350 = vmatpush.msra.mxu0 0.0
    %1351 = vmatpush.msra.mxu0 0.0
    %1352 = vmatpush.msra.mxu0 0.0
    %1353 = vmatpush.msra.mxu0 0.0
    %1354 = vmatpush.msra.mxu0 0.0
    %v1355 = vand.u32 %v1020, 4294901760
    %v1356 = vsub.f32 %v1020, %v1355
    %v1357 = vand.u32 %v1356, 4294901760
    %1358 = vmatpush.msra.mxu0 %v1357
    %v1359 = vand.u32 %v1019, 4294901760
    %v1360 = vsub.f32 %v1019, %v1359
    %v1361 = vand.u32 %v1360, 4294901760
    %1362 = vmatpush.msra.mxu0 %v1361
    %v1363 = vand.u32 %v1018, 4294901760
    %v1364 = vsub.f32 %v1018, %v1363
    %v1365 = vand.u32 %v1364, 4294901760
    %1366 = vmatpush.msra.mxu0 %v1365
    %v1367 = vand.u32 %v1017, 4294901760
    %v1368 = vsub.f32 %v1017, %v1367
    %v1369 = vand.u32 %v1368, 4294901760
    %1370 = vmatpush.msra.mxu0 %v1369
    %v1371 = vand.u32 %v1214, 4294901760
    %1372 = vmatmul.f32.gmra.mxu0 %v1371
    %v1373 = vpop.f32.mrf.mxu0
    %v1374 = vadd.f32 %v1341, %v1373
    %1375 = vdwg.mxu0
    %1376 = vmatpush.msra.mxu0 0.0
    %1377 = vmatpush.msra.mxu0 0.0
    %1378 = vmatpush.msra.mxu0 0.0
    %1379 = vmatpush.msra.mxu0 0.0
    %1380 = vmatpush.msra.mxu0 0.0
    %1381 = vmatpush.msra.mxu0 0.0
    %1382 = vmatpush.msra.mxu0 0.0
    %1383 = vmatpush.msra.mxu0 0.0
    %1384 = vmatpush.msra.mxu0 0.0
    %1385 = vmatpush.msra.mxu0 0.0
    %1386 = vmatpush.msra.mxu0 0.0
    %1387 = vmatpush.msra.mxu0 0.0
    %v1388 = vand.u32 %v1020, 4294901760
    %1389 = vmatpush.msra.mxu0 %v1388
    %v1390 = vand.u32 %v1019, 4294901760
    %1391 = vmatpush.msra.mxu0 %v1390
    %v1392 = vand.u32 %v1018, 4294901760
    %1393 = vmatpush.msra.mxu0 %v1392
    %v1394 = vand.u32 %v1017, 4294901760
    %1395 = vmatpush.msra.mxu0 %v1394
    %v1396 = vand.u32 %v1214, 4294901760
    %1397 = vmatmul.f32.gmra.mxu0 %v1396
    %v1398 = vpop.f32.mrf.mxu0
    %v1399 = vadd.f32 %v1374, %v1398
    %1400 = vdwg.mxu0
    %v1401 = vadd.f32 %v1399, %v1016
    %v1402 = vld [vmem:[#allocation5 + $0x100] sm:$0xff]
    %v1403 = vld [vmem:[#allocation5 + $0x108] sm:$0xff]
    %v1404 = vld [vmem:[#allocation5 + $0x110] sm:$0xff]
    %v1405 = vld [vmem:[#allocation5 + $0x118] sm:$0xff]
    %v1406 = vld [vmem:[#allocation5 + $0x168] sm:$0x1]
    %1407 = vmatpush.msra.mxu0 0.0
    %1408 = vmatpush.msra.mxu0 0.0
    %1409 = vmatpush.msra.mxu0 0.0
    %1410 = vmatpush.msra.mxu0 0.0
    %1411 = vmatpush.msra.mxu0 0.0
    %1412 = vmatpush.msra.mxu0 0.0
    %1413 = vmatpush.msra.mxu0 0.0
    %1414 = vmatpush.msra.mxu0 0.0
    %1415 = vmatpush.msra.mxu0 0.0
    %1416 = vmatpush.msra.mxu0 0.0
    %1417 = vmatpush.msra.mxu0 0.0
    %1418 = vmatpush.msra.mxu0 0.0
    %v1419 = vand.u32 %v1405, 4294901760
    %1420 = vmatpush.msra.mxu0 %v1419
    %v1421 = vand.u32 %v1404, 4294901760
    %1422 = vmatpush.msra.mxu0 %v1421
    %v1423 = vand.u32 %v1403, 4294901760
    %1424 = vmatpush.msra.mxu0 %v1423
    %v1425 = vand.u32 %v1402, 4294901760
    %1426 = vmatpush.msra.mxu0 %v1425
    %v1427 = vand.u32 %v246, 4294901760
    %v1428 = vsub.f32 %v246, %v1427
    %v1429 = vand.u32 %v1428, 4294901760
    %v1430 = vsub.f32 %v1428, %v1429
    %v1431 = vand.u32 %v1430, 4294901760
    %1432 = vmatmul.f32.gmra.mxu0 %v1431
    %v1433 = vpop.f32.mrf.mxu0
    %v1434 = vadd.f32 %v1406, %v1433
    %1435 = vdwg.mxu0
    %1436 = vmatpush.msra.mxu0 0.0
    %1437 = vmatpush.msra.mxu0 0.0
    %1438 = vmatpush.msra.mxu0 0.0
    %1439 = vmatpush.msra.mxu0 0.0
    %1440 = vmatpush.msra.mxu0 0.0
    %1441 = vmatpush.msra.mxu0 0.0
    %1442 = vmatpush.msra.mxu0 0.0
    %1443 = vmatpush.msra.mxu0 0.0
    %1444 = vmatpush.msra.mxu0 0.0
    %1445 = vmatpush.msra.mxu0 0.0
    %1446 = vmatpush.msra.mxu0 0.0
    %1447 = vmatpush.msra.mxu0 0.0
    %v1448 = vand.u32 %v1405, 4294901760
    %v1449 = vsub.f32 %v1405, %v1448
    %v1450 = vand.u32 %v1449, 4294901760
    %v1451 = vsub.f32 %v1449, %v1450
    %v1452 = vand.u32 %v1451, 4294901760
    %1453 = vmatpush.msra.mxu0 %v1452
    %v1454 = vand.u32 %v1404, 4294901760
    %v1455 = vsub.f32 %v1404, %v1454
    %v1456 = vand.u32 %v1455, 4294901760
    %v1457 = vsub.f32 %v1455, %v1456
    %v1458 = vand.u32 %v1457, 4294901760
    %1459 = vmatpush.msra.mxu0 %v1458
    %v1460 = vand.u32 %v1403, 4294901760
    %v1461 = vsub.f32 %v1403, %v1460
    %v1462 = vand.u32 %v1461, 4294901760
    %v1463 = vsub.f32 %v1461, %v1462
    %v1464 = vand.u32 %v1463, 4294901760
    %1465 = vmatpush.msra.mxu0 %v1464
    %v1466 = vand.u32 %v1402, 4294901760
    %v1467 = vsub.f32 %v1402, %v1466
    %v1468 = vand.u32 %v1467, 4294901760
    %v1469 = vsub.f32 %v1467, %v1468
    %v1470 = vand.u32 %v1469, 4294901760
    %1471 = vmatpush.msra.mxu0 %v1470
    %v1472 = vand.u32 %v246, 4294901760
    %1473 = vmatmul.f32.gmra.mxu0 %v1472
    %v1474 = vpop.f32.mrf.mxu0
    %v1475 = vadd.f32 %v1434, %v1474
    %1476 = vdwg.mxu0
    %1477 = vmatpush.msra.mxu0 0.0
    %1478 = vmatpush.msra.mxu0 0.0
    %1479 = vmatpush.msra.mxu0 0.0
    %1480 = vmatpush.msra.mxu0 0.0
    %1481 = vmatpush.msra.mxu0 0.0
    %1482 = vmatpush.msra.mxu0 0.0
    %1483 = vmatpush.msra.mxu0 0.0
    %1484 = vmatpush.msra.mxu0 0.0
    %1485 = vmatpush.msra.mxu0 0.0
    %1486 = vmatpush.msra.mxu0 0.0
    %1487 = vmatpush.msra.mxu0 0.0
    %1488 = vmatpush.msra.mxu0 0.0
    %v1489 = vand.u32 %v1405, 4294901760
    %v1490 = vsub.f32 %v1405, %v1489
    %1491 = vmatpush.msra.mxu0 %v1490
    %v1492 = vand.u32 %v1404, 4294901760
    %v1493 = vsub.f32 %v1404, %v1492
    %1494 = vmatpush.msra.mxu0 %v1493
    %v1495 = vand.u32 %v1403, 4294901760
    %v1496 = vsub.f32 %v1403, %v1495
    %1497 = vmatpush.msra.mxu0 %v1496
    %v1498 = vand.u32 %v1402, 4294901760
    %v1499 = vsub.f32 %v1402, %v1498
    %1500 = vmatpush.msra.mxu0 %v1499
    %v1501 = vand.u32 %v246, 4294901760
    %v1502 = vsub.f32 %v246, %v1501
    %1503 = vmatmul.f32.gmra.mxu0 %v1502
    %v1504 = vpop.f32.mrf.mxu0
    %v1505 = vadd.f32 %v1475, %v1504
    %1506 = vdwg.mxu0
    %1507 = vmatpush.msra.mxu0 0.0
    %1508 = vmatpush.msra.mxu0 0.0
    %1509 = vmatpush.msra.mxu0 0.0
    %1510 = vmatpush.msra.mxu0 0.0
    %1511 = vmatpush.msra.mxu0 0.0
    %1512 = vmatpush.msra.mxu0 0.0
    %1513 = vmatpush.msra.mxu0 0.0
    %1514 = vmatpush.msra.mxu0 0.0
    %1515 = vmatpush.msra.mxu0 0.0
    %1516 = vmatpush.msra.mxu0 0.0
    %1517 = vmatpush.msra.mxu0 0.0
    %1518 = vmatpush.msra.mxu0 0.0
    %v1519 = vand.u32 %v1405, 4294901760
    %1520 = vmatpush.msra.mxu0 %v1519
    %v1521 = vand.u32 %v1404, 4294901760
    %1522 = vmatpush.msra.mxu0 %v1521
    %v1523 = vand.u32 %v1403, 4294901760
    %1524 = vmatpush.msra.mxu0 %v1523
    %v1525 = vand.u32 %v1402, 4294901760
    %1526 = vmatpush.msra.mxu0 %v1525
    %v1527 = vand.u32 %v246, 4294901760
    %v1528 = vsub.f32 %v246, %v1527
    %v1529 = vand.u32 %v1528, 4294901760
    %1530 = vmatmul.f32.gmra.mxu0 %v1529
    %v1531 = vpop.f32.mrf.mxu0
    %v1532 = vadd.f32 %v1505, %v1531
    %1533 = vdwg.mxu0
    %1534 = vmatpush.msra.mxu0 0.0
    %1535 = vmatpush.msra.mxu0 0.0
    %1536 = vmatpush.msra.mxu0 0.0
    %1537 = vmatpush.msra.mxu0 0.0
    %1538 = vmatpush.msra.mxu0 0.0
    %1539 = vmatpush.msra.mxu0 0.0
    %1540 = vmatpush.msra.mxu0 0.0
    %1541 = vmatpush.msra.mxu0 0.0
    %1542 = vmatpush.msra.mxu0 0.0
    %1543 = vmatpush.msra.mxu0 0.0
    %1544 = vmatpush.msra.mxu0 0.0
    %1545 = vmatpush.msra.mxu0 0.0
    %v1546 = vand.u32 %v1405, 4294901760
    %v1547 = vsub.f32 %v1405, %v1546
    %v1548 = vand.u32 %v1547, 4294901760
    %1549 = vmatpush.msra.mxu0 %v1548
    %v1550 = vand.u32 %v1404, 4294901760
    %v1551 = vsub.f32 %v1404, %v1550
    %v1552 = vand.u32 %v1551, 4294901760
    %1553 = vmatpush.msra.mxu0 %v1552
    %v1554 = vand.u32 %v1403, 4294901760
    %v1555 = vsub.f32 %v1403, %v1554
    %v1556 = vand.u32 %v1555, 4294901760
    %1557 = vmatpush.msra.mxu0 %v1556
    %v1558 = vand.u32 %v1402, 4294901760
    %v1559 = vsub.f32 %v1402, %v1558
    %v1560 = vand.u32 %v1559, 4294901760
    %1561 = vmatpush.msra.mxu0 %v1560
    %v1562 = vand.u32 %v246, 4294901760
    %1563 = vmatmul.f32.gmra.mxu0 %v1562
    %v1564 = vpop.f32.mrf.mxu0
    %v1565 = vadd.f32 %v1532, %v1564
    %1566 = vdwg.mxu0
    %1567 = vmatpush.msra.mxu0 0.0
    %1568 = vmatpush.msra.mxu0 0.0
    %1569 = vmatpush.msra.mxu0 0.0
    %1570 = vmatpush.msra.mxu0 0.0
    %1571 = vmatpush.msra.mxu0 0.0
    %1572 = vmatpush.msra.mxu0 0.0
    %1573 = vmatpush.msra.mxu0 0.0
    %1574 = vmatpush.msra.mxu0 0.0
    %1575 = vmatpush.msra.mxu0 0.0
    %1576 = vmatpush.msra.mxu0 0.0
    %1577 = vmatpush.msra.mxu0 0.0
    %1578 = vmatpush.msra.mxu0 0.0
    %v1579 = vand.u32 %v1405, 4294901760
    %1580 = vmatpush.msra.mxu0 %v1579
    %v1581 = vand.u32 %v1404, 4294901760
    %1582 = vmatpush.msra.mxu0 %v1581
    %v1583 = vand.u32 %v1403, 4294901760
    %1584 = vmatpush.msra.mxu0 %v1583
    %v1585 = vand.u32 %v1402, 4294901760
    %1586 = vmatpush.msra.mxu0 %v1585
    %v1587 = vand.u32 %v246, 4294901760
    %1588 = vmatmul.f32.gmra.mxu0 %v1587
    %v1589 = vpop.f32.mrf.mxu0
    %v1590 = vadd.f32 %v1565, %v1589
    %1591 = vdwg.mxu0
    %v1592 = vadd.f32 %v1401, %v1590
    %v1593 = vxor.u32 %v1592, 2147483648
    %v1594 = vmul.f32 %v1593, 1.442695
    %v1595 = vpow.pop %v1594
    %v1596 = vadd.f32 %v1595, 1.0
    %v1597 = vrcp.pop %v1596
    %v1598 = vmul.f32 %v1596, %v1597
    %v1599 = vsub.f32 1.0, %v1598
    %v1600 = vmul.f32 %v1597, %v1599
    %v1601 = vadd.f32 %v1597, %v1600
    %vm1602 = vweird.f32 %v1596
    %vm1603 = vweird.f32 %v1597
    %vm1604 = vmor %vm1602, %vm1603
    %v1605 = vsel %vm1604, %v1597, %v1601
    %v1606 = vand.u32 2147483647, %v1596
    %vm1607 = vcmp.eq.f32.partialorder %v1606, 8.507059e+37
    %v1608 = vand.u32 %v1596, 2147483648
    %v1609 = vor.u32 1.1754944e-38, %v1608
    %v1610 = vsel %vm1607, %v1609, %v1605
    %v1611 = vmul.f32 1.0, %v1610
    %v1612 = vld [vmem:[#allocation5 + $0x170] sm:$0x1]
    %v1613 = vld [vmem:[#allocation5 + $0x80] sm:$0xff]
    %v1614 = vld [vmem:[#allocation5 + $0x88] sm:$0xff]
    %v1615 = vld [vmem:[#allocation5 + $0x90] sm:$0xff]
    %v1616 = vld [vmem:[#allocation5 + $0x98] sm:$0xff]
    %v1617 = vld [vmem:[#allocation5 + $0xa0] sm:$0xff]
    %v1618 = vld [vmem:[#allocation5 + $0xa8] sm:$0xff]
    %v1619 = vld [vmem:[#allocation5 + $0xb0] sm:$0xff]
    %v1620 = vld [vmem:[#allocation5 + $0xb8] sm:$0xff]
    %1621 = vmatpush.msra.mxu0 0.0
    %1622 = vmatpush.msra.mxu0 0.0
    %1623 = vmatpush.msra.mxu0 0.0
    %1624 = vmatpush.msra.mxu0 0.0
    %1625 = vmatpush.msra.mxu0 0.0
    %1626 = vmatpush.msra.mxu0 0.0
    %1627 = vmatpush.msra.mxu0 0.0
    %1628 = vmatpush.msra.mxu0 0.0
    %1629 = vmatpush.msra.mxu0 0.0
    %1630 = vmatpush.msra.mxu0 0.0
    %1631 = vmatpush.msra.mxu0 0.0
    %1632 = vmatpush.msra.mxu0 0.0
    %v1633 = vand.u32 %v1620, 4294901760
    %1634 = vmatpush.msra.mxu0 %v1633
    %v1635 = vand.u32 %v1619, 4294901760
    %1636 = vmatpush.msra.mxu0 %v1635
    %v1637 = vand.u32 %v1618, 4294901760
    %1638 = vmatpush.msra.mxu0 %v1637
    %v1639 = vand.u32 %v1617, 4294901760
    %1640 = vmatpush.msra.mxu0 %v1639
    %v1641 = vand.u32 %v1026, 4294901760
    %v1642 = vsub.f32 %v1026, %v1641
    %v1643 = vand.u32 %v1642, 4294901760
    %v1644 = vsub.f32 %v1642, %v1643
    %v1645 = vand.u32 %v1644, 4294901760
    %1646 = vmatmul.f32.gmra.mxu0 %v1645
    %v1647 = vpop.f32.mrf.mxu0
    %v1648 = vadd.f32 0.0, %v1647
    %1649 = vdwg.mxu0
    %1650 = vmatpush.msra.mxu0 0.0
    %1651 = vmatpush.msra.mxu0 0.0
    %1652 = vmatpush.msra.mxu0 0.0
    %1653 = vmatpush.msra.mxu0 0.0
    %1654 = vmatpush.msra.mxu0 0.0
    %1655 = vmatpush.msra.mxu0 0.0
    %1656 = vmatpush.msra.mxu0 0.0
    %1657 = vmatpush.msra.mxu0 0.0
    %1658 = vmatpush.msra.mxu0 0.0
    %1659 = vmatpush.msra.mxu0 0.0
    %1660 = vmatpush.msra.mxu0 0.0
    %1661 = vmatpush.msra.mxu0 0.0
    %v1662 = vand.u32 %v1620, 4294901760
    %v1663 = vsub.f32 %v1620, %v1662
    %v1664 = vand.u32 %v1663, 4294901760
    %v1665 = vsub.f32 %v1663, %v1664
    %v1666 = vand.u32 %v1665, 4294901760
    %1667 = vmatpush.msra.mxu0 %v1666
    %v1668 = vand.u32 %v1619, 4294901760
    %v1669 = vsub.f32 %v1619, %v1668
    %v1670 = vand.u32 %v1669, 4294901760
    %v1671 = vsub.f32 %v1669, %v1670
    %v1672 = vand.u32 %v1671, 4294901760
    %1673 = vmatpush.msra.mxu0 %v1672
    %v1674 = vand.u32 %v1618, 4294901760
    %v1675 = vsub.f32 %v1618, %v1674
    %v1676 = vand.u32 %v1675, 4294901760
    %v1677 = vsub.f32 %v1675, %v1676
    %v1678 = vand.u32 %v1677, 4294901760
    %1679 = vmatpush.msra.mxu0 %v1678
    %v1680 = vand.u32 %v1617, 4294901760
    %v1681 = vsub.f32 %v1617, %v1680
    %v1682 = vand.u32 %v1681, 4294901760
    %v1683 = vsub.f32 %v1681, %v1682
    %v1684 = vand.u32 %v1683, 4294901760
    %1685 = vmatpush.msra.mxu0 %v1684
    %v1686 = vand.u32 %v1026, 4294901760
    %1687 = vmatmul.f32.gmra.mxu0 %v1686
    %v1688 = vpop.f32.mrf.mxu0
    %v1689 = vadd.f32 %v1648, %v1688
    %1690 = vdwg.mxu0
    %1691 = vmatpush.msra.mxu0 0.0
    %1692 = vmatpush.msra.mxu0 0.0
    %1693 = vmatpush.msra.mxu0 0.0
    %1694 = vmatpush.msra.mxu0 0.0
    %1695 = vmatpush.msra.mxu0 0.0
    %1696 = vmatpush.msra.mxu0 0.0
    %1697 = vmatpush.msra.mxu0 0.0
    %1698 = vmatpush.msra.mxu0 0.0
    %1699 = vmatpush.msra.mxu0 0.0
    %1700 = vmatpush.msra.mxu0 0.0
    %1701 = vmatpush.msra.mxu0 0.0
    %1702 = vmatpush.msra.mxu0 0.0
    %v1703 = vand.u32 %v1620, 4294901760
    %v1704 = vsub.f32 %v1620, %v1703
    %1705 = vmatpush.msra.mxu0 %v1704
    %v1706 = vand.u32 %v1619, 4294901760
    %v1707 = vsub.f32 %v1619, %v1706
    %1708 = vmatpush.msra.mxu0 %v1707
    %v1709 = vand.u32 %v1618, 4294901760
    %v1710 = vsub.f32 %v1618, %v1709
    %1711 = vmatpush.msra.mxu0 %v1710
    %v1712 = vand.u32 %v1617, 4294901760
    %v1713 = vsub.f32 %v1617, %v1712
    %1714 = vmatpush.msra.mxu0 %v1713
    %v1715 = vand.u32 %v1026, 4294901760
    %v1716 = vsub.f32 %v1026, %v1715
    %1717 = vmatmul.f32.gmra.mxu0 %v1716
    %v1718 = vpop.f32.mrf.mxu0
    %v1719 = vadd.f32 %v1689, %v1718
    %1720 = vdwg.mxu0
    %1721 = vmatpush.msra.mxu0 0.0
    %1722 = vmatpush.msra.mxu0 0.0
    %1723 = vmatpush.msra.mxu0 0.0
    %1724 = vmatpush.msra.mxu0 0.0
    %1725 = vmatpush.msra.mxu0 0.0
    %1726 = vmatpush.msra.mxu0 0.0
    %1727 = vmatpush.msra.mxu0 0.0
    %1728 = vmatpush.msra.mxu0 0.0
    %1729 = vmatpush.msra.mxu0 0.0
    %1730 = vmatpush.msra.mxu0 0.0
    %1731 = vmatpush.msra.mxu0 0.0
    %1732 = vmatpush.msra.mxu0 0.0
    %v1733 = vand.u32 %v1620, 4294901760
    %1734 = vmatpush.msra.mxu0 %v1733
    %v1735 = vand.u32 %v1619, 4294901760
    %1736 = vmatpush.msra.mxu0 %v1735
    %v1737 = vand.u32 %v1618, 4294901760
    %1738 = vmatpush.msra.mxu0 %v1737
    %v1739 = vand.u32 %v1617, 4294901760
    %1740 = vmatpush.msra.mxu0 %v1739
    %v1741 = vand.u32 %v1026, 4294901760
    %v1742 = vsub.f32 %v1026, %v1741
    %v1743 = vand.u32 %v1742, 4294901760
    %1744 = vmatmul.f32.gmra.mxu0 %v1743
    %v1745 = vpop.f32.mrf.mxu0
    %v1746 = vadd.f32 %v1719, %v1745
    %1747 = vdwg.mxu0
    %1748 = vmatpush.msra.mxu0 0.0
    %1749 = vmatpush.msra.mxu0 0.0
    %1750 = vmatpush.msra.mxu0 0.0
    %1751 = vmatpush.msra.mxu0 0.0
    %1752 = vmatpush.msra.mxu0 0.0
    %1753 = vmatpush.msra.mxu0 0.0
    %1754 = vmatpush.msra.mxu0 0.0
    %1755 = vmatpush.msra.mxu0 0.0
    %1756 = vmatpush.msra.mxu0 0.0
    %1757 = vmatpush.msra.mxu0 0.0
    %1758 = vmatpush.msra.mxu0 0.0
    %1759 = vmatpush.msra.mxu0 0.0
    %v1760 = vand.u32 %v1620, 4294901760
    %v1761 = vsub.f32 %v1620, %v1760
    %v1762 = vand.u32 %v1761, 4294901760
    %1763 = vmatpush.msra.mxu0 %v1762
    %v1764 = vand.u32 %v1619, 4294901760
    %v1765 = vsub.f32 %v1619, %v1764
    %v1766 = vand.u32 %v1765, 4294901760
    %1767 = vmatpush.msra.mxu0 %v1766
    %v1768 = vand.u32 %v1618, 4294901760
    %v1769 = vsub.f32 %v1618, %v1768
    %v1770 = vand.u32 %v1769, 4294901760
    %1771 = vmatpush.msra.mxu0 %v1770
    %v1772 = vand.u32 %v1617, 4294901760
    %v1773 = vsub.f32 %v1617, %v1772
    %v1774 = vand.u32 %v1773, 4294901760
    %1775 = vmatpush.msra.mxu0 %v1774
    %v1776 = vand.u32 %v1026, 4294901760
    %1777 = vmatmul.f32.gmra.mxu0 %v1776
    %v1778 = vpop.f32.mrf.mxu0
    %v1779 = vadd.f32 %v1746, %v1778
    %1780 = vdwg.mxu0
    %1781 = vmatpush.msra.mxu0 0.0
    %1782 = vmatpush.msra.mxu0 0.0
    %1783 = vmatpush.msra.mxu0 0.0
    %1784 = vmatpush.msra.mxu0 0.0
    %1785 = vmatpush.msra.mxu0 0.0
    %1786 = vmatpush.msra.mxu0 0.0
    %1787 = vmatpush.msra.mxu0 0.0
    %1788 = vmatpush.msra.mxu0 0.0
    %1789 = vmatpush.msra.mxu0 0.0
    %1790 = vmatpush.msra.mxu0 0.0
    %1791 = vmatpush.msra.mxu0 0.0
    %1792 = vmatpush.msra.mxu0 0.0
    %v1793 = vand.u32 %v1620, 4294901760
    %1794 = vmatpush.msra.mxu0 %v1793
    %v1795 = vand.u32 %v1619, 4294901760
    %1796 = vmatpush.msra.mxu0 %v1795
    %v1797 = vand.u32 %v1618, 4294901760
    %1798 = vmatpush.msra.mxu0 %v1797
    %v1799 = vand.u32 %v1617, 4294901760
    %1800 = vmatpush.msra.mxu0 %v1799
    %v1801 = vand.u32 %v1026, 4294901760
    %1802 = vmatmul.f32.gmra.mxu0 %v1801
    %v1803 = vpop.f32.mrf.mxu0
    %v1804 = vadd.f32 %v1779, %v1803
    %1805 = vdwg.mxu0
    %1806 = vmatpush.msra.mxu0 0.0
    %1807 = vmatpush.msra.mxu0 0.0
    %1808 = vmatpush.msra.mxu0 0.0
    %1809 = vmatpush.msra.mxu0 0.0
    %1810 = vmatpush.msra.mxu0 0.0
    %1811 = vmatpush.msra.mxu0 0.0
    %1812 = vmatpush.msra.mxu0 0.0
    %1813 = vmatpush.msra.mxu0 0.0
    %1814 = vmatpush.msra.mxu0 0.0
    %1815 = vmatpush.msra.mxu0 0.0
    %1816 = vmatpush.msra.mxu0 0.0
    %1817 = vmatpush.msra.mxu0 0.0
    %v1818 = vand.u32 %v1616, 4294901760
    %1819 = vmatpush.msra.mxu0 %v1818
    %v1820 = vand.u32 %v1615, 4294901760
    %1821 = vmatpush.msra.mxu0 %v1820
    %v1822 = vand.u32 %v1614, 4294901760
    %1823 = vmatpush.msra.mxu0 %v1822
    %v1824 = vand.u32 %v1613, 4294901760
    %1825 = vmatpush.msra.mxu0 %v1824
    %v1826 = vand.u32 %v1214, 4294901760
    %v1827 = vsub.f32 %v1214, %v1826
    %v1828 = vand.u32 %v1827, 4294901760
    %v1829 = vsub.f32 %v1827, %v1828
    %v1830 = vand.u32 %v1829, 4294901760
    %1831 = vmatmul.f32.gmra.mxu0 %v1830
    %v1832 = vpop.f32.mrf.mxu0
    %v1833 = vadd.f32 %v1804, %v1832
    %1834 = vdwg.mxu0
    %1835 = vmatpush.msra.mxu0 0.0
    %1836 = vmatpush.msra.mxu0 0.0
    %1837 = vmatpush.msra.mxu0 0.0
    %1838 = vmatpush.msra.mxu0 0.0
    %1839 = vmatpush.msra.mxu0 0.0
    %1840 = vmatpush.msra.mxu0 0.0
    %1841 = vmatpush.msra.mxu0 0.0
    %1842 = vmatpush.msra.mxu0 0.0
    %1843 = vmatpush.msra.mxu0 0.0
    %1844 = vmatpush.msra.mxu0 0.0
    %1845 = vmatpush.msra.mxu0 0.0
    %1846 = vmatpush.msra.mxu0 0.0
    %v1847 = vand.u32 %v1616, 4294901760
    %v1848 = vsub.f32 %v1616, %v1847
    %v1849 = vand.u32 %v1848, 4294901760
    %v1850 = vsub.f32 %v1848, %v1849
    %v1851 = vand.u32 %v1850, 4294901760
    %1852 = vmatpush.msra.mxu0 %v1851
    %v1853 = vand.u32 %v1615, 4294901760
    %v1854 = vsub.f32 %v1615, %v1853
    %v1855 = vand.u32 %v1854, 4294901760
    %v1856 = vsub.f32 %v1854, %v1855
    %v1857 = vand.u32 %v1856, 4294901760
    %1858 = vmatpush.msra.mxu0 %v1857
    %v1859 = vand.u32 %v1614, 4294901760
    %v1860 = vsub.f32 %v1614, %v1859
    %v1861 = vand.u32 %v1860, 4294901760
    %v1862 = vsub.f32 %v1860, %v1861
    %v1863 = vand.u32 %v1862, 4294901760
    %1864 = vmatpush.msra.mxu0 %v1863
    %v1865 = vand.u32 %v1613, 4294901760
    %v1866 = vsub.f32 %v1613, %v1865
    %v1867 = vand.u32 %v1866, 4294901760
    %v1868 = vsub.f32 %v1866, %v1867
    %v1869 = vand.u32 %v1868, 4294901760
    %1870 = vmatpush.msra.mxu0 %v1869
    %v1871 = vand.u32 %v1214, 4294901760
    %1872 = vmatmul.f32.gmra.mxu0 %v1871
    %v1873 = vpop.f32.mrf.mxu0
    %v1874 = vadd.f32 %v1833, %v1873
    %1875 = vdwg.mxu0
    %1876 = vmatpush.msra.mxu0 0.0
    %1877 = vmatpush.msra.mxu0 0.0
    %1878 = vmatpush.msra.mxu0 0.0
    %1879 = vmatpush.msra.mxu0 0.0
    %1880 = vmatpush.msra.mxu0 0.0
    %1881 = vmatpush.msra.mxu0 0.0
    %1882 = vmatpush.msra.mxu0 0.0
    %1883 = vmatpush.msra.mxu0 0.0
    %1884 = vmatpush.msra.mxu0 0.0
    %1885 = vmatpush.msra.mxu0 0.0
    %1886 = vmatpush.msra.mxu0 0.0
    %1887 = vmatpush.msra.mxu0 0.0
    %v1888 = vand.u32 %v1616, 4294901760
    %v1889 = vsub.f32 %v1616, %v1888
    %1890 = vmatpush.msra.mxu0 %v1889
    %v1891 = vand.u32 %v1615, 4294901760
    %v1892 = vsub.f32 %v1615, %v1891
    %1893 = vmatpush.msra.mxu0 %v1892
    %v1894 = vand.u32 %v1614, 4294901760
    %v1895 = vsub.f32 %v1614, %v1894
    %1896 = vmatpush.msra.mxu0 %v1895
    %v1897 = vand.u32 %v1613, 4294901760
    %v1898 = vsub.f32 %v1613, %v1897
    %1899 = vmatpush.msra.mxu0 %v1898
    %v1900 = vand.u32 %v1214, 4294901760
    %v1901 = vsub.f32 %v1214, %v1900
    %1902 = vmatmul.f32.gmra.mxu0 %v1901
    %v1903 = vpop.f32.mrf.mxu0
    %v1904 = vadd.f32 %v1874, %v1903
    %1905 = vdwg.mxu0
    %1906 = vmatpush.msra.mxu0 0.0
    %1907 = vmatpush.msra.mxu0 0.0
    %1908 = vmatpush.msra.mxu0 0.0
    %1909 = vmatpush.msra.mxu0 0.0
    %1910 = vmatpush.msra.mxu0 0.0
    %1911 = vmatpush.msra.mxu0 0.0
    %1912 = vmatpush.msra.mxu0 0.0
    %1913 = vmatpush.msra.mxu0 0.0
    %1914 = vmatpush.msra.mxu0 0.0
    %1915 = vmatpush.msra.mxu0 0.0
    %1916 = vmatpush.msra.mxu0 0.0
    %1917 = vmatpush.msra.mxu0 0.0
    %v1918 = vand.u32 %v1616, 4294901760
    %1919 = vmatpush.msra.mxu0 %v1918
    %v1920 = vand.u32 %v1615, 4294901760
    %1921 = vmatpush.msra.mxu0 %v1920
    %v1922 = vand.u32 %v1614, 4294901760
    %1923 = vmatpush.msra.mxu0 %v1922
    %v1924 = vand.u32 %v1613, 4294901760
    %1925 = vmatpush.msra.mxu0 %v1924
    %v1926 = vand.u32 %v1214, 4294901760
    %v1927 = vsub.f32 %v1214, %v1926
    %v1928 = vand.u32 %v1927, 4294901760
    %1929 = vmatmul.f32.gmra.mxu0 %v1928
    %v1930 = vpop.f32.mrf.mxu0
    %v1931 = vadd.f32 %v1904, %v1930
    %1932 = vdwg.mxu0
    %1933 = vmatpush.msra.mxu0 0.0
    %1934 = vmatpush.msra.mxu0 0.0
    %1935 = vmatpush.msra.mxu0 0.0
    %1936 = vmatpush.msra.mxu0 0.0
    %1937 = vmatpush.msra.mxu0 0.0
    %1938 = vmatpush.msra.mxu0 0.0
    %1939 = vmatpush.msra.mxu0 0.0
    %1940 = vmatpush.msra.mxu0 0.0
    %1941 = vmatpush.msra.mxu0 0.0
    %1942 = vmatpush.msra.mxu0 0.0
    %1943 = vmatpush.msra.mxu0 0.0
    %1944 = vmatpush.msra.mxu0 0.0
    %v1945 = vand.u32 %v1616, 4294901760
    %v1946 = vsub.f32 %v1616, %v1945
    %v1947 = vand.u32 %v1946, 4294901760
    %1948 = vmatpush.msra.mxu0 %v1947
    %v1949 = vand.u32 %v1615, 4294901760
    %v1950 = vsub.f32 %v1615, %v1949
    %v1951 = vand.u32 %v1950, 4294901760
    %1952 = vmatpush.msra.mxu0 %v1951
    %v1953 = vand.u32 %v1614, 4294901760
    %v1954 = vsub.f32 %v1614, %v1953
    %v1955 = vand.u32 %v1954, 4294901760
    %1956 = vmatpush.msra.mxu0 %v1955
    %v1957 = vand.u32 %v1613, 4294901760
    %v1958 = vsub.f32 %v1613, %v1957
    %v1959 = vand.u32 %v1958, 4294901760
    %1960 = vmatpush.msra.mxu0 %v1959
    %v1961 = vand.u32 %v1214, 4294901760
    %1962 = vmatmul.f32.gmra.mxu0 %v1961
    %v1963 = vpop.f32.mrf.mxu0
    %v1964 = vadd.f32 %v1931, %v1963
    %1965 = vdwg.mxu0
    %1966 = vmatpush.msra.mxu0 0.0
    %1967 = vmatpush.msra.mxu0 0.0
    %1968 = vmatpush.msra.mxu0 0.0
    %1969 = vmatpush.msra.mxu0 0.0
    %1970 = vmatpush.msra.mxu0 0.0
    %1971 = vmatpush.msra.mxu0 0.0
    %1972 = vmatpush.msra.mxu0 0.0
    %1973 = vmatpush.msra.mxu0 0.0
    %1974 = vmatpush.msra.mxu0 0.0
    %1975 = vmatpush.msra.mxu0 0.0
    %1976 = vmatpush.msra.mxu0 0.0
    %1977 = vmatpush.msra.mxu0 0.0
    %v1978 = vand.u32 %v1616, 4294901760
    %1979 = vmatpush.msra.mxu0 %v1978
    %v1980 = vand.u32 %v1615, 4294901760
    %1981 = vmatpush.msra.mxu0 %v1980
    %v1982 = vand.u32 %v1614, 4294901760
    %1983 = vmatpush.msra.mxu0 %v1982
    %v1984 = vand.u32 %v1613, 4294901760
    %1985 = vmatpush.msra.mxu0 %v1984
    %v1986 = vand.u32 %v1214, 4294901760
    %1987 = vmatmul.f32.gmra.mxu0 %v1986
    %v1988 = vpop.f32.mrf.mxu0
    %v1989 = vadd.f32 %v1964, %v1988
    %1990 = vdwg.mxu0
    %v1991 = vadd.f32 %v1989, %v1612
    %v1992 = vld [vmem:[#allocation5 + $0x120] sm:$0xff]
    %v1993 = vld [vmem:[#allocation5 + $0x128] sm:$0xff]
    %v1994 = vld [vmem:[#allocation5 + $0x130] sm:$0xff]
    %v1995 = vld [vmem:[#allocation5 + $0x138] sm:$0xff]
    %v1996 = vld [vmem:[#allocation5 + $0x178] sm:$0x1]
    %1997 = vmatpush.msra.mxu0 0.0
    %1998 = vmatpush.msra.mxu0 0.0
    %1999 = vmatpush.msra.mxu0 0.0
    %2000 = vmatpush.msra.mxu0 0.0
    %2001 = vmatpush.msra.mxu0 0.0
    %2002 = vmatpush.msra.mxu0 0.0
    %2003 = vmatpush.msra.mxu0 0.0
    %2004 = vmatpush.msra.mxu0 0.0
    %2005 = vmatpush.msra.mxu0 0.0
    %2006 = vmatpush.msra.mxu0 0.0
    %2007 = vmatpush.msra.mxu0 0.0
    %2008 = vmatpush.msra.mxu0 0.0
    %v2009 = vand.u32 %v1995, 4294901760
    %2010 = vmatpush.msra.mxu0 %v2009
    %v2011 = vand.u32 %v1994, 4294901760
    %2012 = vmatpush.msra.mxu0 %v2011
    %v2013 = vand.u32 %v1993, 4294901760
    %2014 = vmatpush.msra.mxu0 %v2013
    %v2015 = vand.u32 %v1992, 4294901760
    %2016 = vmatpush.msra.mxu0 %v2015
    %v2017 = vand.u32 %v246, 4294901760
    %v2018 = vsub.f32 %v246, %v2017
    %v2019 = vand.u32 %v2018, 4294901760
    %v2020 = vsub.f32 %v2018, %v2019
    %v2021 = vand.u32 %v2020, 4294901760
    %2022 = vmatmul.f32.gmra.mxu0 %v2021
    %v2023 = vpop.f32.mrf.mxu0
    %v2024 = vadd.f32 %v1996, %v2023
    %2025 = vdwg.mxu0
    %2026 = vmatpush.msra.mxu0 0.0
    %2027 = vmatpush.msra.mxu0 0.0
    %2028 = vmatpush.msra.mxu0 0.0
    %2029 = vmatpush.msra.mxu0 0.0
    %2030 = vmatpush.msra.mxu0 0.0
    %2031 = vmatpush.msra.mxu0 0.0
    %2032 = vmatpush.msra.mxu0 0.0
    %2033 = vmatpush.msra.mxu0 0.0
    %2034 = vmatpush.msra.mxu0 0.0
    %2035 = vmatpush.msra.mxu0 0.0
    %2036 = vmatpush.msra.mxu0 0.0
    %2037 = vmatpush.msra.mxu0 0.0
    %v2038 = vand.u32 %v1995, 4294901760
    %v2039 = vsub.f32 %v1995, %v2038
    %v2040 = vand.u32 %v2039, 4294901760
    %v2041 = vsub.f32 %v2039, %v2040
    %v2042 = vand.u32 %v2041, 4294901760
    %2043 = vmatpush.msra.mxu0 %v2042
    %v2044 = vand.u32 %v1994, 4294901760
    %v2045 = vsub.f32 %v1994, %v2044
    %v2046 = vand.u32 %v2045, 4294901760
    %v2047 = vsub.f32 %v2045, %v2046
    %v2048 = vand.u32 %v2047, 4294901760
    %2049 = vmatpush.msra.mxu0 %v2048
    %v2050 = vand.u32 %v1993, 4294901760
    %v2051 = vsub.f32 %v1993, %v2050
    %v2052 = vand.u32 %v2051, 4294901760
    %v2053 = vsub.f32 %v2051, %v2052
    %v2054 = vand.u32 %v2053, 4294901760
    %2055 = vmatpush.msra.mxu0 %v2054
    %v2056 = vand.u32 %v1992, 4294901760
    %v2057 = vsub.f32 %v1992, %v2056
    %v2058 = vand.u32 %v2057, 4294901760
    %v2059 = vsub.f32 %v2057, %v2058
    %v2060 = vand.u32 %v2059, 4294901760
    %2061 = vmatpush.msra.mxu0 %v2060
    %v2062 = vand.u32 %v246, 4294901760
    %2063 = vmatmul.f32.gmra.mxu0 %v2062
    %v2064 = vpop.f32.mrf.mxu0
    %v2065 = vadd.f32 %v2024, %v2064
    %2066 = vdwg.mxu0
    %2067 = vmatpush.msra.mxu0 0.0
    %2068 = vmatpush.msra.mxu0 0.0
    %2069 = vmatpush.msra.mxu0 0.0
    %2070 = vmatpush.msra.mxu0 0.0
    %2071 = vmatpush.msra.mxu0 0.0
    %2072 = vmatpush.msra.mxu0 0.0
    %2073 = vmatpush.msra.mxu0 0.0
    %2074 = vmatpush.msra.mxu0 0.0
    %2075 = vmatpush.msra.mxu0 0.0
    %2076 = vmatpush.msra.mxu0 0.0
    %2077 = vmatpush.msra.mxu0 0.0
    %2078 = vmatpush.msra.mxu0 0.0
    %v2079 = vand.u32 %v1995, 4294901760
    %v2080 = vsub.f32 %v1995, %v2079
    %2081 = vmatpush.msra.mxu0 %v2080
    %v2082 = vand.u32 %v1994, 4294901760
    %v2083 = vsub.f32 %v1994, %v2082
    %2084 = vmatpush.msra.mxu0 %v2083
    %v2085 = vand.u32 %v1993, 4294901760
    %v2086 = vsub.f32 %v1993, %v2085
    %2087 = vmatpush.msra.mxu0 %v2086
    %v2088 = vand.u32 %v1992, 4294901760
    %v2089 = vsub.f32 %v1992, %v2088
    %2090 = vmatpush.msra.mxu0 %v2089
    %v2091 = vand.u32 %v246, 4294901760
    %v2092 = vsub.f32 %v246, %v2091
    %2093 = vmatmul.f32.gmra.mxu0 %v2092
    %v2094 = vpop.f32.mrf.mxu0
    %v2095 = vadd.f32 %v2065, %v2094
    %2096 = vdwg.mxu0
    %2097 = vmatpush.msra.mxu0 0.0
    %2098 = vmatpush.msra.mxu0 0.0
    %2099 = vmatpush.msra.mxu0 0.0
    %2100 = vmatpush.msra.mxu0 0.0
    %2101 = vmatpush.msra.mxu0 0.0
    %2102 = vmatpush.msra.mxu0 0.0
    %2103 = vmatpush.msra.mxu0 0.0
    %2104 = vmatpush.msra.mxu0 0.0
    %2105 = vmatpush.msra.mxu0 0.0
    %2106 = vmatpush.msra.mxu0 0.0
    %2107 = vmatpush.msra.mxu0 0.0
    %2108 = vmatpush.msra.mxu0 0.0
    %v2109 = vand.u32 %v1995, 4294901760
    %2110 = vmatpush.msra.mxu0 %v2109
    %v2111 = vand.u32 %v1994, 4294901760
    %2112 = vmatpush.msra.mxu0 %v2111
    %v2113 = vand.u32 %v1993, 4294901760
    %2114 = vmatpush.msra.mxu0 %v2113
    %v2115 = vand.u32 %v1992, 4294901760
    %2116 = vmatpush.msra.mxu0 %v2115
    %v2117 = vand.u32 %v246, 4294901760
    %v2118 = vsub.f32 %v246, %v2117
    %v2119 = vand.u32 %v2118, 4294901760
    %2120 = vmatmul.f32.gmra.mxu0 %v2119
    %v2121 = vpop.f32.mrf.mxu0
    %v2122 = vadd.f32 %v2095, %v2121
    %2123 = vdwg.mxu0
    %2124 = vmatpush.msra.mxu0 0.0
    %2125 = vmatpush.msra.mxu0 0.0
    %2126 = vmatpush.msra.mxu0 0.0
    %2127 = vmatpush.msra.mxu0 0.0
    %2128 = vmatpush.msra.mxu0 0.0
    %2129 = vmatpush.msra.mxu0 0.0
    %2130 = vmatpush.msra.mxu0 0.0
    %2131 = vmatpush.msra.mxu0 0.0
    %2132 = vmatpush.msra.mxu0 0.0
    %2133 = vmatpush.msra.mxu0 0.0
    %2134 = vmatpush.msra.mxu0 0.0
    %2135 = vmatpush.msra.mxu0 0.0
    %v2136 = vand.u32 %v1995, 4294901760
    %v2137 = vsub.f32 %v1995, %v2136
    %v2138 = vand.u32 %v2137, 4294901760
    %2139 = vmatpush.msra.mxu0 %v2138
    %v2140 = vand.u32 %v1994, 4294901760
    %v2141 = vsub.f32 %v1994, %v2140
    %v2142 = vand.u32 %v2141, 4294901760
    %2143 = vmatpush.msra.mxu0 %v2142
    %v2144 = vand.u32 %v1993, 4294901760
    %v2145 = vsub.f32 %v1993, %v2144
    %v2146 = vand.u32 %v2145, 4294901760
    %2147 = vmatpush.msra.mxu0 %v2146
    %v2148 = vand.u32 %v1992, 4294901760
    %v2149 = vsub.f32 %v1992, %v2148
    %v2150 = vand.u32 %v2149, 4294901760
    %2151 = vmatpush.msra.mxu0 %v2150
    %v2152 = vand.u32 %v246, 4294901760
    %2153 = vmatmul.f32.gmra.mxu0 %v2152
    %v2154 = vpop.f32.mrf.mxu0
    %v2155 = vadd.f32 %v2122, %v2154
    %2156 = vdwg.mxu0
    %2157 = vmatpush.msra.mxu0 0.0
    %2158 = vmatpush.msra.mxu0 0.0
    %2159 = vmatpush.msra.mxu0 0.0
    %2160 = vmatpush.msra.mxu0 0.0
    %2161 = vmatpush.msra.mxu0 0.0
    %2162 = vmatpush.msra.mxu0 0.0
    %2163 = vmatpush.msra.mxu0 0.0
    %2164 = vmatpush.msra.mxu0 0.0
    %2165 = vmatpush.msra.mxu0 0.0
    %2166 = vmatpush.msra.mxu0 0.0
    %2167 = vmatpush.msra.mxu0 0.0
    %2168 = vmatpush.msra.mxu0 0.0
    %v2169 = vand.u32 %v1995, 4294901760
    %2170 = vmatpush.msra.mxu0 %v2169
    %v2171 = vand.u32 %v1994, 4294901760
    %2172 = vmatpush.msra.mxu0 %v2171
    %v2173 = vand.u32 %v1993, 4294901760
    %2174 = vmatpush.msra.mxu0 %v2173
    %v2175 = vand.u32 %v1992, 4294901760
    %2176 = vmatpush.msra.mxu0 %v2175
    %v2177 = vand.u32 %v246, 4294901760
    %2178 = vmatmul.f32.gmra.mxu0 %v2177
    %v2179 = vpop.f32.mrf.mxu0
    %v2180 = vadd.f32 %v2155, %v2179
    %2181 = vdwg.mxu0
    %v2182 = vadd.f32 %v1991, %v2180
    %v2183 = vxor.u32 %v2182, 2147483648
    %v2184 = vmul.f32 %v2183, 1.442695
    %v2185 = vpow.pop %v2184
    %v2186 = vadd.f32 %v2185, 1.0
    %v2187 = vrcp.pop %v2186
    %v2188 = vmul.f32 %v2186, %v2187
    %v2189 = vsub.f32 1.0, %v2188
    %v2190 = vmul.f32 %v2187, %v2189
    %v2191 = vadd.f32 %v2187, %v2190
    %vm2192 = vweird.f32 %v2186
    %vm2193 = vweird.f32 %v2187
    %vm2194 = vmor %vm2192, %vm2193
    %v2195 = vsel %vm2194, %v2187, %v2191
    %v2196 = vand.u32 2147483647, %v2186
    %vm2197 = vcmp.eq.f32.partialorder %v2196, 8.507059e+37
    %v2198 = vand.u32 %v2186, 2147483648
    %v2199 = vor.u32 1.1754944e-38, %v2198
    %v2200 = vsel %vm2197, %v2199, %v2195
    %v2201 = vmul.f32 1.0, %v2200
    %v2202 = vld [vmem:[#allocation5 + $0x180] sm:$0x1]
    %v2203 = vld [vmem:[#allocation5 + $0xc0] sm:$0xff]
    %v2204 = vld [vmem:[#allocation5 + $0xc8] sm:$0xff]
    %v2205 = vld [vmem:[#allocation5 + $0xd0] sm:$0xff]
    %v2206 = vld [vmem:[#allocation5 + $0xd8] sm:$0xff]
    %v2207 = vld [vmem:[#allocation5 + $0xe0] sm:$0xff]
    %v2208 = vld [vmem:[#allocation5 + $0xe8] sm:$0xff]
    %v2209 = vld [vmem:[#allocation5 + $0xf0] sm:$0xff]
    %v2210 = vld [vmem:[#allocation5 + $0xf8] sm:$0xff]
    %2211 = vmatpush.msra.mxu0 0.0
    %2212 = vmatpush.msra.mxu0 0.0
    %2213 = vmatpush.msra.mxu0 0.0
    %2214 = vmatpush.msra.mxu0 0.0
    %2215 = vmatpush.msra.mxu0 0.0
    %2216 = vmatpush.msra.mxu0 0.0
    %2217 = vmatpush.msra.mxu0 0.0
    %2218 = vmatpush.msra.mxu0 0.0
    %2219 = vmatpush.msra.mxu0 0.0
    %2220 = vmatpush.msra.mxu0 0.0
    %2221 = vmatpush.msra.mxu0 0.0
    %2222 = vmatpush.msra.mxu0 0.0
    %v2223 = vand.u32 %v2210, 4294901760
    %2224 = vmatpush.msra.mxu0 %v2223
    %v2225 = vand.u32 %v2209, 4294901760
    %2226 = vmatpush.msra.mxu0 %v2225
    %v2227 = vand.u32 %v2208, 4294901760
    %2228 = vmatpush.msra.mxu0 %v2227
    %v2229 = vand.u32 %v2207, 4294901760
    %2230 = vmatpush.msra.mxu0 %v2229
    %v2231 = vand.u32 %v1026, 4294901760
    %v2232 = vsub.f32 %v1026, %v2231
    %v2233 = vand.u32 %v2232, 4294901760
    %v2234 = vsub.f32 %v2232, %v2233
    %v2235 = vand.u32 %v2234, 4294901760
    %2236 = vmatmul.f32.gmra.mxu0 %v2235
    %v2237 = vpop.f32.mrf.mxu0
    %v2238 = vadd.f32 0.0, %v2237
    %2239 = vdwg.mxu0
    %2240 = vmatpush.msra.mxu0 0.0
    %2241 = vmatpush.msra.mxu0 0.0
    %2242 = vmatpush.msra.mxu0 0.0
    %2243 = vmatpush.msra.mxu0 0.0
    %2244 = vmatpush.msra.mxu0 0.0
    %2245 = vmatpush.msra.mxu0 0.0
    %2246 = vmatpush.msra.mxu0 0.0
    %2247 = vmatpush.msra.mxu0 0.0
    %2248 = vmatpush.msra.mxu0 0.0
    %2249 = vmatpush.msra.mxu0 0.0
    %2250 = vmatpush.msra.mxu0 0.0
    %2251 = vmatpush.msra.mxu0 0.0
    %v2252 = vand.u32 %v2210, 4294901760
    %v2253 = vsub.f32 %v2210, %v2252
    %v2254 = vand.u32 %v2253, 4294901760
    %v2255 = vsub.f32 %v2253, %v2254
    %v2256 = vand.u32 %v2255, 4294901760
    %2257 = vmatpush.msra.mxu0 %v2256
    %v2258 = vand.u32 %v2209, 4294901760
    %v2259 = vsub.f32 %v2209, %v2258
    %v2260 = vand.u32 %v2259, 4294901760
    %v2261 = vsub.f32 %v2259, %v2260
    %v2262 = vand.u32 %v2261, 4294901760
    %2263 = vmatpush.msra.mxu0 %v2262
    %v2264 = vand.u32 %v2208, 4294901760
    %v2265 = vsub.f32 %v2208, %v2264
    %v2266 = vand.u32 %v2265, 4294901760
    %v2267 = vsub.f32 %v2265, %v2266
    %v2268 = vand.u32 %v2267, 4294901760
    %2269 = vmatpush.msra.mxu0 %v2268
    %v2270 = vand.u32 %v2207, 4294901760
    %v2271 = vsub.f32 %v2207, %v2270
    %v2272 = vand.u32 %v2271, 4294901760
    %v2273 = vsub.f32 %v2271, %v2272
    %v2274 = vand.u32 %v2273, 4294901760
    %2275 = vmatpush.msra.mxu0 %v2274
    %v2276 = vand.u32 %v1026, 4294901760
    %2277 = vmatmul.f32.gmra.mxu0 %v2276
    %v2278 = vpop.f32.mrf.mxu0
    %v2279 = vadd.f32 %v2238, %v2278
    %2280 = vdwg.mxu0
    %2281 = vmatpush.msra.mxu0 0.0
    %2282 = vmatpush.msra.mxu0 0.0
    %2283 = vmatpush.msra.mxu0 0.0
    %2284 = vmatpush.msra.mxu0 0.0
    %2285 = vmatpush.msra.mxu0 0.0
    %2286 = vmatpush.msra.mxu0 0.0
    %2287 = vmatpush.msra.mxu0 0.0
    %2288 = vmatpush.msra.mxu0 0.0
    %2289 = vmatpush.msra.mxu0 0.0
    %2290 = vmatpush.msra.mxu0 0.0
    %2291 = vmatpush.msra.mxu0 0.0
    %2292 = vmatpush.msra.mxu0 0.0
    %v2293 = vand.u32 %v2210, 4294901760
    %v2294 = vsub.f32 %v2210, %v2293
    %2295 = vmatpush.msra.mxu0 %v2294
    %v2296 = vand.u32 %v2209, 4294901760
    %v2297 = vsub.f32 %v2209, %v2296
    %2298 = vmatpush.msra.mxu0 %v2297
    %v2299 = vand.u32 %v2208, 4294901760
    %v2300 = vsub.f32 %v2208, %v2299
    %2301 = vmatpush.msra.mxu0 %v2300
    %v2302 = vand.u32 %v2207, 4294901760
    %v2303 = vsub.f32 %v2207, %v2302
    %2304 = vmatpush.msra.mxu0 %v2303
    %v2305 = vand.u32 %v1026, 4294901760
    %v2306 = vsub.f32 %v1026, %v2305
    %2307 = vmatmul.f32.gmra.mxu0 %v2306
    %v2308 = vpop.f32.mrf.mxu0
    %v2309 = vadd.f32 %v2279, %v2308
    %2310 = vdwg.mxu0
    %2311 = vmatpush.msra.mxu0 0.0
    %2312 = vmatpush.msra.mxu0 0.0
    %2313 = vmatpush.msra.mxu0 0.0
    %2314 = vmatpush.msra.mxu0 0.0
    %2315 = vmatpush.msra.mxu0 0.0
    %2316 = vmatpush.msra.mxu0 0.0
    %2317 = vmatpush.msra.mxu0 0.0
    %2318 = vmatpush.msra.mxu0 0.0
    %2319 = vmatpush.msra.mxu0 0.0
    %2320 = vmatpush.msra.mxu0 0.0
    %2321 = vmatpush.msra.mxu0 0.0
    %2322 = vmatpush.msra.mxu0 0.0
    %v2323 = vand.u32 %v2210, 4294901760
    %2324 = vmatpush.msra.mxu0 %v2323
    %v2325 = vand.u32 %v2209, 4294901760
    %2326 = vmatpush.msra.mxu0 %v2325
    %v2327 = vand.u32 %v2208, 4294901760
    %2328 = vmatpush.msra.mxu0 %v2327
    %v2329 = vand.u32 %v2207, 4294901760
    %2330 = vmatpush.msra.mxu0 %v2329
    %v2331 = vand.u32 %v1026, 4294901760
    %v2332 = vsub.f32 %v1026, %v2331
    %v2333 = vand.u32 %v2332, 4294901760
    %2334 = vmatmul.f32.gmra.mxu0 %v2333
    %v2335 = vpop.f32.mrf.mxu0
    %v2336 = vadd.f32 %v2309, %v2335
    %2337 = vdwg.mxu0
    %2338 = vmatpush.msra.mxu0 0.0
    %2339 = vmatpush.msra.mxu0 0.0
    %2340 = vmatpush.msra.mxu0 0.0
    %2341 = vmatpush.msra.mxu0 0.0
    %2342 = vmatpush.msra.mxu0 0.0
    %2343 = vmatpush.msra.mxu0 0.0
    %2344 = vmatpush.msra.mxu0 0.0
    %2345 = vmatpush.msra.mxu0 0.0
    %2346 = vmatpush.msra.mxu0 0.0
    %2347 = vmatpush.msra.mxu0 0.0
    %2348 = vmatpush.msra.mxu0 0.0
    %2349 = vmatpush.msra.mxu0 0.0
    %v2350 = vand.u32 %v2210, 4294901760
    %v2351 = vsub.f32 %v2210, %v2350
    %v2352 = vand.u32 %v2351, 4294901760
    %2353 = vmatpush.msra.mxu0 %v2352
    %v2354 = vand.u32 %v2209, 4294901760
    %v2355 = vsub.f32 %v2209, %v2354
    %v2356 = vand.u32 %v2355, 4294901760
    %2357 = vmatpush.msra.mxu0 %v2356
    %v2358 = vand.u32 %v2208, 4294901760
    %v2359 = vsub.f32 %v2208, %v2358
    %v2360 = vand.u32 %v2359, 4294901760
    %2361 = vmatpush.msra.mxu0 %v2360
    %v2362 = vand.u32 %v2207, 4294901760
    %v2363 = vsub.f32 %v2207, %v2362
    %v2364 = vand.u32 %v2363, 4294901760
    %2365 = vmatpush.msra.mxu0 %v2364
    %v2366 = vand.u32 %v1026, 4294901760
    %2367 = vmatmul.f32.gmra.mxu0 %v2366
    %v2368 = vpop.f32.mrf.mxu0
    %v2369 = vadd.f32 %v2336, %v2368
    %2370 = vdwg.mxu0
    %2371 = vmatpush.msra.mxu0 0.0
    %2372 = vmatpush.msra.mxu0 0.0
    %2373 = vmatpush.msra.mxu0 0.0
    %2374 = vmatpush.msra.mxu0 0.0
    %2375 = vmatpush.msra.mxu0 0.0
    %2376 = vmatpush.msra.mxu0 0.0
    %2377 = vmatpush.msra.mxu0 0.0
    %2378 = vmatpush.msra.mxu0 0.0
    %2379 = vmatpush.msra.mxu0 0.0
    %2380 = vmatpush.msra.mxu0 0.0
    %2381 = vmatpush.msra.mxu0 0.0
    %2382 = vmatpush.msra.mxu0 0.0
    %v2383 = vand.u32 %v2210, 4294901760
    %2384 = vmatpush.msra.mxu0 %v2383
    %v2385 = vand.u32 %v2209, 4294901760
    %2386 = vmatpush.msra.mxu0 %v2385
    %v2387 = vand.u32 %v2208, 4294901760
    %2388 = vmatpush.msra.mxu0 %v2387
    %v2389 = vand.u32 %v2207, 4294901760
    %2390 = vmatpush.msra.mxu0 %v2389
    %v2391 = vand.u32 %v1026, 4294901760
    %2392 = vmatmul.f32.gmra.mxu0 %v2391
    %v2393 = vpop.f32.mrf.mxu0
    %v2394 = vadd.f32 %v2369, %v2393
    %2395 = vdwg.mxu0
    %2396 = vmatpush.msra.mxu0 0.0
    %2397 = vmatpush.msra.mxu0 0.0
    %2398 = vmatpush.msra.mxu0 0.0
    %2399 = vmatpush.msra.mxu0 0.0
    %2400 = vmatpush.msra.mxu0 0.0
    %2401 = vmatpush.msra.mxu0 0.0
    %2402 = vmatpush.msra.mxu0 0.0
    %2403 = vmatpush.msra.mxu0 0.0
    %2404 = vmatpush.msra.mxu0 0.0
    %2405 = vmatpush.msra.mxu0 0.0
    %2406 = vmatpush.msra.mxu0 0.0
    %2407 = vmatpush.msra.mxu0 0.0
    %v2408 = vand.u32 %v2206, 4294901760
    %2409 = vmatpush.msra.mxu0 %v2408
    %v2410 = vand.u32 %v2205, 4294901760
    %2411 = vmatpush.msra.mxu0 %v2410
    %v2412 = vand.u32 %v2204, 4294901760
    %2413 = vmatpush.msra.mxu0 %v2412
    %v2414 = vand.u32 %v2203, 4294901760
    %2415 = vmatpush.msra.mxu0 %v2414
    %v2416 = vand.u32 %v1214, 4294901760
    %v2417 = vsub.f32 %v1214, %v2416
    %v2418 = vand.u32 %v2417, 4294901760
    %v2419 = vsub.f32 %v2417, %v2418
    %v2420 = vand.u32 %v2419, 4294901760
    %2421 = vmatmul.f32.gmra.mxu0 %v2420
    %v2422 = vpop.f32.mrf.mxu0
    %v2423 = vadd.f32 %v2394, %v2422
    %2424 = vdwg.mxu0
    %2425 = vmatpush.msra.mxu0 0.0
    %2426 = vmatpush.msra.mxu0 0.0
    %2427 = vmatpush.msra.mxu0 0.0
    %2428 = vmatpush.msra.mxu0 0.0
    %2429 = vmatpush.msra.mxu0 0.0
    %2430 = vmatpush.msra.mxu0 0.0
    %2431 = vmatpush.msra.mxu0 0.0
    %2432 = vmatpush.msra.mxu0 0.0
    %2433 = vmatpush.msra.mxu0 0.0
    %2434 = vmatpush.msra.mxu0 0.0
    %2435 = vmatpush.msra.mxu0 0.0
    %2436 = vmatpush.msra.mxu0 0.0
    %v2437 = vand.u32 %v2206, 4294901760
    %v2438 = vsub.f32 %v2206, %v2437
    %v2439 = vand.u32 %v2438, 4294901760
    %v2440 = vsub.f32 %v2438, %v2439
    %v2441 = vand.u32 %v2440, 4294901760
    %2442 = vmatpush.msra.mxu0 %v2441
    %v2443 = vand.u32 %v2205, 4294901760
    %v2444 = vsub.f32 %v2205, %v2443
    %v2445 = vand.u32 %v2444, 4294901760
    %v2446 = vsub.f32 %v2444, %v2445
    %v2447 = vand.u32 %v2446, 4294901760
    %2448 = vmatpush.msra.mxu0 %v2447
    %v2449 = vand.u32 %v2204, 4294901760
    %v2450 = vsub.f32 %v2204, %v2449
    %v2451 = vand.u32 %v2450, 4294901760
    %v2452 = vsub.f32 %v2450, %v2451
    %v2453 = vand.u32 %v2452, 4294901760
    %2454 = vmatpush.msra.mxu0 %v2453
    %v2455 = vand.u32 %v2203, 4294901760
    %v2456 = vsub.f32 %v2203, %v2455
    %v2457 = vand.u32 %v2456, 4294901760
    %v2458 = vsub.f32 %v2456, %v2457
    %v2459 = vand.u32 %v2458, 4294901760
    %2460 = vmatpush.msra.mxu0 %v2459
    %v2461 = vand.u32 %v1214, 4294901760
    %2462 = vmatmul.f32.gmra.mxu0 %v2461
    %v2463 = vpop.f32.mrf.mxu0
    %v2464 = vadd.f32 %v2423, %v2463
    %2465 = vdwg.mxu0
    %2466 = vmatpush.msra.mxu0 0.0
    %2467 = vmatpush.msra.mxu0 0.0
    %2468 = vmatpush.msra.mxu0 0.0
    %2469 = vmatpush.msra.mxu0 0.0
    %2470 = vmatpush.msra.mxu0 0.0
    %2471 = vmatpush.msra.mxu0 0.0
    %2472 = vmatpush.msra.mxu0 0.0
    %2473 = vmatpush.msra.mxu0 0.0
    %2474 = vmatpush.msra.mxu0 0.0
    %2475 = vmatpush.msra.mxu0 0.0
    %2476 = vmatpush.msra.mxu0 0.0
    %2477 = vmatpush.msra.mxu0 0.0
    %v2478 = vand.u32 %v2206, 4294901760
    %v2479 = vsub.f32 %v2206, %v2478
    %2480 = vmatpush.msra.mxu0 %v2479
    %v2481 = vand.u32 %v2205, 4294901760
    %v2482 = vsub.f32 %v2205, %v2481
    %2483 = vmatpush.msra.mxu0 %v2482
    %v2484 = vand.u32 %v2204, 4294901760
    %v2485 = vsub.f32 %v2204, %v2484
    %2486 = vmatpush.msra.mxu0 %v2485
    %v2487 = vand.u32 %v2203, 4294901760
    %v2488 = vsub.f32 %v2203, %v2487
    %2489 = vmatpush.msra.mxu0 %v2488
    %v2490 = vand.u32 %v1214, 4294901760
    %v2491 = vsub.f32 %v1214, %v2490
    %2492 = vmatmul.f32.gmra.mxu0 %v2491
    %v2493 = vpop.f32.mrf.mxu0
    %v2494 = vadd.f32 %v2464, %v2493
    %2495 = vdwg.mxu0
    %2496 = vmatpush.msra.mxu0 0.0
    %2497 = vmatpush.msra.mxu0 0.0
    %2498 = vmatpush.msra.mxu0 0.0
    %2499 = vmatpush.msra.mxu0 0.0
    %2500 = vmatpush.msra.mxu0 0.0
    %2501 = vmatpush.msra.mxu0 0.0
    %2502 = vmatpush.msra.mxu0 0.0
    %2503 = vmatpush.msra.mxu0 0.0
    %2504 = vmatpush.msra.mxu0 0.0
    %2505 = vmatpush.msra.mxu0 0.0
    %2506 = vmatpush.msra.mxu0 0.0
    %2507 = vmatpush.msra.mxu0 0.0
    %v2508 = vand.u32 %v2206, 4294901760
    %2509 = vmatpush.msra.mxu0 %v2508
    %v2510 = vand.u32 %v2205, 4294901760
    %2511 = vmatpush.msra.mxu0 %v2510
    %v2512 = vand.u32 %v2204, 4294901760
    %2513 = vmatpush.msra.mxu0 %v2512
    %v2514 = vand.u32 %v2203, 4294901760
    %2515 = vmatpush.msra.mxu0 %v2514
    %v2516 = vand.u32 %v1214, 4294901760
    %v2517 = vsub.f32 %v1214, %v2516
    %v2518 = vand.u32 %v2517, 4294901760
    %2519 = vmatmul.f32.gmra.mxu0 %v2518
    %v2520 = vpop.f32.mrf.mxu0
    %v2521 = vadd.f32 %v2494, %v2520
    %2522 = vdwg.mxu0
    %2523 = vmatpush.msra.mxu0 0.0
    %2524 = vmatpush.msra.mxu0 0.0
    %2525 = vmatpush.msra.mxu0 0.0
    %2526 = vmatpush.msra.mxu0 0.0
    %2527 = vmatpush.msra.mxu0 0.0
    %2528 = vmatpush.msra.mxu0 0.0
    %2529 = vmatpush.msra.mxu0 0.0
    %2530 = vmatpush.msra.mxu0 0.0
    %2531 = vmatpush.msra.mxu0 0.0
    %2532 = vmatpush.msra.mxu0 0.0
    %2533 = vmatpush.msra.mxu0 0.0
    %2534 = vmatpush.msra.mxu0 0.0
    %v2535 = vand.u32 %v2206, 4294901760
    %v2536 = vsub.f32 %v2206, %v2535
    %v2537 = vand.u32 %v2536, 4294901760
    %2538 = vmatpush.msra.mxu0 %v2537
    %v2539 = vand.u32 %v2205, 4294901760
    %v2540 = vsub.f32 %v2205, %v2539
    %v2541 = vand.u32 %v2540, 4294901760
    %2542 = vmatpush.msra.mxu0 %v2541
    %v2543 = vand.u32 %v2204, 4294901760
    %v2544 = vsub.f32 %v2204, %v2543
    %v2545 = vand.u32 %v2544, 4294901760
    %2546 = vmatpush.msra.mxu0 %v2545
    %v2547 = vand.u32 %v2203, 4294901760
    %v2548 = vsub.f32 %v2203, %v2547
    %v2549 = vand.u32 %v2548, 4294901760
    %2550 = vmatpush.msra.mxu0 %v2549
    %v2551 = vand.u32 %v1214, 4294901760
    %2552 = vmatmul.f32.gmra.mxu0 %v2551
    %v2553 = vpop.f32.mrf.mxu0
    %v2554 = vadd.f32 %v2521, %v2553
    %2555 = vdwg.mxu0
    %2556 = vmatpush.msra.mxu0 0.0
    %2557 = vmatpush.msra.mxu0 0.0
    %2558 = vmatpush.msra.mxu0 0.0
    %2559 = vmatpush.msra.mxu0 0.0
    %2560 = vmatpush.msra.mxu0 0.0
    %2561 = vmatpush.msra.mxu0 0.0
    %2562 = vmatpush.msra.mxu0 0.0
    %2563 = vmatpush.msra.mxu0 0.0
    %2564 = vmatpush.msra.mxu0 0.0
    %2565 = vmatpush.msra.mxu0 0.0
    %2566 = vmatpush.msra.mxu0 0.0
    %2567 = vmatpush.msra.mxu0 0.0
    %v2568 = vand.u32 %v2206, 4294901760
    %2569 = vmatpush.msra.mxu0 %v2568
    %v2570 = vand.u32 %v2205, 4294901760
    %2571 = vmatpush.msra.mxu0 %v2570
    %v2572 = vand.u32 %v2204, 4294901760
    %2573 = vmatpush.msra.mxu0 %v2572
    %v2574 = vand.u32 %v2203, 4294901760
    %2575 = vmatpush.msra.mxu0 %v2574
    %v2576 = vand.u32 %v1214, 4294901760
    %2577 = vmatmul.f32.gmra.mxu0 %v2576
    %v2578 = vpop.f32.mrf.mxu0
    %v2579 = vadd.f32 %v2554, %v2578
    %2580 = vdwg.mxu0
    %v2581 = vadd.f32 %v2579, %v2202
    %v2582 = vld [vmem:[#allocation5 + $0x140] sm:$0xff]
    %v2583 = vld [vmem:[#allocation5 + $0x148] sm:$0xff]
    %v2584 = vld [vmem:[#allocation5 + $0x150] sm:$0xff]
    %v2585 = vld [vmem:[#allocation5 + $0x158] sm:$0xff]
    %v2586 = vld [vmem:[#allocation5 + $0x188] sm:$0x1]
    %2587 = vmatpush.msra.mxu0 0.0
    %2588 = vmatpush.msra.mxu0 0.0
    %2589 = vmatpush.msra.mxu0 0.0
    %2590 = vmatpush.msra.mxu0 0.0
    %2591 = vmatpush.msra.mxu0 0.0
    %2592 = vmatpush.msra.mxu0 0.0
    %2593 = vmatpush.msra.mxu0 0.0
    %2594 = vmatpush.msra.mxu0 0.0
    %2595 = vmatpush.msra.mxu0 0.0
    %2596 = vmatpush.msra.mxu0 0.0
    %2597 = vmatpush.msra.mxu0 0.0
    %2598 = vmatpush.msra.mxu0 0.0
    %v2599 = vand.u32 %v2585, 4294901760
    %2600 = vmatpush.msra.mxu0 %v2599
    %v2601 = vand.u32 %v2584, 4294901760
    %2602 = vmatpush.msra.mxu0 %v2601
    %v2603 = vand.u32 %v2583, 4294901760
    %2604 = vmatpush.msra.mxu0 %v2603
    %v2605 = vand.u32 %v2582, 4294901760
    %2606 = vmatpush.msra.mxu0 %v2605
    %v2607 = vand.u32 %v246, 4294901760
    %v2608 = vsub.f32 %v246, %v2607
    %v2609 = vand.u32 %v2608, 4294901760
    %v2610 = vsub.f32 %v2608, %v2609
    %v2611 = vand.u32 %v2610, 4294901760
    %2612 = vmatmul.f32.gmra.mxu0 %v2611
    %v2613 = vpop.f32.mrf.mxu0
    %v2614 = vadd.f32 %v2586, %v2613
    %2615 = vdwg.mxu0
    %2616 = vmatpush.msra.mxu0 0.0
    %2617 = vmatpush.msra.mxu0 0.0
    %2618 = vmatpush.msra.mxu0 0.0
    %2619 = vmatpush.msra.mxu0 0.0
    %2620 = vmatpush.msra.mxu0 0.0
    %2621 = vmatpush.msra.mxu0 0.0
    %2622 = vmatpush.msra.mxu0 0.0
    %2623 = vmatpush.msra.mxu0 0.0
    %2624 = vmatpush.msra.mxu0 0.0
    %2625 = vmatpush.msra.mxu0 0.0
    %2626 = vmatpush.msra.mxu0 0.0
    %2627 = vmatpush.msra.mxu0 0.0
    %v2628 = vand.u32 %v2585, 4294901760
    %v2629 = vsub.f32 %v2585, %v2628
    %v2630 = vand.u32 %v2629, 4294901760
    %v2631 = vsub.f32 %v2629, %v2630
    %v2632 = vand.u32 %v2631, 4294901760
    %2633 = vmatpush.msra.mxu0 %v2632
    %v2634 = vand.u32 %v2584, 4294901760
    %v2635 = vsub.f32 %v2584, %v2634
    %v2636 = vand.u32 %v2635, 4294901760
    %v2637 = vsub.f32 %v2635, %v2636
    %v2638 = vand.u32 %v2637, 4294901760
    %2639 = vmatpush.msra.mxu0 %v2638
    %v2640 = vand.u32 %v2583, 4294901760
    %v2641 = vsub.f32 %v2583, %v2640
    %v2642 = vand.u32 %v2641, 4294901760
    %v2643 = vsub.f32 %v2641, %v2642
    %v2644 = vand.u32 %v2643, 4294901760
    %2645 = vmatpush.msra.mxu0 %v2644
    %v2646 = vand.u32 %v2582, 4294901760
    %v2647 = vsub.f32 %v2582, %v2646
    %v2648 = vand.u32 %v2647, 4294901760
    %v2649 = vsub.f32 %v2647, %v2648
    %v2650 = vand.u32 %v2649, 4294901760
    %2651 = vmatpush.msra.mxu0 %v2650
    %v2652 = vand.u32 %v246, 4294901760
    %2653 = vmatmul.f32.gmra.mxu0 %v2652
    %v2654 = vpop.f32.mrf.mxu0
    %v2655 = vadd.f32 %v2614, %v2654
    %2656 = vdwg.mxu0
    %2657 = vmatpush.msra.mxu0 0.0
    %2658 = vmatpush.msra.mxu0 0.0
    %2659 = vmatpush.msra.mxu0 0.0
    %2660 = vmatpush.msra.mxu0 0.0
    %2661 = vmatpush.msra.mxu0 0.0
    %2662 = vmatpush.msra.mxu0 0.0
    %2663 = vmatpush.msra.mxu0 0.0
    %2664 = vmatpush.msra.mxu0 0.0
    %2665 = vmatpush.msra.mxu0 0.0
    %2666 = vmatpush.msra.mxu0 0.0
    %2667 = vmatpush.msra.mxu0 0.0
    %2668 = vmatpush.msra.mxu0 0.0
    %v2669 = vand.u32 %v2585, 4294901760
    %v2670 = vsub.f32 %v2585, %v2669
    %2671 = vmatpush.msra.mxu0 %v2670
    %v2672 = vand.u32 %v2584, 4294901760
    %v2673 = vsub.f32 %v2584, %v2672
    %2674 = vmatpush.msra.mxu0 %v2673
    %v2675 = vand.u32 %v2583, 4294901760
    %v2676 = vsub.f32 %v2583, %v2675
    %2677 = vmatpush.msra.mxu0 %v2676
    %v2678 = vand.u32 %v2582, 4294901760
    %v2679 = vsub.f32 %v2582, %v2678
    %2680 = vmatpush.msra.mxu0 %v2679
    %v2681 = vand.u32 %v246, 4294901760
    %v2682 = vsub.f32 %v246, %v2681
    %2683 = vmatmul.f32.gmra.mxu0 %v2682
    %v2684 = vpop.f32.mrf.mxu0
    %v2685 = vadd.f32 %v2655, %v2684
    %2686 = vdwg.mxu0
    %2687 = vmatpush.msra.mxu0 0.0
    %2688 = vmatpush.msra.mxu0 0.0
    %2689 = vmatpush.msra.mxu0 0.0
    %2690 = vmatpush.msra.mxu0 0.0
    %2691 = vmatpush.msra.mxu0 0.0
    %2692 = vmatpush.msra.mxu0 0.0
    %2693 = vmatpush.msra.mxu0 0.0
    %2694 = vmatpush.msra.mxu0 0.0
    %2695 = vmatpush.msra.mxu0 0.0
    %2696 = vmatpush.msra.mxu0 0.0
    %2697 = vmatpush.msra.mxu0 0.0
    %2698 = vmatpush.msra.mxu0 0.0
    %v2699 = vand.u32 %v2585, 4294901760
    %2700 = vmatpush.msra.mxu0 %v2699
    %v2701 = vand.u32 %v2584, 4294901760
    %2702 = vmatpush.msra.mxu0 %v2701
    %v2703 = vand.u32 %v2583, 4294901760
    %2704 = vmatpush.msra.mxu0 %v2703
    %v2705 = vand.u32 %v2582, 4294901760
    %2706 = vmatpush.msra.mxu0 %v2705
    %v2707 = vand.u32 %v246, 4294901760
    %v2708 = vsub.f32 %v246, %v2707
    %v2709 = vand.u32 %v2708, 4294901760
    %2710 = vmatmul.f32.gmra.mxu0 %v2709
    %v2711 = vpop.f32.mrf.mxu0
    %v2712 = vadd.f32 %v2685, %v2711
    %2713 = vdwg.mxu0
    %2714 = vmatpush.msra.mxu0 0.0
    %2715 = vmatpush.msra.mxu0 0.0
    %2716 = vmatpush.msra.mxu0 0.0
    %2717 = vmatpush.msra.mxu0 0.0
    %2718 = vmatpush.msra.mxu0 0.0
    %2719 = vmatpush.msra.mxu0 0.0
    %2720 = vmatpush.msra.mxu0 0.0
    %2721 = vmatpush.msra.mxu0 0.0
    %2722 = vmatpush.msra.mxu0 0.0
    %2723 = vmatpush.msra.mxu0 0.0
    %2724 = vmatpush.msra.mxu0 0.0
    %2725 = vmatpush.msra.mxu0 0.0
    %v2726 = vand.u32 %v2585, 4294901760
    %v2727 = vsub.f32 %v2585, %v2726
    %v2728 = vand.u32 %v2727, 4294901760
    %2729 = vmatpush.msra.mxu0 %v2728
    %v2730 = vand.u32 %v2584, 4294901760
    %v2731 = vsub.f32 %v2584, %v2730
    %v2732 = vand.u32 %v2731, 4294901760
    %2733 = vmatpush.msra.mxu0 %v2732
    %v2734 = vand.u32 %v2583, 4294901760
    %v2735 = vsub.f32 %v2583, %v2734
    %v2736 = vand.u32 %v2735, 4294901760
    %2737 = vmatpush.msra.mxu0 %v2736
    %v2738 = vand.u32 %v2582, 4294901760
    %v2739 = vsub.f32 %v2582, %v2738
    %v2740 = vand.u32 %v2739, 4294901760
    %2741 = vmatpush.msra.mxu0 %v2740
    %v2742 = vand.u32 %v246, 4294901760
    %2743 = vmatmul.f32.gmra.mxu0 %v2742
    %v2744 = vpop.f32.mrf.mxu0
    %v2745 = vadd.f32 %v2712, %v2744
    %2746 = vdwg.mxu0
    %2747 = vmatpush.msra.mxu0 0.0
    %2748 = vmatpush.msra.mxu0 0.0
    %2749 = vmatpush.msra.mxu0 0.0
    %2750 = vmatpush.msra.mxu0 0.0
    %2751 = vmatpush.msra.mxu0 0.0
    %2752 = vmatpush.msra.mxu0 0.0
    %2753 = vmatpush.msra.mxu0 0.0
    %2754 = vmatpush.msra.mxu0 0.0
    %2755 = vmatpush.msra.mxu0 0.0
    %2756 = vmatpush.msra.mxu0 0.0
    %2757 = vmatpush.msra.mxu0 0.0
    %2758 = vmatpush.msra.mxu0 0.0
    %v2759 = vand.u32 %v2585, 4294901760
    %2760 = vmatpush.msra.mxu0 %v2759
    %v2761 = vand.u32 %v2584, 4294901760
    %2762 = vmatpush.msra.mxu0 %v2761
    %v2763 = vand.u32 %v2583, 4294901760
    %2764 = vmatpush.msra.mxu0 %v2763
    %v2765 = vand.u32 %v2582, 4294901760
    %2766 = vmatpush.msra.mxu0 %v2765
    %v2767 = vand.u32 %v246, 4294901760
    %2768 = vmatmul.f32.gmra.mxu0 %v2767
    %v2769 = vpop.f32.mrf.mxu0
    %v2770 = vadd.f32 %v2745, %v2769
    %2771 = vdwg.mxu0
    %v2772 = vmul.f32 %v1611, %v2770
    %v2773 = vadd.f32 %v2581, %v2772
    %v2774 = vtanh.pop %v2773
    %v2775 = vsub.f32 1.0, %v2201
    %v2776 = vmul.f32 %v2775, %v2774
    %v2777 = vmul.f32 %v2201, %v46
    %v2778 = vadd.f32 %v2776, %v2777
    %vm2779 = vcmask 253952
    %2780 = vst.msk [vmem:[#allocation2] sm:$0x1] %vm2779, %v2778
    %v2781 = vld [vmem:[#allocation2 + $0x1] sm:$0x1]
    %v2782 = vld [vmem:[#allocation5 + $0x250] sm:$0x1]
    %v2783 = vld [vmem:[#allocation5 + $0x190] sm:$0xff]
    %v2784 = vld [vmem:[#allocation5 + $0x198] sm:$0xff]
    %v2785 = vld [vmem:[#allocation5 + $0x1a0] sm:$0xff]
    %v2786 = vld [vmem:[#allocation5 + $0x1a8] sm:$0xff]
    %v2788 = vsel %vm56, %v2778, 0
    %2790 = vmatpush.msra.mxu0 0.0
    %2791 = vmatpush.msra.mxu0 0.0
    %2792 = vmatpush.msra.mxu0 0.0
    %2793 = vmatpush.msra.mxu0 0.0
    %2794 = vmatpush.msra.mxu0 0.0
    %2795 = vmatpush.msra.mxu0 0.0
    %2796 = vmatpush.msra.mxu0 0.0
    %2797 = vmatpush.msra.mxu0 0.0
    %2798 = vmatpush.msra.mxu0 0.0
    %2799 = vmatpush.msra.mxu0 0.0
    %2800 = vmatpush.msra.mxu0 0.0
    %2801 = vmatpush.msra.mxu0 0.0
    %v2802 = vand.u32 %v2786, 4294901760
    %2803 = vmatpush.msra.mxu0 %v2802
    %v2804 = vand.u32 %v2785, 4294901760
    %2805 = vmatpush.msra.mxu0 %v2804
    %v2806 = vand.u32 %v2784, 4294901760
    %2807 = vmatpush.msra.mxu0 %v2806
    %v2808 = vand.u32 %v2783, 4294901760
    %2809 = vmatpush.msra.mxu0 %v2808
    %v2810 = vand.u32 %v2788, 4294901760
    %v2811 = vsub.f32 %v2788, %v2810
    %v2812 = vand.u32 %v2811, 4294901760
    %v2813 = vsub.f32 %v2811, %v2812
    %v2814 = vand.u32 %v2813, 4294901760
    %2815 = vmatmul.f32.gmra.mxu0 %v2814
    %v2816 = vpop.f32.mrf.mxu0
    %v2817 = vadd.f32 %v2782, %v2816
    %2818 = vdwg.mxu0
    %2819 = vmatpush.msra.mxu0 0.0
    %2820 = vmatpush.msra.mxu0 0.0
    %2821 = vmatpush.msra.mxu0 0.0
    %2822 = vmatpush.msra.mxu0 0.0
    %2823 = vmatpush.msra.mxu0 0.0
    %2824 = vmatpush.msra.mxu0 0.0
    %2825 = vmatpush.msra.mxu0 0.0
    %2826 = vmatpush.msra.mxu0 0.0
    %2827 = vmatpush.msra.mxu0 0.0
    %2828 = vmatpush.msra.mxu0 0.0
    %2829 = vmatpush.msra.mxu0 0.0
    %2830 = vmatpush.msra.mxu0 0.0
    %v2831 = vand.u32 %v2786, 4294901760
    %v2832 = vsub.f32 %v2786, %v2831
    %v2833 = vand.u32 %v2832, 4294901760
    %v2834 = vsub.f32 %v2832, %v2833
    %v2835 = vand.u32 %v2834, 4294901760
    %2836 = vmatpush.msra.mxu0 %v2835
    %v2837 = vand.u32 %v2785, 4294901760
    %v2838 = vsub.f32 %v2785, %v2837
    %v2839 = vand.u32 %v2838, 4294901760
    %v2840 = vsub.f32 %v2838, %v2839
    %v2841 = vand.u32 %v2840, 4294901760
    %2842 = vmatpush.msra.mxu0 %v2841
    %v2843 = vand.u32 %v2784, 4294901760
    %v2844 = vsub.f32 %v2784, %v2843
    %v2845 = vand.u32 %v2844, 4294901760
    %v2846 = vsub.f32 %v2844, %v2845
    %v2847 = vand.u32 %v2846, 4294901760
    %2848 = vmatpush.msra.mxu0 %v2847
    %v2849 = vand.u32 %v2783, 4294901760
    %v2850 = vsub.f32 %v2783, %v2849
    %v2851 = vand.u32 %v2850, 4294901760
    %v2852 = vsub.f32 %v2850, %v2851
    %v2853 = vand.u32 %v2852, 4294901760
    %2854 = vmatpush.msra.mxu0 %v2853
    %v2855 = vand.u32 %v2788, 4294901760
    %2856 = vmatmul.f32.gmra.mxu0 %v2855
    %v2857 = vpop.f32.mrf.mxu0
    %v2858 = vadd.f32 %v2817, %v2857
    %2859 = vdwg.mxu0
    %2860 = vmatpush.msra.mxu0 0.0
    %2861 = vmatpush.msra.mxu0 0.0
    %2862 = vmatpush.msra.mxu0 0.0
    %2863 = vmatpush.msra.mxu0 0.0
    %2864 = vmatpush.msra.mxu0 0.0
    %2865 = vmatpush.msra.mxu0 0.0
    %2866 = vmatpush.msra.mxu0 0.0
    %2867 = vmatpush.msra.mxu0 0.0
    %2868 = vmatpush.msra.mxu0 0.0
    %2869 = vmatpush.msra.mxu0 0.0
    %2870 = vmatpush.msra.mxu0 0.0
    %2871 = vmatpush.msra.mxu0 0.0
    %v2872 = vand.u32 %v2786, 4294901760
    %v2873 = vsub.f32 %v2786, %v2872
    %2874 = vmatpush.msra.mxu0 %v2873
    %v2875 = vand.u32 %v2785, 4294901760
    %v2876 = vsub.f32 %v2785, %v2875
    %2877 = vmatpush.msra.mxu0 %v2876
    %v2878 = vand.u32 %v2784, 4294901760
    %v2879 = vsub.f32 %v2784, %v2878
    %2880 = vmatpush.msra.mxu0 %v2879
    %v2881 = vand.u32 %v2783, 4294901760
    %v2882 = vsub.f32 %v2783, %v2881
    %2883 = vmatpush.msra.mxu0 %v2882
    %v2884 = vand.u32 %v2788, 4294901760
    %v2885 = vsub.f32 %v2788, %v2884
    %2886 = vmatmul.f32.gmra.mxu0 %v2885
    %v2887 = vpop.f32.mrf.mxu0
    %v2888 = vadd.f32 %v2858, %v2887
    %2889 = vdwg.mxu0
    %2890 = vmatpush.msra.mxu0 0.0
    %2891 = vmatpush.msra.mxu0 0.0
    %2892 = vmatpush.msra.mxu0 0.0
    %2893 = vmatpush.msra.mxu0 0.0
    %2894 = vmatpush.msra.mxu0 0.0
    %2895 = vmatpush.msra.mxu0 0.0
    %2896 = vmatpush.msra.mxu0 0.0
    %2897 = vmatpush.msra.mxu0 0.0
    %2898 = vmatpush.msra.mxu0 0.0
    %2899 = vmatpush.msra.mxu0 0.0
    %2900 = vmatpush.msra.mxu0 0.0
    %2901 = vmatpush.msra.mxu0 0.0
    %v2902 = vand.u32 %v2786, 4294901760
    %2903 = vmatpush.msra.mxu0 %v2902
    %v2904 = vand.u32 %v2785, 4294901760
    %2905 = vmatpush.msra.mxu0 %v2904
    %v2906 = vand.u32 %v2784, 4294901760
    %2907 = vmatpush.msra.mxu0 %v2906
    %v2908 = vand.u32 %v2783, 4294901760
    %2909 = vmatpush.msra.mxu0 %v2908
    %v2910 = vand.u32 %v2788, 4294901760
    %v2911 = vsub.f32 %v2788, %v2910
    %v2912 = vand.u32 %v2911, 4294901760
    %2913 = vmatmul.f32.gmra.mxu0 %v2912
    %v2914 = vpop.f32.mrf.mxu0
    %v2915 = vadd.f32 %v2888, %v2914
    %2916 = vdwg.mxu0
    %2917 = vmatpush.msra.mxu0 0.0
    %2918 = vmatpush.msra.mxu0 0.0
    %2919 = vmatpush.msra.mxu0 0.0
    %2920 = vmatpush.msra.mxu0 0.0
    %2921 = vmatpush.msra.mxu0 0.0
    %2922 = vmatpush.msra.mxu0 0.0
    %2923 = vmatpush.msra.mxu0 0.0
    %2924 = vmatpush.msra.mxu0 0.0
    %2925 = vmatpush.msra.mxu0 0.0
    %2926 = vmatpush.msra.mxu0 0.0
    %2927 = vmatpush.msra.mxu0 0.0
    %2928 = vmatpush.msra.mxu0 0.0
    %v2929 = vand.u32 %v2786, 4294901760
    %v2930 = vsub.f32 %v2786, %v2929
    %v2931 = vand.u32 %v2930, 4294901760
    %2932 = vmatpush.msra.mxu0 %v2931
    %v2933 = vand.u32 %v2785, 4294901760
    %v2934 = vsub.f32 %v2785, %v2933
    %v2935 = vand.u32 %v2934, 4294901760
    %2936 = vmatpush.msra.mxu0 %v2935
    %v2937 = vand.u32 %v2784, 4294901760
    %v2938 = vsub.f32 %v2784, %v2937
    %v2939 = vand.u32 %v2938, 4294901760
    %2940 = vmatpush.msra.mxu0 %v2939
    %v2941 = vand.u32 %v2783, 4294901760
    %v2942 = vsub.f32 %v2783, %v2941
    %v2943 = vand.u32 %v2942, 4294901760
    %2944 = vmatpush.msra.mxu0 %v2943
    %v2945 = vand.u32 %v2788, 4294901760
    %2946 = vmatmul.f32.gmra.mxu0 %v2945
    %v2947 = vpop.f32.mrf.mxu0
    %v2948 = vadd.f32 %v2915, %v2947
    %2949 = vdwg.mxu0
    %2950 = vmatpush.msra.mxu0 0.0
    %2951 = vmatpush.msra.mxu0 0.0
    %2952 = vmatpush.msra.mxu0 0.0
    %2953 = vmatpush.msra.mxu0 0.0
    %2954 = vmatpush.msra.mxu0 0.0
    %2955 = vmatpush.msra.mxu0 0.0
    %2956 = vmatpush.msra.mxu0 0.0
    %2957 = vmatpush.msra.mxu0 0.0
    %2958 = vmatpush.msra.mxu0 0.0
    %2959 = vmatpush.msra.mxu0 0.0
    %2960 = vmatpush.msra.mxu0 0.0
    %2961 = vmatpush.msra.mxu0 0.0
    %v2962 = vand.u32 %v2786, 4294901760
    %2963 = vmatpush.msra.mxu0 %v2962
    %v2964 = vand.u32 %v2785, 4294901760
    %2965 = vmatpush.msra.mxu0 %v2964
    %v2966 = vand.u32 %v2784, 4294901760
    %2967 = vmatpush.msra.mxu0 %v2966
    %v2968 = vand.u32 %v2783, 4294901760
    %2969 = vmatpush.msra.mxu0 %v2968
    %v2970 = vand.u32 %v2788, 4294901760
    %2971 = vmatmul.f32.gmra.mxu0 %v2970
    %v2972 = vpop.f32.mrf.mxu0
    %v2973 = vadd.f32 %v2948, %v2972
    %2974 = vdwg.mxu0
    %v2975 = vld [vmem:[#allocation5 + $0x1f0] sm:$0xff]
    %v2976 = vld [vmem:[#allocation5 + $0x1f8] sm:$0xff]
    %v2977 = vld [vmem:[#allocation5 + $0x200] sm:$0xff]
    %v2978 = vld [vmem:[#allocation5 + $0x208] sm:$0xff]
    %v2979 = vld [vmem:[#allocation5 + $0x258] sm:$0x1]
    %v2981 = vsel %vm56, %v2781, 0
    %2983 = vmatpush.msra.mxu0 0.0
    %2984 = vmatpush.msra.mxu0 0.0
    %2985 = vmatpush.msra.mxu0 0.0
    %2986 = vmatpush.msra.mxu0 0.0
    %2987 = vmatpush.msra.mxu0 0.0
    %2988 = vmatpush.msra.mxu0 0.0
    %2989 = vmatpush.msra.mxu0 0.0
    %2990 = vmatpush.msra.mxu0 0.0
    %2991 = vmatpush.msra.mxu0 0.0
    %2992 = vmatpush.msra.mxu0 0.0
    %2993 = vmatpush.msra.mxu0 0.0
    %2994 = vmatpush.msra.mxu0 0.0
    %v2995 = vand.u32 %v2978, 4294901760
    %2996 = vmatpush.msra.mxu0 %v2995
    %v2997 = vand.u32 %v2977, 4294901760
    %2998 = vmatpush.msra.mxu0 %v2997
    %v2999 = vand.u32 %v2976, 4294901760
    %3000 = vmatpush.msra.mxu0 %v2999
    %v3001 = vand.u32 %v2975, 4294901760
    %3002 = vmatpush.msra.mxu0 %v3001
    %v3003 = vand.u32 %v2981, 4294901760
    %v3004 = vsub.f32 %v2981, %v3003
    %v3005 = vand.u32 %v3004, 4294901760
    %v3006 = vsub.f32 %v3004, %v3005
    %v3007 = vand.u32 %v3006, 4294901760
    %3008 = vmatmul.f32.gmra.mxu0 %v3007
    %v3009 = vpop.f32.mrf.mxu0
    %v3010 = vadd.f32 %v2979, %v3009
    %3011 = vdwg.mxu0
    %3012 = vmatpush.msra.mxu0 0.0
    %3013 = vmatpush.msra.mxu0 0.0
    %3014 = vmatpush.msra.mxu0 0.0
    %3015 = vmatpush.msra.mxu0 0.0
    %3016 = vmatpush.msra.mxu0 0.0
    %3017 = vmatpush.msra.mxu0 0.0
    %3018 = vmatpush.msra.mxu0 0.0
    %3019 = vmatpush.msra.mxu0 0.0
    %3020 = vmatpush.msra.mxu0 0.0
    %3021 = vmatpush.msra.mxu0 0.0
    %3022 = vmatpush.msra.mxu0 0.0
    %3023 = vmatpush.msra.mxu0 0.0
    %v3024 = vand.u32 %v2978, 4294901760
    %v3025 = vsub.f32 %v2978, %v3024
    %v3026 = vand.u32 %v3025, 4294901760
    %v3027 = vsub.f32 %v3025, %v3026
    %v3028 = vand.u32 %v3027, 4294901760
    %3029 = vmatpush.msra.mxu0 %v3028
    %v3030 = vand.u32 %v2977, 4294901760
    %v3031 = vsub.f32 %v2977, %v3030
    %v3032 = vand.u32 %v3031, 4294901760
    %v3033 = vsub.f32 %v3031, %v3032
    %v3034 = vand.u32 %v3033, 4294901760
    %3035 = vmatpush.msra.mxu0 %v3034
    %v3036 = vand.u32 %v2976, 4294901760
    %v3037 = vsub.f32 %v2976, %v3036
    %v3038 = vand.u32 %v3037, 4294901760
    %v3039 = vsub.f32 %v3037, %v3038
    %v3040 = vand.u32 %v3039, 4294901760
    %3041 = vmatpush.msra.mxu0 %v3040
    %v3042 = vand.u32 %v2975, 4294901760
    %v3043 = vsub.f32 %v2975, %v3042
    %v3044 = vand.u32 %v3043, 4294901760
    %v3045 = vsub.f32 %v3043, %v3044
    %v3046 = vand.u32 %v3045, 4294901760
    %3047 = vmatpush.msra.mxu0 %v3046
    %v3048 = vand.u32 %v2981, 4294901760
    %3049 = vmatmul.f32.gmra.mxu0 %v3048
    %v3050 = vpop.f32.mrf.mxu0
    %v3051 = vadd.f32 %v3010, %v3050
    %3052 = vdwg.mxu0
    %3053 = vmatpush.msra.mxu0 0.0
    %3054 = vmatpush.msra.mxu0 0.0
    %3055 = vmatpush.msra.mxu0 0.0
    %3056 = vmatpush.msra.mxu0 0.0
    %3057 = vmatpush.msra.mxu0 0.0
    %3058 = vmatpush.msra.mxu0 0.0
    %3059 = vmatpush.msra.mxu0 0.0
    %3060 = vmatpush.msra.mxu0 0.0
    %3061 = vmatpush.msra.mxu0 0.0
    %3062 = vmatpush.msra.mxu0 0.0
    %3063 = vmatpush.msra.mxu0 0.0
    %3064 = vmatpush.msra.mxu0 0.0
    %v3065 = vand.u32 %v2978, 4294901760
    %v3066 = vsub.f32 %v2978, %v3065
    %3067 = vmatpush.msra.mxu0 %v3066
    %v3068 = vand.u32 %v2977, 4294901760
    %v3069 = vsub.f32 %v2977, %v3068
    %3070 = vmatpush.msra.mxu0 %v3069
    %v3071 = vand.u32 %v2976, 4294901760
    %v3072 = vsub.f32 %v2976, %v3071
    %3073 = vmatpush.msra.mxu0 %v3072
    %v3074 = vand.u32 %v2975, 4294901760
    %v3075 = vsub.f32 %v2975, %v3074
    %3076 = vmatpush.msra.mxu0 %v3075
    %v3077 = vand.u32 %v2981, 4294901760
    %v3078 = vsub.f32 %v2981, %v3077
    %3079 = vmatmul.f32.gmra.mxu0 %v3078
    %v3080 = vpop.f32.mrf.mxu0
    %v3081 = vadd.f32 %v3051, %v3080
    %3082 = vdwg.mxu0
    %3083 = vmatpush.msra.mxu0 0.0
    %3084 = vmatpush.msra.mxu0 0.0
    %3085 = vmatpush.msra.mxu0 0.0
    %3086 = vmatpush.msra.mxu0 0.0
    %3087 = vmatpush.msra.mxu0 0.0
    %3088 = vmatpush.msra.mxu0 0.0
    %3089 = vmatpush.msra.mxu0 0.0
    %3090 = vmatpush.msra.mxu0 0.0
    %3091 = vmatpush.msra.mxu0 0.0
    %3092 = vmatpush.msra.mxu0 0.0
    %3093 = vmatpush.msra.mxu0 0.0
    %3094 = vmatpush.msra.mxu0 0.0
    %v3095 = vand.u32 %v2978, 4294901760
    %3096 = vmatpush.msra.mxu0 %v3095
    %v3097 = vand.u32 %v2977, 4294901760
    %3098 = vmatpush.msra.mxu0 %v3097
    %v3099 = vand.u32 %v2976, 4294901760
    %3100 = vmatpush.msra.mxu0 %v3099
    %v3101 = vand.u32 %v2975, 4294901760
    %3102 = vmatpush.msra.mxu0 %v3101
    %v3103 = vand.u32 %v2981, 4294901760
    %v3104 = vsub.f32 %v2981, %v3103
    %v3105 = vand.u32 %v3104, 4294901760
    %3106 = vmatmul.f32.gmra.mxu0 %v3105
    %v3107 = vpop.f32.mrf.mxu0
    %v3108 = vadd.f32 %v3081, %v3107
    %3109 = vdwg.mxu0
    %3110 = vmatpush.msra.mxu0 0.0
    %3111 = vmatpush.msra.mxu0 0.0
    %3112 = vmatpush.msra.mxu0 0.0
    %3113 = vmatpush.msra.mxu0 0.0
    %3114 = vmatpush.msra.mxu0 0.0
    %3115 = vmatpush.msra.mxu0 0.0
    %3116 = vmatpush.msra.mxu0 0.0
    %3117 = vmatpush.msra.mxu0 0.0
    %3118 = vmatpush.msra.mxu0 0.0
    %3119 = vmatpush.msra.mxu0 0.0
    %3120 = vmatpush.msra.mxu0 0.0
    %3121 = vmatpush.msra.mxu0 0.0
    %v3122 = vand.u32 %v2978, 4294901760
    %v3123 = vsub.f32 %v2978, %v3122
    %v3124 = vand.u32 %v3123, 4294901760
    %3125 = vmatpush.msra.mxu0 %v3124
    %v3126 = vand.u32 %v2977, 4294901760
    %v3127 = vsub.f32 %v2977, %v3126
    %v3128 = vand.u32 %v3127, 4294901760
    %3129 = vmatpush.msra.mxu0 %v3128
    %v3130 = vand.u32 %v2976, 4294901760
    %v3131 = vsub.f32 %v2976, %v3130
    %v3132 = vand.u32 %v3131, 4294901760
    %3133 = vmatpush.msra.mxu0 %v3132
    %v3134 = vand.u32 %v2975, 4294901760
    %v3135 = vsub.f32 %v2975, %v3134
    %v3136 = vand.u32 %v3135, 4294901760
    %3137 = vmatpush.msra.mxu0 %v3136
    %v3138 = vand.u32 %v2981, 4294901760
    %3139 = vmatmul.f32.gmra.mxu0 %v3138
    %v3140 = vpop.f32.mrf.mxu0
    %v3141 = vadd.f32 %v3108, %v3140
    %3142 = vdwg.mxu0
    %3143 = vmatpush.msra.mxu0 0.0
    %3144 = vmatpush.msra.mxu0 0.0
    %3145 = vmatpush.msra.mxu0 0.0
    %3146 = vmatpush.msra.mxu0 0.0
    %3147 = vmatpush.msra.mxu0 0.0
    %3148 = vmatpush.msra.mxu0 0.0
    %3149 = vmatpush.msra.mxu0 0.0
    %3150 = vmatpush.msra.mxu0 0.0
    %3151 = vmatpush.msra.mxu0 0.0
    %3152 = vmatpush.msra.mxu0 0.0
    %3153 = vmatpush.msra.mxu0 0.0
    %3154 = vmatpush.msra.mxu0 0.0
    %v3155 = vand.u32 %v2978, 4294901760
    %3156 = vmatpush.msra.mxu0 %v3155
    %v3157 = vand.u32 %v2977, 4294901760
    %3158 = vmatpush.msra.mxu0 %v3157
    %v3159 = vand.u32 %v2976, 4294901760
    %3160 = vmatpush.msra.mxu0 %v3159
    %v3161 = vand.u32 %v2975, 4294901760
    %3162 = vmatpush.msra.mxu0 %v3161
    %v3163 = vand.u32 %v2981, 4294901760
    %3164 = vmatmul.f32.gmra.mxu0 %v3163
    %v3165 = vpop.f32.mrf.mxu0
    %v3166 = vadd.f32 %v3141, %v3165
    %3167 = vdwg.mxu0
    %v3168 = vadd.f32 %v2973, %v3166
    %v3169 = vxor.u32 %v3168, 2147483648
    %v3170 = vmul.f32 %v3169, 1.442695
    %v3171 = vpow.pop %v3170
    %v3172 = vadd.f32 %v3171, 1.0
    %v3173 = vrcp.pop %v3172
    %v3174 = vmul.f32 %v3172, %v3173
    %v3175 = vsub.f32 1.0, %v3174
    %v3176 = vmul.f32 %v3173, %v3175
    %v3177 = vadd.f32 %v3173, %v3176
    %vm3178 = vweird.f32 %v3172
    %vm3179 = vweird.f32 %v3173
    %vm3180 = vmor %vm3178, %vm3179
    %v3181 = vsel %vm3180, %v3173, %v3177
    %v3182 = vand.u32 2147483647, %v3172
    %vm3183 = vcmp.eq.f32.partialorder %v3182, 8.507059e+37
    %v3184 = vand.u32 %v3172, 2147483648
    %v3185 = vor.u32 1.1754944e-38, %v3184
    %v3186 = vsel %vm3183, %v3185, %v3181
    %v3187 = vmul.f32 1.0, %v3186
    %v3188 = vld [vmem:[#allocation5 + $0x260] sm:$0x1]
    %v3189 = vld [vmem:[#allocation5 + $0x1b0] sm:$0xff]
    %v3190 = vld [vmem:[#allocation5 + $0x1b8] sm:$0xff]
    %v3191 = vld [vmem:[#allocation5 + $0x1c0] sm:$0xff]
    %v3192 = vld [vmem:[#allocation5 + $0x1c8] sm:$0xff]
    %3193 = vmatpush.msra.mxu0 0.0
    %3194 = vmatpush.msra.mxu0 0.0
    %3195 = vmatpush.msra.mxu0 0.0
    %3196 = vmatpush.msra.mxu0 0.0
    %3197 = vmatpush.msra.mxu0 0.0
    %3198 = vmatpush.msra.mxu0 0.0
    %3199 = vmatpush.msra.mxu0 0.0
    %3200 = vmatpush.msra.mxu0 0.0
    %3201 = vmatpush.msra.mxu0 0.0
    %3202 = vmatpush.msra.mxu0 0.0
    %3203 = vmatpush.msra.mxu0 0.0
    %3204 = vmatpush.msra.mxu0 0.0
    %v3205 = vand.u32 %v3192, 4294901760
    %3206 = vmatpush.msra.mxu0 %v3205
    %v3207 = vand.u32 %v3191, 4294901760
    %3208 = vmatpush.msra.mxu0 %v3207
    %v3209 = vand.u32 %v3190, 4294901760
    %3210 = vmatpush.msra.mxu0 %v3209
    %v3211 = vand.u32 %v3189, 4294901760
    %3212 = vmatpush.msra.mxu0 %v3211
    %v3213 = vand.u32 %v2788, 4294901760
    %v3214 = vsub.f32 %v2788, %v3213
    %v3215 = vand.u32 %v3214, 4294901760
    %v3216 = vsub.f32 %v3214, %v3215
    %v3217 = vand.u32 %v3216, 4294901760
    %3218 = vmatmul.f32.gmra.mxu0 %v3217
    %v3219 = vpop.f32.mrf.mxu0
    %v3220 = vadd.f32 %v3188, %v3219
    %3221 = vdwg.mxu0
    %3222 = vmatpush.msra.mxu0 0.0
    %3223 = vmatpush.msra.mxu0 0.0
    %3224 = vmatpush.msra.mxu0 0.0
    %3225 = vmatpush.msra.mxu0 0.0
    %3226 = vmatpush.msra.mxu0 0.0
    %3227 = vmatpush.msra.mxu0 0.0
    %3228 = vmatpush.msra.mxu0 0.0
    %3229 = vmatpush.msra.mxu0 0.0
    %3230 = vmatpush.msra.mxu0 0.0
    %3231 = vmatpush.msra.mxu0 0.0
    %3232 = vmatpush.msra.mxu0 0.0
    %3233 = vmatpush.msra.mxu0 0.0
    %v3234 = vand.u32 %v3192, 4294901760
    %v3235 = vsub.f32 %v3192, %v3234
    %v3236 = vand.u32 %v3235, 4294901760
    %v3237 = vsub.f32 %v3235, %v3236
    %v3238 = vand.u32 %v3237, 4294901760
    %3239 = vmatpush.msra.mxu0 %v3238
    %v3240 = vand.u32 %v3191, 4294901760
    %v3241 = vsub.f32 %v3191, %v3240
    %v3242 = vand.u32 %v3241, 4294901760
    %v3243 = vsub.f32 %v3241, %v3242
    %v3244 = vand.u32 %v3243, 4294901760
    %3245 = vmatpush.msra.mxu0 %v3244
    %v3246 = vand.u32 %v3190, 4294901760
    %v3247 = vsub.f32 %v3190, %v3246
    %v3248 = vand.u32 %v3247, 4294901760
    %v3249 = vsub.f32 %v3247, %v3248
    %v3250 = vand.u32 %v3249, 4294901760
    %3251 = vmatpush.msra.mxu0 %v3250
    %v3252 = vand.u32 %v3189, 4294901760
    %v3253 = vsub.f32 %v3189, %v3252
    %v3254 = vand.u32 %v3253, 4294901760
    %v3255 = vsub.f32 %v3253, %v3254
    %v3256 = vand.u32 %v3255, 4294901760
    %3257 = vmatpush.msra.mxu0 %v3256
    %v3258 = vand.u32 %v2788, 4294901760
    %3259 = vmatmul.f32.gmra.mxu0 %v3258
    %v3260 = vpop.f32.mrf.mxu0
    %v3261 = vadd.f32 %v3220, %v3260
    %3262 = vdwg.mxu0
    %3263 = vmatpush.msra.mxu0 0.0
    %3264 = vmatpush.msra.mxu0 0.0
    %3265 = vmatpush.msra.mxu0 0.0
    %3266 = vmatpush.msra.mxu0 0.0
    %3267 = vmatpush.msra.mxu0 0.0
    %3268 = vmatpush.msra.mxu0 0.0
    %3269 = vmatpush.msra.mxu0 0.0
    %3270 = vmatpush.msra.mxu0 0.0
    %3271 = vmatpush.msra.mxu0 0.0
    %3272 = vmatpush.msra.mxu0 0.0
    %3273 = vmatpush.msra.mxu0 0.0
    %3274 = vmatpush.msra.mxu0 0.0
    %v3275 = vand.u32 %v3192, 4294901760
    %v3276 = vsub.f32 %v3192, %v3275
    %3277 = vmatpush.msra.mxu0 %v3276
    %v3278 = vand.u32 %v3191, 4294901760
    %v3279 = vsub.f32 %v3191, %v3278
    %3280 = vmatpush.msra.mxu0 %v3279
    %v3281 = vand.u32 %v3190, 4294901760
    %v3282 = vsub.f32 %v3190, %v3281
    %3283 = vmatpush.msra.mxu0 %v3282
    %v3284 = vand.u32 %v3189, 4294901760
    %v3285 = vsub.f32 %v3189, %v3284
    %3286 = vmatpush.msra.mxu0 %v3285
    %v3287 = vand.u32 %v2788, 4294901760
    %v3288 = vsub.f32 %v2788, %v3287
    %3289 = vmatmul.f32.gmra.mxu0 %v3288
    %v3290 = vpop.f32.mrf.mxu0
    %v3291 = vadd.f32 %v3261, %v3290
    %3292 = vdwg.mxu0
    %3293 = vmatpush.msra.mxu0 0.0
    %3294 = vmatpush.msra.mxu0 0.0
    %3295 = vmatpush.msra.mxu0 0.0
    %3296 = vmatpush.msra.mxu0 0.0
    %3297 = vmatpush.msra.mxu0 0.0
    %3298 = vmatpush.msra.mxu0 0.0
    %3299 = vmatpush.msra.mxu0 0.0
    %3300 = vmatpush.msra.mxu0 0.0
    %3301 = vmatpush.msra.mxu0 0.0
    %3302 = vmatpush.msra.mxu0 0.0
    %3303 = vmatpush.msra.mxu0 0.0
    %3304 = vmatpush.msra.mxu0 0.0
    %v3305 = vand.u32 %v3192, 4294901760
    %3306 = vmatpush.msra.mxu0 %v3305
    %v3307 = vand.u32 %v3191, 4294901760
    %3308 = vmatpush.msra.mxu0 %v3307
    %v3309 = vand.u32 %v3190, 4294901760
    %3310 = vmatpush.msra.mxu0 %v3309
    %v3311 = vand.u32 %v3189, 4294901760
    %3312 = vmatpush.msra.mxu0 %v3311
    %v3313 = vand.u32 %v2788, 4294901760
    %v3314 = vsub.f32 %v2788, %v3313
    %v3315 = vand.u32 %v3314, 4294901760
    %3316 = vmatmul.f32.gmra.mxu0 %v3315
    %v3317 = vpop.f32.mrf.mxu0
    %v3318 = vadd.f32 %v3291, %v3317
    %3319 = vdwg.mxu0
    %3320 = vmatpush.msra.mxu0 0.0
    %3321 = vmatpush.msra.mxu0 0.0
    %3322 = vmatpush.msra.mxu0 0.0
    %3323 = vmatpush.msra.mxu0 0.0
    %3324 = vmatpush.msra.mxu0 0.0
    %3325 = vmatpush.msra.mxu0 0.0
    %3326 = vmatpush.msra.mxu0 0.0
    %3327 = vmatpush.msra.mxu0 0.0
    %3328 = vmatpush.msra.mxu0 0.0
    %3329 = vmatpush.msra.mxu0 0.0
    %3330 = vmatpush.msra.mxu0 0.0
    %3331 = vmatpush.msra.mxu0 0.0
    %v3332 = vand.u32 %v3192, 4294901760
    %v3333 = vsub.f32 %v3192, %v3332
    %v3334 = vand.u32 %v3333, 4294901760
    %3335 = vmatpush.msra.mxu0 %v3334
    %v3336 = vand.u32 %v3191, 4294901760
    %v3337 = vsub.f32 %v3191, %v3336
    %v3338 = vand.u32 %v3337, 4294901760
    %3339 = vmatpush.msra.mxu0 %v3338
    %v3340 = vand.u32 %v3190, 4294901760
    %v3341 = vsub.f32 %v3190, %v3340
    %v3342 = vand.u32 %v3341, 4294901760
    %3343 = vmatpush.msra.mxu0 %v3342
    %v3344 = vand.u32 %v3189, 4294901760
    %v3345 = vsub.f32 %v3189, %v3344
    %v3346 = vand.u32 %v3345, 4294901760
    %3347 = vmatpush.msra.mxu0 %v3346
    %v3348 = vand.u32 %v2788, 4294901760
    %3349 = vmatmul.f32.gmra.mxu0 %v3348
    %v3350 = vpop.f32.mrf.mxu0
    %v3351 = vadd.f32 %v3318, %v3350
    %3352 = vdwg.mxu0
    %3353 = vmatpush.msra.mxu0 0.0
    %3354 = vmatpush.msra.mxu0 0.0
    %3355 = vmatpush.msra.mxu0 0.0
    %3356 = vmatpush.msra.mxu0 0.0
    %3357 = vmatpush.msra.mxu0 0.0
    %3358 = vmatpush.msra.mxu0 0.0
    %3359 = vmatpush.msra.mxu0 0.0
    %3360 = vmatpush.msra.mxu0 0.0
    %3361 = vmatpush.msra.mxu0 0.0
    %3362 = vmatpush.msra.mxu0 0.0
    %3363 = vmatpush.msra.mxu0 0.0
    %3364 = vmatpush.msra.mxu0 0.0
    %v3365 = vand.u32 %v3192, 4294901760
    %3366 = vmatpush.msra.mxu0 %v3365
    %v3367 = vand.u32 %v3191, 4294901760
    %3368 = vmatpush.msra.mxu0 %v3367
    %v3369 = vand.u32 %v3190, 4294901760
    %3370 = vmatpush.msra.mxu0 %v3369
    %v3371 = vand.u32 %v3189, 4294901760
    %3372 = vmatpush.msra.mxu0 %v3371
    %v3373 = vand.u32 %v2788, 4294901760
    %3374 = vmatmul.f32.gmra.mxu0 %v3373
    %v3375 = vpop.f32.mrf.mxu0
    %v3376 = vadd.f32 %v3351, %v3375
    %3377 = vdwg.mxu0
    %v3378 = vld [vmem:[#allocation5 + $0x210] sm:$0xff]
    %v3379 = vld [vmem:[#allocation5 + $0x218] sm:$0xff]
    %v3380 = vld [vmem:[#allocation5 + $0x220] sm:$0xff]
    %v3381 = vld [vmem:[#allocation5 + $0x228] sm:$0xff]
    %v3382 = vld [vmem:[#allocation5 + $0x268] sm:$0x1]
    %3383 = vmatpush.msra.mxu0 0.0
    %3384 = vmatpush.msra.mxu0 0.0
    %3385 = vmatpush.msra.mxu0 0.0
    %3386 = vmatpush.msra.mxu0 0.0
    %3387 = vmatpush.msra.mxu0 0.0
    %3388 = vmatpush.msra.mxu0 0.0
    %3389 = vmatpush.msra.mxu0 0.0
    %3390 = vmatpush.msra.mxu0 0.0
    %3391 = vmatpush.msra.mxu0 0.0
    %3392 = vmatpush.msra.mxu0 0.0
    %3393 = vmatpush.msra.mxu0 0.0
    %3394 = vmatpush.msra.mxu0 0.0
    %v3395 = vand.u32 %v3381, 4294901760
    %3396 = vmatpush.msra.mxu0 %v3395
    %v3397 = vand.u32 %v3380, 4294901760
    %3398 = vmatpush.msra.mxu0 %v3397
    %v3399 = vand.u32 %v3379, 4294901760
    %3400 = vmatpush.msra.mxu0 %v3399
    %v3401 = vand.u32 %v3378, 4294901760
    %3402 = vmatpush.msra.mxu0 %v3401
    %v3403 = vand.u32 %v2981, 4294901760
    %v3404 = vsub.f32 %v2981, %v3403
    %v3405 = vand.u32 %v3404, 4294901760
    %v3406 = vsub.f32 %v3404, %v3405
    %v3407 = vand.u32 %v3406, 4294901760
    %3408 = vmatmul.f32.gmra.mxu0 %v3407
    %v3409 = vpop.f32.mrf.mxu0
    %v3410 = vadd.f32 %v3382, %v3409
    %3411 = vdwg.mxu0
    %3412 = vmatpush.msra.mxu0 0.0
    %3413 = vmatpush.msra.mxu0 0.0
    %3414 = vmatpush.msra.mxu0 0.0
    %3415 = vmatpush.msra.mxu0 0.0
    %3416 = vmatpush.msra.mxu0 0.0
    %3417 = vmatpush.msra.mxu0 0.0
    %3418 = vmatpush.msra.mxu0 0.0
    %3419 = vmatpush.msra.mxu0 0.0
    %3420 = vmatpush.msra.mxu0 0.0
    %3421 = vmatpush.msra.mxu0 0.0
    %3422 = vmatpush.msra.mxu0 0.0
    %3423 = vmatpush.msra.mxu0 0.0
    %v3424 = vand.u32 %v3381, 4294901760
    %v3425 = vsub.f32 %v3381, %v3424
    %v3426 = vand.u32 %v3425, 4294901760
    %v3427 = vsub.f32 %v3425, %v3426
    %v3428 = vand.u32 %v3427, 4294901760
    %3429 = vmatpush.msra.mxu0 %v3428
    %v3430 = vand.u32 %v3380, 4294901760
    %v3431 = vsub.f32 %v3380, %v3430
    %v3432 = vand.u32 %v3431, 4294901760
    %v3433 = vsub.f32 %v3431, %v3432
    %v3434 = vand.u32 %v3433, 4294901760
    %3435 = vmatpush.msra.mxu0 %v3434
    %v3436 = vand.u32 %v3379, 4294901760
    %v3437 = vsub.f32 %v3379, %v3436
    %v3438 = vand.u32 %v3437, 4294901760
    %v3439 = vsub.f32 %v3437, %v3438
    %v3440 = vand.u32 %v3439, 4294901760
    %3441 = vmatpush.msra.mxu0 %v3440
    %v3442 = vand.u32 %v3378, 4294901760
    %v3443 = vsub.f32 %v3378, %v3442
    %v3444 = vand.u32 %v3443, 4294901760
    %v3445 = vsub.f32 %v3443, %v3444
    %v3446 = vand.u32 %v3445, 4294901760
    %3447 = vmatpush.msra.mxu0 %v3446
    %v3448 = vand.u32 %v2981, 4294901760
    %3449 = vmatmul.f32.gmra.mxu0 %v3448
    %v3450 = vpop.f32.mrf.mxu0
    %v3451 = vadd.f32 %v3410, %v3450
    %3452 = vdwg.mxu0
    %3453 = vmatpush.msra.mxu0 0.0
    %3454 = vmatpush.msra.mxu0 0.0
    %3455 = vmatpush.msra.mxu0 0.0
    %3456 = vmatpush.msra.mxu0 0.0
    %3457 = vmatpush.msra.mxu0 0.0
    %3458 = vmatpush.msra.mxu0 0.0
    %3459 = vmatpush.msra.mxu0 0.0
    %3460 = vmatpush.msra.mxu0 0.0
    %3461 = vmatpush.msra.mxu0 0.0
    %3462 = vmatpush.msra.mxu0 0.0
    %3463 = vmatpush.msra.mxu0 0.0
    %3464 = vmatpush.msra.mxu0 0.0
    %v3465 = vand.u32 %v3381, 4294901760
    %v3466 = vsub.f32 %v3381, %v3465
    %3467 = vmatpush.msra.mxu0 %v3466
    %v3468 = vand.u32 %v3380, 4294901760
    %v3469 = vsub.f32 %v3380, %v3468
    %3470 = vmatpush.msra.mxu0 %v3469
    %v3471 = vand.u32 %v3379, 4294901760
    %v3472 = vsub.f32 %v3379, %v3471
    %3473 = vmatpush.msra.mxu0 %v3472
    %v3474 = vand.u32 %v3378, 4294901760
    %v3475 = vsub.f32 %v3378, %v3474
    %3476 = vmatpush.msra.mxu0 %v3475
    %v3477 = vand.u32 %v2981, 4294901760
    %v3478 = vsub.f32 %v2981, %v3477
    %3479 = vmatmul.f32.gmra.mxu0 %v3478
    %v3480 = vpop.f32.mrf.mxu0
    %v3481 = vadd.f32 %v3451, %v3480
    %3482 = vdwg.mxu0
    %3483 = vmatpush.msra.mxu0 0.0
    %3484 = vmatpush.msra.mxu0 0.0
    %3485 = vmatpush.msra.mxu0 0.0
    %3486 = vmatpush.msra.mxu0 0.0
    %3487 = vmatpush.msra.mxu0 0.0
    %3488 = vmatpush.msra.mxu0 0.0
    %3489 = vmatpush.msra.mxu0 0.0
    %3490 = vmatpush.msra.mxu0 0.0
    %3491 = vmatpush.msra.mxu0 0.0
    %3492 = vmatpush.msra.mxu0 0.0
    %3493 = vmatpush.msra.mxu0 0.0
    %3494 = vmatpush.msra.mxu0 0.0
    %v3495 = vand.u32 %v3381, 4294901760
    %3496 = vmatpush.msra.mxu0 %v3495
    %v3497 = vand.u32 %v3380, 4294901760
    %3498 = vmatpush.msra.mxu0 %v3497
    %v3499 = vand.u32 %v3379, 4294901760
    %3500 = vmatpush.msra.mxu0 %v3499
    %v3501 = vand.u32 %v3378, 4294901760
    %3502 = vmatpush.msra.mxu0 %v3501
    %v3503 = vand.u32 %v2981, 4294901760
    %v3504 = vsub.f32 %v2981, %v3503
    %v3505 = vand.u32 %v3504, 4294901760
    %3506 = vmatmul.f32.gmra.mxu0 %v3505
    %v3507 = vpop.f32.mrf.mxu0
    %v3508 = vadd.f32 %v3481, %v3507
    %3509 = vdwg.mxu0
    %3510 = vmatpush.msra.mxu0 0.0
    %3511 = vmatpush.msra.mxu0 0.0
    %3512 = vmatpush.msra.mxu0 0.0
    %3513 = vmatpush.msra.mxu0 0.0
    %3514 = vmatpush.msra.mxu0 0.0
    %3515 = vmatpush.msra.mxu0 0.0
    %3516 = vmatpush.msra.mxu0 0.0
    %3517 = vmatpush.msra.mxu0 0.0
    %3518 = vmatpush.msra.mxu0 0.0
    %3519 = vmatpush.msra.mxu0 0.0
    %3520 = vmatpush.msra.mxu0 0.0
    %3521 = vmatpush.msra.mxu0 0.0
    %v3522 = vand.u32 %v3381, 4294901760
    %v3523 = vsub.f32 %v3381, %v3522
    %v3524 = vand.u32 %v3523, 4294901760
    %3525 = vmatpush.msra.mxu0 %v3524
    %v3526 = vand.u32 %v3380, 4294901760
    %v3527 = vsub.f32 %v3380, %v3526
    %v3528 = vand.u32 %v3527, 4294901760
    %3529 = vmatpush.msra.mxu0 %v3528
    %v3530 = vand.u32 %v3379, 4294901760
    %v3531 = vsub.f32 %v3379, %v3530
    %v3532 = vand.u32 %v3531, 4294901760
    %3533 = vmatpush.msra.mxu0 %v3532
    %v3534 = vand.u32 %v3378, 4294901760
    %v3535 = vsub.f32 %v3378, %v3534
    %v3536 = vand.u32 %v3535, 4294901760
    %3537 = vmatpush.msra.mxu0 %v3536
    %v3538 = vand.u32 %v2981, 4294901760
    %3539 = vmatmul.f32.gmra.mxu0 %v3538
    %v3540 = vpop.f32.mrf.mxu0
    %v3541 = vadd.f32 %v3508, %v3540
    %3542 = vdwg.mxu0
    %3543 = vmatpush.msra.mxu0 0.0
    %3544 = vmatpush.msra.mxu0 0.0
    %3545 = vmatpush.msra.mxu0 0.0
    %3546 = vmatpush.msra.mxu0 0.0
    %3547 = vmatpush.msra.mxu0 0.0
    %3548 = vmatpush.msra.mxu0 0.0
    %3549 = vmatpush.msra.mxu0 0.0
    %3550 = vmatpush.msra.mxu0 0.0
    %3551 = vmatpush.msra.mxu0 0.0
    %3552 = vmatpush.msra.mxu0 0.0
    %3553 = vmatpush.msra.mxu0 0.0
    %3554 = vmatpush.msra.mxu0 0.0
    %v3555 = vand.u32 %v3381, 4294901760
    %3556 = vmatpush.msra.mxu0 %v3555
    %v3557 = vand.u32 %v3380, 4294901760
    %3558 = vmatpush.msra.mxu0 %v3557
    %v3559 = vand.u32 %v3379, 4294901760
    %3560 = vmatpush.msra.mxu0 %v3559
    %v3561 = vand.u32 %v3378, 4294901760
    %3562 = vmatpush.msra.mxu0 %v3561
    %v3563 = vand.u32 %v2981, 4294901760
    %3564 = vmatmul.f32.gmra.mxu0 %v3563
    %v3565 = vpop.f32.mrf.mxu0
    %v3566 = vadd.f32 %v3541, %v3565
    %3567 = vdwg.mxu0
    %v3568 = vadd.f32 %v3376, %v3566
    %v3569 = vxor.u32 %v3568, 2147483648
    %v3570 = vmul.f32 %v3569, 1.442695
    %v3571 = vpow.pop %v3570
    %v3572 = vadd.f32 %v3571, 1.0
    %v3573 = vrcp.pop %v3572
    %v3574 = vmul.f32 %v3572, %v3573
    %v3575 = vsub.f32 1.0, %v3574
    %v3576 = vmul.f32 %v3573, %v3575
    %v3577 = vadd.f32 %v3573, %v3576
    %vm3578 = vweird.f32 %v3572
    %vm3579 = vweird.f32 %v3573
    %vm3580 = vmor %vm3578, %vm3579
    %v3581 = vsel %vm3580, %v3573, %v3577
    %v3582 = vand.u32 2147483647, %v3572
    %vm3583 = vcmp.eq.f32.partialorder %v3582, 8.507059e+37
    %v3584 = vand.u32 %v3572, 2147483648
    %v3585 = vor.u32 1.1754944e-38, %v3584
    %v3586 = vsel %vm3583, %v3585, %v3581
    %v3587 = vmul.f32 1.0, %v3586
    %v3588 = vld [vmem:[#allocation5 + $0x270] sm:$0x1]
    %v3589 = vld [vmem:[#allocation5 + $0x1d0] sm:$0xff]
    %v3590 = vld [vmem:[#allocation5 + $0x1d8] sm:$0xff]
    %v3591 = vld [vmem:[#allocation5 + $0x1e0] sm:$0xff]
    %v3592 = vld [vmem:[#allocation5 + $0x1e8] sm:$0xff]
    %3593 = vmatpush.msra.mxu0 0.0
    %3594 = vmatpush.msra.mxu0 0.0
    %3595 = vmatpush.msra.mxu0 0.0
    %3596 = vmatpush.msra.mxu0 0.0
    %3597 = vmatpush.msra.mxu0 0.0
    %3598 = vmatpush.msra.mxu0 0.0
    %3599 = vmatpush.msra.mxu0 0.0
    %3600 = vmatpush.msra.mxu0 0.0
    %3601 = vmatpush.msra.mxu0 0.0
    %3602 = vmatpush.msra.mxu0 0.0
    %3603 = vmatpush.msra.mxu0 0.0
    %3604 = vmatpush.msra.mxu0 0.0
    %v3605 = vand.u32 %v3592, 4294901760
    %3606 = vmatpush.msra.mxu0 %v3605
    %v3607 = vand.u32 %v3591, 4294901760
    %3608 = vmatpush.msra.mxu0 %v3607
    %v3609 = vand.u32 %v3590, 4294901760
    %3610 = vmatpush.msra.mxu0 %v3609
    %v3611 = vand.u32 %v3589, 4294901760
    %3612 = vmatpush.msra.mxu0 %v3611
    %v3613 = vand.u32 %v2788, 4294901760
    %v3614 = vsub.f32 %v2788, %v3613
    %v3615 = vand.u32 %v3614, 4294901760
    %v3616 = vsub.f32 %v3614, %v3615
    %v3617 = vand.u32 %v3616, 4294901760
    %3618 = vmatmul.f32.gmra.mxu0 %v3617
    %v3619 = vpop.f32.mrf.mxu0
    %v3620 = vadd.f32 %v3588, %v3619
    %3621 = vdwg.mxu0
    %3622 = vmatpush.msra.mxu0 0.0
    %3623 = vmatpush.msra.mxu0 0.0
    %3624 = vmatpush.msra.mxu0 0.0
    %3625 = vmatpush.msra.mxu0 0.0
    %3626 = vmatpush.msra.mxu0 0.0
    %3627 = vmatpush.msra.mxu0 0.0
    %3628 = vmatpush.msra.mxu0 0.0
    %3629 = vmatpush.msra.mxu0 0.0
    %3630 = vmatpush.msra.mxu0 0.0
    %3631 = vmatpush.msra.mxu0 0.0
    %3632 = vmatpush.msra.mxu0 0.0
    %3633 = vmatpush.msra.mxu0 0.0
    %v3634 = vand.u32 %v3592, 4294901760
    %v3635 = vsub.f32 %v3592, %v3634
    %v3636 = vand.u32 %v3635, 4294901760
    %v3637 = vsub.f32 %v3635, %v3636
    %v3638 = vand.u32 %v3637, 4294901760
    %3639 = vmatpush.msra.mxu0 %v3638
    %v3640 = vand.u32 %v3591, 4294901760
    %v3641 = vsub.f32 %v3591, %v3640
    %v3642 = vand.u32 %v3641, 4294901760
    %v3643 = vsub.f32 %v3641, %v3642
    %v3644 = vand.u32 %v3643, 4294901760
    %3645 = vmatpush.msra.mxu0 %v3644
    %v3646 = vand.u32 %v3590, 4294901760
    %v3647 = vsub.f32 %v3590, %v3646
    %v3648 = vand.u32 %v3647, 4294901760
    %v3649 = vsub.f32 %v3647, %v3648
    %v3650 = vand.u32 %v3649, 4294901760
    %3651 = vmatpush.msra.mxu0 %v3650
    %v3652 = vand.u32 %v3589, 4294901760
    %v3653 = vsub.f32 %v3589, %v3652
    %v3654 = vand.u32 %v3653, 4294901760
    %v3655 = vsub.f32 %v3653, %v3654
    %v3656 = vand.u32 %v3655, 4294901760
    %3657 = vmatpush.msra.mxu0 %v3656
    %v3658 = vand.u32 %v2788, 4294901760
    %3659 = vmatmul.f32.gmra.mxu0 %v3658
    %v3660 = vpop.f32.mrf.mxu0
    %v3661 = vadd.f32 %v3620, %v3660
    %3662 = vdwg.mxu0
    %3663 = vmatpush.msra.mxu0 0.0
    %3664 = vmatpush.msra.mxu0 0.0
    %3665 = vmatpush.msra.mxu0 0.0
    %3666 = vmatpush.msra.mxu0 0.0
    %3667 = vmatpush.msra.mxu0 0.0
    %3668 = vmatpush.msra.mxu0 0.0
    %3669 = vmatpush.msra.mxu0 0.0
    %3670 = vmatpush.msra.mxu0 0.0
    %3671 = vmatpush.msra.mxu0 0.0
    %3672 = vmatpush.msra.mxu0 0.0
    %3673 = vmatpush.msra.mxu0 0.0
    %3674 = vmatpush.msra.mxu0 0.0
    %v3675 = vand.u32 %v3592, 4294901760
    %v3676 = vsub.f32 %v3592, %v3675
    %3677 = vmatpush.msra.mxu0 %v3676
    %v3678 = vand.u32 %v3591, 4294901760
    %v3679 = vsub.f32 %v3591, %v3678
    %3680 = vmatpush.msra.mxu0 %v3679
    %v3681 = vand.u32 %v3590, 4294901760
    %v3682 = vsub.f32 %v3590, %v3681
    %3683 = vmatpush.msra.mxu0 %v3682
    %v3684 = vand.u32 %v3589, 4294901760
    %v3685 = vsub.f32 %v3589, %v3684
    %3686 = vmatpush.msra.mxu0 %v3685
    %v3687 = vand.u32 %v2788, 4294901760
    %v3688 = vsub.f32 %v2788, %v3687
    %3689 = vmatmul.f32.gmra.mxu0 %v3688
    %v3690 = vpop.f32.mrf.mxu0
    %v3691 = vadd.f32 %v3661, %v3690
    %3692 = vdwg.mxu0
    %3693 = vmatpush.msra.mxu0 0.0
    %3694 = vmatpush.msra.mxu0 0.0
    %3695 = vmatpush.msra.mxu0 0.0
    %3696 = vmatpush.msra.mxu0 0.0
    %3697 = vmatpush.msra.mxu0 0.0
    %3698 = vmatpush.msra.mxu0 0.0
    %3699 = vmatpush.msra.mxu0 0.0
    %3700 = vmatpush.msra.mxu0 0.0
    %3701 = vmatpush.msra.mxu0 0.0
    %3702 = vmatpush.msra.mxu0 0.0
    %3703 = vmatpush.msra.mxu0 0.0
    %3704 = vmatpush.msra.mxu0 0.0
    %v3705 = vand.u32 %v3592, 4294901760
    %3706 = vmatpush.msra.mxu0 %v3705
    %v3707 = vand.u32 %v3591, 4294901760
    %3708 = vmatpush.msra.mxu0 %v3707
    %v3709 = vand.u32 %v3590, 4294901760
    %3710 = vmatpush.msra.mxu0 %v3709
    %v3711 = vand.u32 %v3589, 4294901760
    %3712 = vmatpush.msra.mxu0 %v3711
    %v3713 = vand.u32 %v2788, 4294901760
    %v3714 = vsub.f32 %v2788, %v3713
    %v3715 = vand.u32 %v3714, 4294901760
    %3716 = vmatmul.f32.gmra.mxu0 %v3715
    %v3717 = vpop.f32.mrf.mxu0
    %v3718 = vadd.f32 %v3691, %v3717
    %3719 = vdwg.mxu0
    %3720 = vmatpush.msra.mxu0 0.0
    %3721 = vmatpush.msra.mxu0 0.0
    %3722 = vmatpush.msra.mxu0 0.0
    %3723 = vmatpush.msra.mxu0 0.0
    %3724 = vmatpush.msra.mxu0 0.0
    %3725 = vmatpush.msra.mxu0 0.0
    %3726 = vmatpush.msra.mxu0 0.0
    %3727 = vmatpush.msra.mxu0 0.0
    %3728 = vmatpush.msra.mxu0 0.0
    %3729 = vmatpush.msra.mxu0 0.0
    %3730 = vmatpush.msra.mxu0 0.0
    %3731 = vmatpush.msra.mxu0 0.0
    %v3732 = vand.u32 %v3592, 4294901760
    %v3733 = vsub.f32 %v3592, %v3732
    %v3734 = vand.u32 %v3733, 4294901760
    %3735 = vmatpush.msra.mxu0 %v3734
    %v3736 = vand.u32 %v3591, 4294901760
    %v3737 = vsub.f32 %v3591, %v3736
    %v3738 = vand.u32 %v3737, 4294901760
    %3739 = vmatpush.msra.mxu0 %v3738
    %v3740 = vand.u32 %v3590, 4294901760
    %v3741 = vsub.f32 %v3590, %v3740
    %v3742 = vand.u32 %v3741, 4294901760
    %3743 = vmatpush.msra.mxu0 %v3742
    %v3744 = vand.u32 %v3589, 4294901760
    %v3745 = vsub.f32 %v3589, %v3744
    %v3746 = vand.u32 %v3745, 4294901760
    %3747 = vmatpush.msra.mxu0 %v3746
    %v3748 = vand.u32 %v2788, 4294901760
    %3749 = vmatmul.f32.gmra.mxu0 %v3748
    %v3750 = vpop.f32.mrf.mxu0
    %v3751 = vadd.f32 %v3718, %v3750
    %3752 = vdwg.mxu0
    %3753 = vmatpush.msra.mxu0 0.0
    %3754 = vmatpush.msra.mxu0 0.0
    %3755 = vmatpush.msra.mxu0 0.0
    %3756 = vmatpush.msra.mxu0 0.0
    %3757 = vmatpush.msra.mxu0 0.0
    %3758 = vmatpush.msra.mxu0 0.0
    %3759 = vmatpush.msra.mxu0 0.0
    %3760 = vmatpush.msra.mxu0 0.0
    %3761 = vmatpush.msra.mxu0 0.0
    %3762 = vmatpush.msra.mxu0 0.0
    %3763 = vmatpush.msra.mxu0 0.0
    %3764 = vmatpush.msra.mxu0 0.0
    %v3765 = vand.u32 %v3592, 4294901760
    %3766 = vmatpush.msra.mxu0 %v3765
    %v3767 = vand.u32 %v3591, 4294901760
    %3768 = vmatpush.msra.mxu0 %v3767
    %v3769 = vand.u32 %v3590, 4294901760
    %3770 = vmatpush.msra.mxu0 %v3769
    %v3771 = vand.u32 %v3589, 4294901760
    %3772 = vmatpush.msra.mxu0 %v3771
    %v3773 = vand.u32 %v2788, 4294901760
    %3774 = vmatmul.f32.gmra.mxu0 %v3773
    %v3775 = vpop.f32.mrf.mxu0
    %v3776 = vadd.f32 %v3751, %v3775
    %3777 = vdwg.mxu0
    %v3778 = vld [vmem:[#allocation5 + $0x230] sm:$0xff]
    %v3779 = vld [vmem:[#allocation5 + $0x238] sm:$0xff]
    %v3780 = vld [vmem:[#allocation5 + $0x240] sm:$0xff]
    %v3781 = vld [vmem:[#allocation5 + $0x248] sm:$0xff]
    %v3782 = vld [vmem:[#allocation5 + $0x278] sm:$0x1]
    %3783 = vmatpush.msra.mxu0 0.0
    %3784 = vmatpush.msra.mxu0 0.0
    %3785 = vmatpush.msra.mxu0 0.0
    %3786 = vmatpush.msra.mxu0 0.0
    %3787 = vmatpush.msra.mxu0 0.0
    %3788 = vmatpush.msra.mxu0 0.0
    %3789 = vmatpush.msra.mxu0 0.0
    %3790 = vmatpush.msra.mxu0 0.0
    %3791 = vmatpush.msra.mxu0 0.0
    %3792 = vmatpush.msra.mxu0 0.0
    %3793 = vmatpush.msra.mxu0 0.0
    %3794 = vmatpush.msra.mxu0 0.0
    %v3795 = vand.u32 %v3781, 4294901760
    %3796 = vmatpush.msra.mxu0 %v3795
    %v3797 = vand.u32 %v3780, 4294901760
    %3798 = vmatpush.msra.mxu0 %v3797
    %v3799 = vand.u32 %v3779, 4294901760
    %3800 = vmatpush.msra.mxu0 %v3799
    %v3801 = vand.u32 %v3778, 4294901760
    %3802 = vmatpush.msra.mxu0 %v3801
    %v3803 = vand.u32 %v2981, 4294901760
    %v3804 = vsub.f32 %v2981, %v3803
    %v3805 = vand.u32 %v3804, 4294901760
    %v3806 = vsub.f32 %v3804, %v3805
    %v3807 = vand.u32 %v3806, 4294901760
    %3808 = vmatmul.f32.gmra.mxu0 %v3807
    %v3809 = vpop.f32.mrf.mxu0
    %v3810 = vadd.f32 %v3782, %v3809
    %3811 = vdwg.mxu0
    %3812 = vmatpush.msra.mxu0 0.0
    %3813 = vmatpush.msra.mxu0 0.0
    %3814 = vmatpush.msra.mxu0 0.0
    %3815 = vmatpush.msra.mxu0 0.0
    %3816 = vmatpush.msra.mxu0 0.0
    %3817 = vmatpush.msra.mxu0 0.0
    %3818 = vmatpush.msra.mxu0 0.0
    %3819 = vmatpush.msra.mxu0 0.0
    %3820 = vmatpush.msra.mxu0 0.0
    %3821 = vmatpush.msra.mxu0 0.0
    %3822 = vmatpush.msra.mxu0 0.0
    %3823 = vmatpush.msra.mxu0 0.0
    %v3824 = vand.u32 %v3781, 4294901760
    %v3825 = vsub.f32 %v3781, %v3824
    %v3826 = vand.u32 %v3825, 4294901760
    %v3827 = vsub.f32 %v3825, %v3826
    %v3828 = vand.u32 %v3827, 4294901760
    %3829 = vmatpush.msra.mxu0 %v3828
    %v3830 = vand.u32 %v3780, 4294901760
    %v3831 = vsub.f32 %v3780, %v3830
    %v3832 = vand.u32 %v3831, 4294901760
    %v3833 = vsub.f32 %v3831, %v3832
    %v3834 = vand.u32 %v3833, 4294901760
    %3835 = vmatpush.msra.mxu0 %v3834
    %v3836 = vand.u32 %v3779, 4294901760
    %v3837 = vsub.f32 %v3779, %v3836
    %v3838 = vand.u32 %v3837, 4294901760
    %v3839 = vsub.f32 %v3837, %v3838
    %v3840 = vand.u32 %v3839, 4294901760
    %3841 = vmatpush.msra.mxu0 %v3840
    %v3842 = vand.u32 %v3778, 4294901760
    %v3843 = vsub.f32 %v3778, %v3842
    %v3844 = vand.u32 %v3843, 4294901760
    %v3845 = vsub.f32 %v3843, %v3844
    %v3846 = vand.u32 %v3845, 4294901760
    %3847 = vmatpush.msra.mxu0 %v3846
    %v3848 = vand.u32 %v2981, 4294901760
    %3849 = vmatmul.f32.gmra.mxu0 %v3848
    %v3850 = vpop.f32.mrf.mxu0
    %v3851 = vadd.f32 %v3810, %v3850
    %3852 = vdwg.mxu0
    %3853 = vmatpush.msra.mxu0 0.0
    %3854 = vmatpush.msra.mxu0 0.0
    %3855 = vmatpush.msra.mxu0 0.0
    %3856 = vmatpush.msra.mxu0 0.0
    %3857 = vmatpush.msra.mxu0 0.0
    %3858 = vmatpush.msra.mxu0 0.0
    %3859 = vmatpush.msra.mxu0 0.0
    %3860 = vmatpush.msra.mxu0 0.0
    %3861 = vmatpush.msra.mxu0 0.0
    %3862 = vmatpush.msra.mxu0 0.0
    %3863 = vmatpush.msra.mxu0 0.0
    %3864 = vmatpush.msra.mxu0 0.0
    %v3865 = vand.u32 %v3781, 4294901760
    %v3866 = vsub.f32 %v3781, %v3865
    %3867 = vmatpush.msra.mxu0 %v3866
    %v3868 = vand.u32 %v3780, 4294901760
    %v3869 = vsub.f32 %v3780, %v3868
    %3870 = vmatpush.msra.mxu0 %v3869
    %v3871 = vand.u32 %v3779, 4294901760
    %v3872 = vsub.f32 %v3779, %v3871
    %3873 = vmatpush.msra.mxu0 %v3872
    %v3874 = vand.u32 %v3778, 4294901760
    %v3875 = vsub.f32 %v3778, %v3874
    %3876 = vmatpush.msra.mxu0 %v3875
    %v3877 = vand.u32 %v2981, 4294901760
    %v3878 = vsub.f32 %v2981, %v3877
    %3879 = vmatmul.f32.gmra.mxu0 %v3878
    %v3880 = vpop.f32.mrf.mxu0
    %v3881 = vadd.f32 %v3851, %v3880
    %3882 = vdwg.mxu0
    %3883 = vmatpush.msra.mxu0 0.0
    %3884 = vmatpush.msra.mxu0 0.0
    %3885 = vmatpush.msra.mxu0 0.0
    %3886 = vmatpush.msra.mxu0 0.0
    %3887 = vmatpush.msra.mxu0 0.0
    %3888 = vmatpush.msra.mxu0 0.0
    %3889 = vmatpush.msra.mxu0 0.0
    %3890 = vmatpush.msra.mxu0 0.0
    %3891 = vmatpush.msra.mxu0 0.0
    %3892 = vmatpush.msra.mxu0 0.0
    %3893 = vmatpush.msra.mxu0 0.0
    %3894 = vmatpush.msra.mxu0 0.0
    %v3895 = vand.u32 %v3781, 4294901760
    %3896 = vmatpush.msra.mxu0 %v3895
    %v3897 = vand.u32 %v3780, 4294901760
    %3898 = vmatpush.msra.mxu0 %v3897
    %v3899 = vand.u32 %v3779, 4294901760
    %3900 = vmatpush.msra.mxu0 %v3899
    %v3901 = vand.u32 %v3778, 4294901760
    %3902 = vmatpush.msra.mxu0 %v3901
    %v3903 = vand.u32 %v2981, 4294901760
    %v3904 = vsub.f32 %v2981, %v3903
    %v3905 = vand.u32 %v3904, 4294901760
    %3906 = vmatmul.f32.gmra.mxu0 %v3905
    %v3907 = vpop.f32.mrf.mxu0
    %v3908 = vadd.f32 %v3881, %v3907
    %3909 = vdwg.mxu0
    %3910 = vmatpush.msra.mxu0 0.0
    %3911 = vmatpush.msra.mxu0 0.0
    %3912 = vmatpush.msra.mxu0 0.0
    %3913 = vmatpush.msra.mxu0 0.0
    %3914 = vmatpush.msra.mxu0 0.0
    %3915 = vmatpush.msra.mxu0 0.0
    %3916 = vmatpush.msra.mxu0 0.0
    %3917 = vmatpush.msra.mxu0 0.0
    %3918 = vmatpush.msra.mxu0 0.0
    %3919 = vmatpush.msra.mxu0 0.0
    %3920 = vmatpush.msra.mxu0 0.0
    %3921 = vmatpush.msra.mxu0 0.0
    %v3922 = vand.u32 %v3781, 4294901760
    %v3923 = vsub.f32 %v3781, %v3922
    %v3924 = vand.u32 %v3923, 4294901760
    %3925 = vmatpush.msra.mxu0 %v3924
    %v3926 = vand.u32 %v3780, 4294901760
    %v3927 = vsub.f32 %v3780, %v3926
    %v3928 = vand.u32 %v3927, 4294901760
    %3929 = vmatpush.msra.mxu0 %v3928
    %v3930 = vand.u32 %v3779, 4294901760
    %v3931 = vsub.f32 %v3779, %v3930
    %v3932 = vand.u32 %v3931, 4294901760
    %3933 = vmatpush.msra.mxu0 %v3932
    %v3934 = vand.u32 %v3778, 4294901760
    %v3935 = vsub.f32 %v3778, %v3934
    %v3936 = vand.u32 %v3935, 4294901760
    %3937 = vmatpush.msra.mxu0 %v3936
    %v3938 = vand.u32 %v2981, 4294901760
    %3939 = vmatmul.f32.gmra.mxu0 %v3938
    %v3940 = vpop.f32.mrf.mxu0
    %v3941 = vadd.f32 %v3908, %v3940
    %3942 = vdwg.mxu0
    %3943 = vmatpush.msra.mxu0 0.0
    %3944 = vmatpush.msra.mxu0 0.0
    %3945 = vmatpush.msra.mxu0 0.0
    %3946 = vmatpush.msra.mxu0 0.0
    %3947 = vmatpush.msra.mxu0 0.0
    %3948 = vmatpush.msra.mxu0 0.0
    %3949 = vmatpush.msra.mxu0 0.0
    %3950 = vmatpush.msra.mxu0 0.0
    %3951 = vmatpush.msra.mxu0 0.0
    %3952 = vmatpush.msra.mxu0 0.0
    %3953 = vmatpush.msra.mxu0 0.0
    %3954 = vmatpush.msra.mxu0 0.0
    %v3955 = vand.u32 %v3781, 4294901760
    %3956 = vmatpush.msra.mxu0 %v3955
    %v3957 = vand.u32 %v3780, 4294901760
    %3958 = vmatpush.msra.mxu0 %v3957
    %v3959 = vand.u32 %v3779, 4294901760
    %3960 = vmatpush.msra.mxu0 %v3959
    %v3961 = vand.u32 %v3778, 4294901760
    %3962 = vmatpush.msra.mxu0 %v3961
    %v3963 = vand.u32 %v2981, 4294901760
    %3964 = vmatmul.f32.gmra.mxu0 %v3963
    %v3965 = vpop.f32.mrf.mxu0
    %v3966 = vadd.f32 %v3941, %v3965
    %3967 = vdwg.mxu0
    %v3968 = vmul.f32 %v3187, %v3966
    %v3969 = vadd.f32 %v3776, %v3968
    %v3970 = vtanh.pop %v3969
    %v3971 = vsub.f32 1.0, %v3587
    %v3972 = vmul.f32 %v3971, %v3970
    %v3973 = vmul.f32 %v3587, %v2781
    %v3974 = vadd.f32 %v3972, %v3973
    %3975 = vst.msk [vmem:[#allocation2 + $0x1] sm:$0x1] %vm2779, %v3974
    %v3976 = vld [vmem:[#allocation5 + $0x280] sm:$0xff]
    %v3977 = vld [vmem:[#allocation5 + $0x288] sm:$0xff]
    %v3978 = vld [vmem:[#allocation5 + $0x290] sm:$0xff]
    %v3979 = vld [vmem:[#allocation5 + $0x298] sm:$0xff]
    %v3980 = vld [vmem:[#allocation5 + $0x2a0] sm:$0x1]
    %v3982 = vsel %vm56, %v3974, 0
    %3984 = vmatpush.msra.mxu0 0.0
    %3985 = vmatpush.msra.mxu0 0.0
    %3986 = vmatpush.msra.mxu0 0.0
    %3987 = vmatpush.msra.mxu0 0.0
    %3988 = vmatpush.msra.mxu0 0.0
    %3989 = vmatpush.msra.mxu0 0.0
    %3990 = vmatpush.msra.mxu0 0.0
    %3991 = vmatpush.msra.mxu0 0.0
    %3992 = vmatpush.msra.mxu0 0.0
    %3993 = vmatpush.msra.mxu0 0.0
    %3994 = vmatpush.msra.mxu0 0.0
    %3995 = vmatpush.msra.mxu0 0.0
    %v3996 = vand.u32 %v3979, 4294901760
    %3997 = vmatpush.msra.mxu0 %v3996
    %v3998 = vand.u32 %v3978, 4294901760
    %3999 = vmatpush.msra.mxu0 %v3998
    %v4000 = vand.u32 %v3977, 4294901760
    %4001 = vmatpush.msra.mxu0 %v4000
    %v4002 = vand.u32 %v3976, 4294901760
    %4003 = vmatpush.msra.mxu0 %v4002
    %v4004 = vand.u32 %v3982, 4294901760
    %v4005 = vsub.f32 %v3982, %v4004
    %v4006 = vand.u32 %v4005, 4294901760
    %v4007 = vsub.f32 %v4005, %v4006
    %v4008 = vand.u32 %v4007, 4294901760
    %4009 = vmatmul.f32.gmra.mxu0 %v4008
    %v4010 = vpop.f32.mrf.mxu0
    %v4011 = vadd.f32 %v3980, %v4010
    %4012 = vdwg.mxu0
    %4013 = vmatpush.msra.mxu0 0.0
    %4014 = vmatpush.msra.mxu0 0.0
    %4015 = vmatpush.msra.mxu0 0.0
    %4016 = vmatpush.msra.mxu0 0.0
    %4017 = vmatpush.msra.mxu0 0.0
    %4018 = vmatpush.msra.mxu0 0.0
    %4019 = vmatpush.msra.mxu0 0.0
    %4020 = vmatpush.msra.mxu0 0.0
    %4021 = vmatpush.msra.mxu0 0.0
    %4022 = vmatpush.msra.mxu0 0.0
    %4023 = vmatpush.msra.mxu0 0.0
    %4024 = vmatpush.msra.mxu0 0.0
    %v4025 = vand.u32 %v3979, 4294901760
    %v4026 = vsub.f32 %v3979, %v4025
    %v4027 = vand.u32 %v4026, 4294901760
    %v4028 = vsub.f32 %v4026, %v4027
    %v4029 = vand.u32 %v4028, 4294901760
    %4030 = vmatpush.msra.mxu0 %v4029
    %v4031 = vand.u32 %v3978, 4294901760
    %v4032 = vsub.f32 %v3978, %v4031
    %v4033 = vand.u32 %v4032, 4294901760
    %v4034 = vsub.f32 %v4032, %v4033
    %v4035 = vand.u32 %v4034, 4294901760
    %4036 = vmatpush.msra.mxu0 %v4035
    %v4037 = vand.u32 %v3977, 4294901760
    %v4038 = vsub.f32 %v3977, %v4037
    %v4039 = vand.u32 %v4038, 4294901760
    %v4040 = vsub.f32 %v4038, %v4039
    %v4041 = vand.u32 %v4040, 4294901760
    %4042 = vmatpush.msra.mxu0 %v4041
    %v4043 = vand.u32 %v3976, 4294901760
    %v4044 = vsub.f32 %v3976, %v4043
    %v4045 = vand.u32 %v4044, 4294901760
    %v4046 = vsub.f32 %v4044, %v4045
    %v4047 = vand.u32 %v4046, 4294901760
    %4048 = vmatpush.msra.mxu0 %v4047
    %v4049 = vand.u32 %v3982, 4294901760
    %4050 = vmatmul.f32.gmra.mxu0 %v4049
    %v4051 = vpop.f32.mrf.mxu0
    %v4052 = vadd.f32 %v4011, %v4051
    %4053 = vdwg.mxu0
    %4054 = vmatpush.msra.mxu0 0.0
    %4055 = vmatpush.msra.mxu0 0.0
    %4056 = vmatpush.msra.mxu0 0.0
    %4057 = vmatpush.msra.mxu0 0.0
    %4058 = vmatpush.msra.mxu0 0.0
    %4059 = vmatpush.msra.mxu0 0.0
    %4060 = vmatpush.msra.mxu0 0.0
    %4061 = vmatpush.msra.mxu0 0.0
    %4062 = vmatpush.msra.mxu0 0.0
    %4063 = vmatpush.msra.mxu0 0.0
    %4064 = vmatpush.msra.mxu0 0.0
    %4065 = vmatpush.msra.mxu0 0.0
    %v4066 = vand.u32 %v3979, 4294901760
    %v4067 = vsub.f32 %v3979, %v4066
    %4068 = vmatpush.msra.mxu0 %v4067
    %v4069 = vand.u32 %v3978, 4294901760
    %v4070 = vsub.f32 %v3978, %v4069
    %4071 = vmatpush.msra.mxu0 %v4070
    %v4072 = vand.u32 %v3977, 4294901760
    %v4073 = vsub.f32 %v3977, %v4072
    %4074 = vmatpush.msra.mxu0 %v4073
    %v4075 = vand.u32 %v3976, 4294901760
    %v4076 = vsub.f32 %v3976, %v4075
    %4077 = vmatpush.msra.mxu0 %v4076
    %v4078 = vand.u32 %v3982, 4294901760
    %v4079 = vsub.f32 %v3982, %v4078
    %4080 = vmatmul.f32.gmra.mxu0 %v4079
    %v4081 = vpop.f32.mrf.mxu0
    %v4082 = vadd.f32 %v4052, %v4081
    %4083 = vdwg.mxu0
    %4084 = vmatpush.msra.mxu0 0.0
    %4085 = vmatpush.msra.mxu0 0.0
    %4086 = vmatpush.msra.mxu0 0.0
    %4087 = vmatpush.msra.mxu0 0.0
    %4088 = vmatpush.msra.mxu0 0.0
    %4089 = vmatpush.msra.mxu0 0.0
    %4090 = vmatpush.msra.mxu0 0.0
    %4091 = vmatpush.msra.mxu0 0.0
    %4092 = vmatpush.msra.mxu0 0.0
    %4093 = vmatpush.msra.mxu0 0.0
    %4094 = vmatpush.msra.mxu0 0.0
    %4095 = vmatpush.msra.mxu0 0.0
    %v4096 = vand.u32 %v3979, 4294901760
    %4097 = vmatpush.msra.mxu0 %v4096
    %v4098 = vand.u32 %v3978, 4294901760
    %4099 = vmatpush.msra.mxu0 %v4098
    %v4100 = vand.u32 %v3977, 4294901760
    %4101 = vmatpush.msra.mxu0 %v4100
    %v4102 = vand.u32 %v3976, 4294901760
    %4103 = vmatpush.msra.mxu0 %v4102
    %v4104 = vand.u32 %v3982, 4294901760
    %v4105 = vsub.f32 %v3982, %v4104
    %v4106 = vand.u32 %v4105, 4294901760
    %4107 = vmatmul.f32.gmra.mxu0 %v4106
    %v4108 = vpop.f32.mrf.mxu0
    %v4109 = vadd.f32 %v4082, %v4108
    %4110 = vdwg.mxu0
    %4111 = vmatpush.msra.mxu0 0.0
    %4112 = vmatpush.msra.mxu0 0.0
    %4113 = vmatpush.msra.mxu0 0.0
    %4114 = vmatpush.msra.mxu0 0.0
    %4115 = vmatpush.msra.mxu0 0.0
    %4116 = vmatpush.msra.mxu0 0.0
    %4117 = vmatpush.msra.mxu0 0.0
    %4118 = vmatpush.msra.mxu0 0.0
    %4119 = vmatpush.msra.mxu0 0.0
    %4120 = vmatpush.msra.mxu0 0.0
    %4121 = vmatpush.msra.mxu0 0.0
    %4122 = vmatpush.msra.mxu0 0.0
    %v4123 = vand.u32 %v3979, 4294901760
    %v4124 = vsub.f32 %v3979, %v4123
    %v4125 = vand.u32 %v4124, 4294901760
    %4126 = vmatpush.msra.mxu0 %v4125
    %v4127 = vand.u32 %v3978, 4294901760
    %v4128 = vsub.f32 %v3978, %v4127
    %v4129 = vand.u32 %v4128, 4294901760
    %4130 = vmatpush.msra.mxu0 %v4129
    %v4131 = vand.u32 %v3977, 4294901760
    %v4132 = vsub.f32 %v3977, %v4131
    %v4133 = vand.u32 %v4132, 4294901760
    %4134 = vmatpush.msra.mxu0 %v4133
    %v4135 = vand.u32 %v3976, 4294901760
    %v4136 = vsub.f32 %v3976, %v4135
    %v4137 = vand.u32 %v4136, 4294901760
    %4138 = vmatpush.msra.mxu0 %v4137
    %v4139 = vand.u32 %v3982, 4294901760
    %4140 = vmatmul.f32.gmra.mxu0 %v4139
    %v4141 = vpop.f32.mrf.mxu0
    %v4142 = vadd.f32 %v4109, %v4141
    %4143 = vdwg.mxu0
    %4144 = vmatpush.msra.mxu0 0.0
    %4145 = vmatpush.msra.mxu0 0.0
    %4146 = vmatpush.msra.mxu0 0.0
    %4147 = vmatpush.msra.mxu0 0.0
    %4148 = vmatpush.msra.mxu0 0.0
    %4149 = vmatpush.msra.mxu0 0.0
    %4150 = vmatpush.msra.mxu0 0.0
    %4151 = vmatpush.msra.mxu0 0.0
    %4152 = vmatpush.msra.mxu0 0.0
    %4153 = vmatpush.msra.mxu0 0.0
    %4154 = vmatpush.msra.mxu0 0.0
    %4155 = vmatpush.msra.mxu0 0.0
    %v4156 = vand.u32 %v3979, 4294901760
    %4157 = vmatpush.msra.mxu0 %v4156
    %v4158 = vand.u32 %v3978, 4294901760
    %4159 = vmatpush.msra.mxu0 %v4158
    %v4160 = vand.u32 %v3977, 4294901760
    %4161 = vmatpush.msra.mxu0 %v4160
    %v4162 = vand.u32 %v3976, 4294901760
    %4163 = vmatpush.msra.mxu0 %v4162
    %v4164 = vand.u32 %v3982, 4294901760
    %4165 = vmatmul.f32.gmra.mxu0 %v4164
    %v4166 = vpop.f32.mrf.mxu0
    %v4167 = vadd.f32 %v4142, %v4166
    %4168 = vdwg.mxu0
    %v4169 = vperm.slane %v4167, 0
    %4170 = vst [vmem:[#allocation8] sm:$0xff] %v4169
    %v4171 = vld [vmem:[#allocation2] sm:$0xff]
    %4172 = vst [vmem:[#allocation9] sm:$0xff] %v4171
    // Predicated region
    $region26: #{tpu_custom_call.1} parent=1 // pred_check
      _
    $region27: #{tpu_custom_call.1} parent=1 // pred_check_branch
      %4174 = sbr.rel (0) target = $region29
    $region28: #{tpu_custom_call.1} parent=1 // pred_region
      %4176 = vsyncadd [#allocation7], 0
      %s4178 = sshll.u32 [#allocation8], 4
      %s4179 = int_to_ptr.vmem [resolvable:$true] %s4178
      %s4180 = sshll.u32 %s5, 4
      %s4181 = int_to_ptr.hbm [resolvable:$true] %s4180
      %4183 = dma.vmem_to_hbm [thread:$0]  %s4179, 128, %s4181, [#allocation7]
    $region29: #{tpu_custom_call.1} parent=1 // pred_fallthru
      _
    // Predicated region
    $region30: #{tpu_custom_call.1} parent=1 // pred_check
      _
    $region31: #{tpu_custom_call.1} parent=1 // pred_check_branch
      %4185 = sbr.rel (0) target = $region33
    $region32: #{tpu_custom_call.1} parent=1 // pred_region
      %4187 = vsyncadd [#allocation10], 0
      %s4189 = sshll.u32 [#allocation9], 4
      %s4190 = int_to_ptr.vmem [resolvable:$true] %s4189
      %s4191 = sshll.u32 %s6, 4
      %s4192 = int_to_ptr.hbm [resolvable:$true] %s4191
      %4194 = dma.vmem_to_hbm [thread:$0]  %s4190, 128, %s4192, [#allocation10]
    $region33: #{tpu_custom_call.1} parent=1 // pred_fallthru
      _
    // Predicated region
    $region34: #{tpu_custom_call.1} parent=1 // pred_check
      _
    $region35: #{tpu_custom_call.1} parent=1 // pred_check_branch
      %4196 = sbr.rel (0) target = $region37
    $region36: #{tpu_custom_call.1} parent=1 // pred_region
      %4198 = dma.done [#allocation7], 128
    $region37: #{tpu_custom_call.1} parent=1 // pred_fallthru
      _
    // Predicated region
    $region38: #{tpu_custom_call.1} parent=1 // pred_check
      _
    $region39: #{tpu_custom_call.1} parent=1 // pred_check_branch
      %4200 = sbr.rel (0) target = $region41
    $region40: #{tpu_custom_call.1} parent=1 // pred_region
      %4202 = dma.done [#allocation10], 128
    $region41: #{tpu_custom_call.1} parent=1 // pred_fallthru
      _
    %4203 = vsyncpa [#allocation6], 1
    %4204 = vsyncpa [#allocation7], 1
    %4205 = vsyncpa [#allocation10], 1

</llo_original>
